<compile_context>
chip_gen: v5e
topology: v5e:2x2
jax: 0.10.0
libtpu: 0.0.40
codegen_flags: <defaults>
</compile_context>

<pallas_src>
import math

import jax
import jax.numpy as jnp
from jax.experimental import pallas as pl
from jax.experimental.pallas import tpu as pltpu

PTS_W = 8  # packed pts-output width: col 0 = class logit, cols 1:3 = (x, y) coords


def _cdiv(a, b):
    return -(-a // b)


def _round_up(x, m):
    return ((x + m - 1) // m) * m


# ----------------------------------------------------------------------------
# Kernel A: input_proj = Conv2d(Cin, D, 1) (channels-last matmul) + GroupNorm(32, D)
# with group size 1.  One sample per grid step ("parallel" axis).
# ----------------------------------------------------------------------------
def _input_proj_gn_kernel(feat_ref, wp_ref, bp_ref, g_ref, be_ref, src_ref):
    hw = feat_ref.shape[0]
    # bf16 operands, f32 accumulation.
    y = jnp.dot(feat_ref[...], wp_ref[...],
                preferred_element_type=jnp.float32) + bp_ref[...]        # (HW, D) f32
    inv_hw = 1.0 / hw
    s1 = jnp.sum(y, axis=0, keepdims=True)                               # single pass
    s2 = jnp.sum(y * y, axis=0, keepdims=True)
    mean = s1 * inv_hw
    var = jnp.maximum(s2 * inv_hw - mean * mean, 0.0)                    # clamp >= 0
    yn = (y - mean) * jax.lax.rsqrt(var + 1e-5)                          # eps = 1e-5
    src_ref[...] = (yn * g_ref[...] + be_ref[...]).astype(src_ref.dtype)


# ----------------------------------------------------------------------------
# Kernel B: fused prediction heads over one row tile of the flattened decoder
# outputs (L*B*Q*P rows for hs, L*B*Q*T rows for hs_text):
#   ctrl_point_class (Linear D->1) and ctrl_point_coord (MLP D->D->D->2) fused into
#   one K=2D matmul on concat([x, relu-MLP(x)]); + inverse_sigmoid_offset(reference)
#   and biases (pre-folded into offb); sigmoid_offset on coord cols; text_class.
# ----------------------------------------------------------------------------
def _heads_kernel(x_ref, xt_ref, offb_ref,
                  w1_ref, b1_ref, w2_ref, b2_ref,
                  wab_ref, wt_ref, bt_ref,
                  pts_ref, txt_ref):
    x = x_ref[...]                                                       # (TR, D) bf16
    # ctrl_point_coord MLP hidden layers (ReLU in f32, bf16 back into the MXU)
    h = jnp.maximum(jnp.dot(x, w1_ref[...],
                            preferred_element_type=jnp.float32) + b1_ref[...], 0.0)
    h = jnp.maximum(jnp.dot(h.astype(jnp.bfloat16), w2_ref[...],
                            preferred_element_type=jnp.float32) + b2_ref[...], 0.0)
    # Fused final projection: concat([x, h]) @ [[wc | 0], [0 | w3]]  -> (TR, PTS_W)
    #   col 0   = ctrl_point_class(x)
    #   cols1:3 = ctrl_point_coord last layer(h)
    # offb pre-packs bc / b3 and inverse_sigmoid_offset(reference).
    xz = jnp.concatenate([x.astype(jnp.float32), h], axis=-1).astype(jnp.bfloat16)
    z = jnp.dot(xz, wab_ref[...],
                preferred_element_type=jnp.float32) + offb_ref[...]
    col = jax.lax.broadcasted_iota(jnp.int32, z.shape, 1)
    is_coord = jnp.logical_and(col >= 1, col < 3)
    # sigmoid_offset(tmp, offset=True) = sigmoid(tmp) * 2 - 0.5   (coord cols only)
    pts_ref[...] = jnp.where(is_coord, jax.nn.sigmoid(z) * 2.0 - 0.5, z
                             ).astype(pts_ref.dtype)

    # text_class (shared Linear across decoder layers)
    xt = xt_ref[...]                                                     # (TRt, D) bf16
    txt_ref[...] = (jnp.dot(xt, wt_ref[...], preferred_element_type=jnp.float32)
                    + bt_ref[...]).astype(txt_ref.dtype)


# ----------------------------------------------------------------------------
# Forward wrapper
# ----------------------------------------------------------------------------
def testr_forward(feat_flat, transformer_outputs, params):
    (hs, hs_text, init_reference, inter_references,
     enc_outputs_class, enc_outputs_coord_unact) = transformer_outputs

    N, HW, Cin = feat_flat.shape
    L, B, Q, P, D = hs.shape
    T = hs_text.shape[3]
    V1 = params["wt"].shape[1]
    assert D == 32, "GroupNorm(32, d_model) with group size 1 requires d_model == 32 here"
    f32, bf16 = jnp.float32, jnp.bfloat16

    # ---------------- input_proj + GroupNorm, per-sample parallel grid ----------------
    # TODO(synk): for very large H*W a two-pass (stats then normalize) tiling over HW
    # would be needed; one sample per grid step keeps VMEM bounded at realistic sizes.
    srcs = pl.pallas_call(
        _input_proj_gn_kernel,
        out_shape=jax.ShapeDtypeStruct((N, HW, D), f32),
        grid=(N,),
        in_specs=[
            pl.BlockSpec((None, HW, Cin), lambda n: (n, 0, 0)),
            pl.BlockSpec((Cin, D), lambda n: (0, 0)),
            pl.BlockSpec((1, D), lambda n: (0, 0)),
            pl.BlockSpec((1, D), lambda n: (0, 0)),
            pl.BlockSpec((1, D), lambda n: (0, 0)),
        ],
        out_specs=pl.BlockSpec((None, HW, D), lambda n: (n, 0, 0)),
        compiler_params=pltpu.CompilerParams(
            dimension_semantics=("parallel",),
            vmem_limit_bytes=48 * 1024 * 1024),
    )(feat_flat.astype(bf16), params["wp"].astype(bf16),
      params["bp"], params["gamma"], params["beta"])

    # ---------------- prediction heads: row-tiled, parallel grid ----------------
    R = L * B * Q * P
    Rt = L * B * Q * T
    G = max(1, _cdiv(R, 256))                 # ~256-row tiles (review: 128-256)
    TR = _round_up(_cdiv(R, G), 16)
    TRt = _round_up(_cdiv(Rt, G), 16)
    Rp, Rtp = G * TR, G * TRt

    hs_flat = hs.reshape(R, D).astype(bf16)
    hst_flat = hs_text.reshape(Rt, D).astype(bf16)
    if Rp != R:
        hs_flat = jnp.pad(hs_flat, ((0, Rp - R), (0, 0)))
    if Rtp != Rt:
        hst_flat = jnp.pad(hst_flat, ((0, Rtp - Rt), (0, 0)))

    # reference used at level l: init_reference for l == 0, inter_references[l-1] after.
    ref_per_level = jnp.concatenate(
        [init_reference[None], inter_references[:L - 1]], axis=0)       # (L, B, Q, 4)
    # inverse_sigmoid_offset(reference, offset=True)[..., :2]
    # TODO(synk): offset flag is `not cfg.MODEL.TRANSFORMER.USE_POLYGON`; default -> True.
    r = (ref_per_level[..., :2] + 0.5) * 0.5
    r = jnp.clip(r, 0.0, 1.0)
    off2 = jnp.log(jnp.maximum(r, 1e-5) / jnp.maximum(1.0 - r, 1e-5))   # (L, B, Q, 2)
    off2 = jnp.broadcast_to(off2[:, :, :, None, :], (L, B, Q, P, 2)).reshape(R, 2)
    # single 8-lane per-row additive slab: col 0 = bc, cols 1:3 = b3 + offset
    offb = jnp.zeros((Rp, PTS_W), f32)
    offb = offb.at[:, 0].set(params["bc"][0, 0])
    offb = offb.at[:R, 1:3].set(off2 + params["b3"])

    # fused final-projection weight: rows 0:D col 0 = wc, rows D:2D cols 1:3 = w3
    wab = jnp.zeros((2 * D, PTS_W), f32)
    wab = wab.at[:D, 0:1].set(params["wc"])
    wab = wab.at[D:, 1:3].set(params["w3"])
    wab = wab.astype(bf16)

    pts, txt = pl.pallas_call(
        _heads_kernel,
        out_shape=(
            jax.ShapeDtypeStruct((Rp, PTS_W), f32),
            jax.ShapeDtypeStruct((Rtp, V1), f32),
        ),
        grid=(G,),
        in_specs=[
            pl.BlockSpec((TR, D), lambda i: (i, 0)),
            pl.BlockSpec((TRt, D), lambda i: (i, 0)),
            pl.BlockSpec((TR, PTS_W), lambda i: (i, 0)),
            pl.BlockSpec((D, D), lambda i: (0, 0)),
            pl.BlockSpec((1, D), lambda i: (0, 0)),
            pl.BlockSpec((D, D), lambda i: (0, 0)),
            pl.BlockSpec((1, D), lambda i: (0, 0)),
            pl.BlockSpec((2 * D, PTS_W), lambda i: (0, 0)),
            pl.BlockSpec((D, V1), lambda i: (0, 0)),
            pl.BlockSpec((1, V1), lambda i: (0, 0)),
        ],
        out_specs=(
            pl.BlockSpec((TR, PTS_W), lambda i: (i, 0)),
            pl.BlockSpec((TRt, V1), lambda i: (i, 0)),
        ),
        compiler_params=pltpu.CompilerParams(
            dimension_semantics=("parallel",),
            vmem_limit_bytes=48 * 1024 * 1024),
    )(hs_flat, hst_flat, offb,
      params["w1"].astype(bf16), params["b1"],
      params["w2"].astype(bf16), params["b2"],
      wab, params["wt"].astype(bf16), params["bt"])

    outputs_class = pts[:R, 0:1].reshape(L, B, Q, P, 1)
    outputs_coord = pts[:R, 1:3].reshape(L, B, Q, P, 2)
    outputs_text = txt[:Rt, :V1].reshape(L, B, Q, T, V1)

    out = {
        "pred_logits": outputs_class[-1],
        "pred_ctrl_points": outputs_coord[-1],
        "pred_texts": outputs_text[-1],
        "aux_outputs": [
            {"pred_logits": a, "pred_ctrl_points": b, "pred_texts": c}
            for a, b, c in zip(outputs_class[:-1], outputs_coord[:-1], outputs_text[:-1])
        ],
        "enc_outputs": {
            "pred_logits": enc_outputs_class,
            # tiny elementwise op, trivially fused by XLA; not worth a kernel
            "pred_boxes": jax.nn.sigmoid(enc_outputs_coord_unact),
        },
        "_srcs": srcs,  # projected features (would feed the DeformableTransformer)
    }
    return out


if __name__ == "__main__":
    # small configuration consistent with the module
    bs = 2
    d_model = 32            # HIDDEN_DIM (must be 32 so GroupNorm(32, d) has group size 1)
    num_dec_layers = 4      # DEC_LAYERS
    num_proposals = 8       # NUM_QUERIES
    num_ctrl_points = 8     # NUM_CTRL_POINTS
    max_text_len = 8        # NUM_CHARS
    voc_size = 15           # VOC_SIZE -> text_class outputs voc_size + 1 = 16
    Cin = 64                # scaled-down backbone channels (orig 2048)
    H = W = 8
    HW = H * W

    key = jax.random.PRNGKey(0)
    keys = jax.random.split(key, 16)

    # ---- parameters (deterministic init, matching __init__ semantics) ----
    bias_value = -math.log((1 - 0.01) / 0.01)             # prior_prob = 0.01
    xav = math.sqrt(6.0 / (Cin + d_model))                # xavier_uniform gain=1 (1x1 conv)
    params = {
        # input_proj: conv1x1 weight (Cin, D), bias 0; GroupNorm affine = (1, 0)
        "wp": jax.random.uniform(keys[0], (Cin, d_model), jnp.float32, -xav, xav),
        "bp": jnp.zeros((1, d_model), jnp.float32),
        "gamma": jnp.ones((1, d_model), jnp.float32),
        "beta": jnp.zeros((1, d_model), jnp.float32),
        # ctrl_point_class (shared across decoder layers), bias = bias_value
        "wc": 0.02 * jax.random.normal(keys[1], (d_model, 1), jnp.float32),
        "bc": jnp.full((1, 1), bias_value, jnp.float32),
        # ctrl_point_coord MLP(d, d, 2, 3); last layer weight/bias zero-initialized
        "w1": 0.02 * jax.random.normal(keys[2], (d_model, d_model), jnp.float32),
        "b1": 0.02 * jax.random.normal(keys[3], (1, d_model), jnp.float32),
        "w2": 0.02 * jax.random.normal(keys[4], (d_model, d_model), jnp.float32),
        "b2": 0.02 * jax.random.normal(keys[5], (1, d_model), jnp.float32),
        "w3": jnp.zeros((d_model, 2), jnp.float32),
        "b3": jnp.zeros((1, 2), jnp.float32),
        # text_class: Linear(d_model, voc_size + 1)
        "wt": 0.02 * jax.random.normal(keys[6], (d_model, voc_size + 1), jnp.float32),
        "bt": 0.02 * jax.random.normal(keys[7], (1, voc_size + 1), jnp.float32),
    }

    # ---- synthetic backbone feature (torch layout would be (bs, Cin, H, W)) ----
    feat_flat = jax.random.normal(keys[8], (bs, HW, Cin), jnp.float32)

    # ---- synthetic DeformableTransformer outputs (deterministic) ----
    L, B, Q, P, T, D = num_dec_layers, bs, num_proposals, num_ctrl_points, max_text_len, d_model
    hs = jax.random.normal(keys[9], (L, B, Q, P, D), jnp.float32)
    hs_text = jax.random.normal(keys[10], (L, B, Q, T, D), jnp.float32)
    init_reference = jax.nn.sigmoid(jax.random.normal(keys[11], (B, Q, 4), jnp.float32))
    inter_references = jax.nn.sigmoid(jax.random.normal(keys[12], (L, B, Q, 4), jnp.float32))
    enc_outputs_class = jax.random.normal(keys[13], (B, HW, 1), jnp.float32)
    enc_outputs_coord_unact = jax.random.normal(keys[14], (B, HW, 4), jnp.float32)

    transformer_outputs = (hs, hs_text, init_reference, inter_references,
                           enc_outputs_class, enc_outputs_coord_unact)

    fwd = jax.jit(testr_forward)
    out = fwd(feat_flat, transformer_outputs, params)
    out = jax.tree_util.tree_map(jax.block_until_ready, out)

    # light sanity checks on output shapes / values
    assert out["pred_logits"].shape == (B, Q, P, 1)
    assert out["pred_ctrl_points"].shape == (B, Q, P, 2)
    assert out["pred_texts"].shape == (B, Q, T, voc_size + 1)
    assert out["enc_outputs"]["pred_boxes"].shape == (B, HW, 4)
    assert out["_srcs"].shape == (B, HW, d_model)
    assert len(out["aux_outputs"]) == L - 1
    assert bool(jnp.all(jnp.isfinite(out["pred_logits"])))
    assert bool(jnp.all(jnp.isfinite(out["pred_ctrl_points"])))
    assert bool(jnp.all(jnp.isfinite(out["_srcs"])))
    assert bool(jnp.all((out["pred_ctrl_points"] >= -0.5) & (out["pred_ctrl_points"] <= 1.5)))

    print("KERNEL_OK")
</pallas_src>

<mosaic_0001>
module attributes {stable_mosaic.version = 11 : i64} {
  func.func @_heads_kernel(%arg0: i32, %arg1: memref<256x32xbf16, #tpu.memory_space<vmem>>, %arg2: memref<256x32xbf16, #tpu.memory_space<vmem>>, %arg3: memref<256x8xf32, #tpu.memory_space<vmem>>, %arg4: memref<32x32xbf16, #tpu.memory_space<vmem>>, %arg5: memref<1x32xf32, #tpu.memory_space<vmem>>, %arg6: memref<32x32xbf16, #tpu.memory_space<vmem>>, %arg7: memref<1x32xf32, #tpu.memory_space<vmem>>, %arg8: memref<64x8xbf16, #tpu.memory_space<vmem>>, %arg9: memref<32x16xbf16, #tpu.memory_space<vmem>>, %arg10: memref<1x16xf32, #tpu.memory_space<vmem>>, %arg11: memref<256x8xf32, #tpu.memory_space<vmem>>, %arg12: memref<256x16xf32, #tpu.memory_space<vmem>>) attributes {dimension_semantics = [#tpu.dimension_semantics<parallel>], iteration_bounds = array<i64: 2>, scalar_prefetch = 0 : i64, scratch_operands = 0 : i64, tpu.core_type = #tpu.core_type<tc>, window_params = [{transform_indices = @transform_0, window_bounds = array<i64: 256, 32>}, {transform_indices = @transform_1, window_bounds = array<i64: 256, 32>}, {transform_indices = @transform_2, window_bounds = array<i64: 256, 8>}, {pipeline_mode = #tpu.pipeline_mode<synchronous>, transform_indices = @transform_3, window_bounds = array<i64: 32, 32>}, {pipeline_mode = #tpu.pipeline_mode<synchronous>, transform_indices = @transform_4, window_bounds = array<i64: 1, 32>}, {pipeline_mode = #tpu.pipeline_mode<synchronous>, transform_indices = @transform_5, window_bounds = array<i64: 32, 32>}, {pipeline_mode = #tpu.pipeline_mode<synchronous>, transform_indices = @transform_6, window_bounds = array<i64: 1, 32>}, {pipeline_mode = #tpu.pipeline_mode<synchronous>, transform_indices = @transform_7, window_bounds = array<i64: 64, 8>}, {pipeline_mode = #tpu.pipeline_mode<synchronous>, transform_indices = @transform_8, window_bounds = array<i64: 32, 16>}, {pipeline_mode = #tpu.pipeline_mode<synchronous>, transform_indices = @transform_9, window_bounds = array<i64: 1, 16>}, {transform_indices = @transform_10, window_bounds = array<i64: 256, 8>}, {transform_indices = @transform_11, window_bounds = array<i64: 256, 16>}]} {
    %c0 = arith.constant 0 : index
    %c0_0 = arith.constant 0 : index
    %0 = vector.load %arg1[%c0, %c0_0] : memref<256x32xbf16, #tpu.memory_space<vmem>>, vector<256x32xbf16>
    %c0_1 = arith.constant 0 : index
    %c0_2 = arith.constant 0 : index
    %1 = vector.load %arg4[%c0_1, %c0_2] : memref<32x32xbf16, #tpu.memory_space<vmem>>, vector<32x32xbf16>
    %cst = arith.constant dense<0.000000e+00> : vector<256x32xf32>
    %2 = tpu.matmul %0, %1, %cst {dimension_numbers = #tpu.dot_dimension_numbers<[1], [0], [0], [1], [0, 0, 1, 1], [], []>} : vector<256x32xbf16>, vector<32x32xbf16>, vector<256x32xf32> -> vector<256x32xf32>
    %c0_3 = arith.constant 0 : index
    %c0_4 = arith.constant 0 : index
    %3 = vector.load %arg5[%c0_3, %c0_4] : memref<1x32xf32, #tpu.memory_space<vmem>>, vector<1x32xf32>
    %4 = vector.broadcast %3 : vector<1x32xf32> to vector<256x32xf32>
    %5 = arith.addf %2, %4 : vector<256x32xf32>
    %cst_5 = arith.constant 0.000000e+00 : f32
    %6 = vector.broadcast %cst_5 : f32 to vector<256x32xf32>
    %7 = arith.maximumf %5, %6 : vector<256x32xf32>
    %8 = arith.truncf %7 : vector<256x32xf32> to vector<256x32xbf16>
    %c0_6 = arith.constant 0 : index
    %c0_7 = arith.constant 0 : index
    %9 = vector.load %arg6[%c0_6, %c0_7] : memref<32x32xbf16, #tpu.memory_space<vmem>>, vector<32x32xbf16>
    %cst_8 = arith.constant dense<0.000000e+00> : vector<256x32xf32>
    %10 = tpu.matmul %8, %9, %cst_8 {dimension_numbers = #tpu.dot_dimension_numbers<[1], [0], [0], [1], [0, 0, 1, 1], [], []>} : vector<256x32xbf16>, vector<32x32xbf16>, vector<256x32xf32> -> vector<256x32xf32>
    %c0_9 = arith.constant 0 : index
    %c0_10 = arith.constant 0 : index
    %11 = vector.load %arg7[%c0_9, %c0_10] : memref<1x32xf32, #tpu.memory_space<vmem>>, vector<1x32xf32>
    %12 = vector.broadcast %11 : vector<1x32xf32> to vector<256x32xf32>
    %13 = arith.addf %10, %12 : vector<256x32xf32>
    %cst_11 = arith.constant 0.000000e+00 : f32
    %14 = vector.broadcast %cst_11 : f32 to vector<256x32xf32>
    %15 = arith.maximumf %13, %14 : vector<256x32xf32>
    %16 = arith.extf %0 : vector<256x32xbf16> to vector<256x32xf32>
    %17 = tpu.concatenate %16, %15 in 1 : vector<256x32xf32>, vector<256x32xf32> -> vector<256x64xf32>
    %18 = arith.truncf %17 : vector<256x64xf32> to vector<256x64xbf16>
    %c0_12 = arith.constant 0 : index
    %c0_13 = arith.constant 0 : index
    %19 = vector.load %arg8[%c0_12, %c0_13] : memref<64x8xbf16, #tpu.memory_space<vmem>>, vector<64x8xbf16>
    %cst_14 = arith.constant dense<0.000000e+00> : vector<256x8xf32>
    %20 = tpu.matmul %18, %19, %cst_14 {dimension_numbers = #tpu.dot_dimension_numbers<[1], [0], [0], [1], [0, 0, 1, 1], [], []>} : vector<256x64xbf16>, vector<64x8xbf16>, vector<256x8xf32> -> vector<256x8xf32>
    %c0_15 = arith.constant 0 : index
    %c0_16 = arith.constant 0 : index
    %21 = vector.load %arg3[%c0_15, %c0_16] : memref<256x8xf32, #tpu.memory_space<vmem>>, vector<256x8xf32>
    %22 = arith.addf %20, %21 : vector<256x8xf32>
    %23 = tpu.iota {dimensions = array<i32: 1>} : vector<256x8xi32>
    %c1_i32 = arith.constant 1 : i32
    %24 = vector.broadcast %c1_i32 : i32 to vector<256x8xi32>
    %25 = arith.cmpi sge, %23, %24 : vector<256x8xi32>
    %c3_i32 = arith.constant 3 : i32
    %26 = vector.broadcast %c3_i32 : i32 to vector<256x8xi32>
    %27 = arith.cmpi slt, %23, %26 : vector<256x8xi32>
    %28 = arith.andi %25, %27 : vector<256x8xi1>
    %29 = arith.negf %22 : vector<256x8xf32>
    %30 = math.exp %29 : vector<256x8xf32>
    %cst_17 = arith.constant 1.000000e+00 : f32
    %31 = vector.broadcast %cst_17 : f32 to vector<256x8xf32>
    %32 = arith.addf %31, %30 : vector<256x8xf32>
    %33 = arith.divf %31, %32 : vector<256x8xf32>
    %cst_18 = arith.constant 2.000000e+00 : f32
    %34 = vector.broadcast %cst_18 : f32 to vector<256x8xf32>
    %35 = arith.mulf %33, %34 : vector<256x8xf32>
    %cst_19 = arith.constant 5.000000e-01 : f32
    %36 = vector.broadcast %cst_19 : f32 to vector<256x8xf32>
    %37 = arith.subf %35, %36 : vector<256x8xf32>
    %38 = arith.select %28, %37, %22 : vector<256x8xi1>, vector<256x8xf32>
    %c0_20 = arith.constant 0 : index
    %c0_21 = arith.constant 0 : index
    %39 = vector.load %arg11[%c0_20, %c0_21] : memref<256x8xf32, #tpu.memory_space<vmem>>, vector<256x8xf32>
    tpu.vector_store %arg11[%c0_20, %c0_21], %38 {strides = array<i32>} : memref<256x8xf32, #tpu.memory_space<vmem>>, vector<256x8xf32>,
    %c0_22 = arith.constant 0 : index
    %c0_23 = arith.constant 0 : index
    %40 = vector.load %arg2[%c0_22, %c0_23] : memref<256x32xbf16, #tpu.memory_space<vmem>>, vector<256x32xbf16>
    %c0_24 = arith.constant 0 : index
    %c0_25 = arith.constant 0 : index
    %41 = vector.load %arg9[%c0_24, %c0_25] : memref<32x16xbf16, #tpu.memory_space<vmem>>, vector<32x16xbf16>
    %cst_26 = arith.constant dense<0.000000e+00> : vector<256x16xf32>
    %42 = tpu.matmul %40, %41, %cst_26 {dimension_numbers = #tpu.dot_dimension_numbers<[1], [0], [0], [1], [0, 0, 1, 1], [], []>} : vector<256x32xbf16>, vector<32x16xbf16>, vector<256x16xf32> -> vector<256x16xf32>
    %c0_27 = arith.constant 0 : index
    %c0_28 = arith.constant 0 : index
    %43 = vector.load %arg10[%c0_27, %c0_28] : memref<1x16xf32, #tpu.memory_space<vmem>>, vector<1x16xf32>
    %44 = vector.broadcast %43 : vector<1x16xf32> to vector<256x16xf32>
    %45 = arith.addf %42, %44 : vector<256x16xf32>
    %c0_29 = arith.constant 0 : index
    %c0_30 = arith.constant 0 : index
    %46 = vector.load %arg12[%c0_29, %c0_30] : memref<256x16xf32, #tpu.memory_space<vmem>>, vector<256x16xf32>
    tpu.vector_store %arg12[%c0_29, %c0_30], %45 {strides = array<i32>} : memref<256x16xf32, #tpu.memory_space<vmem>>, vector<256x16xf32>,
    return
  }
  func.func @transform_0(%arg0: i32) -> (i32, i32) {
    %c0_i32 = arith.constant 0 : i32
    %c0_i32_0 = arith.constant 0 : i32
    return %arg0, %c0_i32 : i32, i32
  }
  func.func @transform_1(%arg0: i32) -> (i32, i32) {
    %c0_i32 = arith.constant 0 : i32
    %c0_i32_0 = arith.constant 0 : i32
    return %arg0, %c0_i32 : i32, i32
  }
  func.func @transform_2(%arg0: i32) -> (i32, i32) {
    %c0_i32 = arith.constant 0 : i32
    %c0_i32_0 = arith.constant 0 : i32
    return %arg0, %c0_i32 : i32, i32
  }
  func.func @transform_3(%arg0: i32) -> (i32, i32) {
    %c0_i32 = arith.constant 0 : i32
    %c0_i32_0 = arith.constant 0 : i32
    %c0_i32_1 = arith.constant 0 : i32
    return %c0_i32, %c0_i32_0 : i32, i32
  }
  func.func @transform_4(%arg0: i32) -> (i32, i32) {
    %c0_i32 = arith.constant 0 : i32
    %c0_i32_0 = arith.constant 0 : i32
    %c0_i32_1 = arith.constant 0 : i32
    return %c0_i32, %c0_i32_0 : i32, i32
  }
  func.func @transform_5(%arg0: i32) -> (i32, i32) {
    %c0_i32 = arith.constant 0 : i32
    %c0_i32_0 = arith.constant 0 : i32
    %c0_i32_1 = arith.constant 0 : i32
    return %c0_i32, %c0_i32_0 : i32, i32
  }
  func.func @transform_6(%arg0: i32) -> (i32, i32) {
    %c0_i32 = arith.constant 0 : i32
    %c0_i32_0 = arith.constant 0 : i32
    %c0_i32_1 = arith.constant 0 : i32
    return %c0_i32, %c0_i32_0 : i32, i32
  }
  func.func @transform_7(%arg0: i32) -> (i32, i32) {
    %c0_i32 = arith.constant 0 : i32
    %c0_i32_0 = arith.constant 0 : i32
    %c0_i32_1 = arith.constant 0 : i32
    return %c0_i32, %c0_i32_0 : i32, i32
  }
  func.func @transform_8(%arg0: i32) -> (i32, i32) {
    %c0_i32 = arith.constant 0 : i32
    %c0_i32_0 = arith.constant 0 : i32
    %c0_i32_1 = arith.constant 0 : i32
    return %c0_i32, %c0_i32_0 : i32, i32
  }
  func.func @transform_9(%arg0: i32) -> (i32, i32) {
    %c0_i32 = arith.constant 0 : i32
    %c0_i32_0 = arith.constant 0 : i32
    %c0_i32_1 = arith.constant 0 : i32
    return %c0_i32, %c0_i32_0 : i32, i32
  }
  func.func @transform_10(%arg0: i32) -> (i32, i32) {
    %c0_i32 = arith.constant 0 : i32
    %c0_i32_0 = arith.constant 0 : i32
    return %arg0, %c0_i32 : i32, i32
  }
  func.func @transform_11(%arg0: i32) -> (i32, i32) {
    %c0_i32 = arith.constant 0 : i32
    %c0_i32_0 = arith.constant 0 : i32
    return %arg0, %c0_i32 : i32, i32
  }
}

module attributes {stable_mosaic.version = 11 : i64} {
  func.func @_input_proj_gn_kernel(%arg0: i32, %arg1: memref<1x64x64xbf16, #tpu.memory_space<vmem>>, %arg2: memref<64x32xbf16, #tpu.memory_space<vmem>>, %arg3: memref<1x32xf32, #tpu.memory_space<vmem>>, %arg4: memref<1x32xf32, #tpu.memory_space<vmem>>, %arg5: memref<1x32xf32, #tpu.memory_space<vmem>>, %arg6: memref<1x64x32xf32, #tpu.memory_space<vmem>>) attributes {dimension_semantics = [#tpu.dimension_semantics<parallel>], iteration_bounds = array<i64: 2>, scalar_prefetch = 0 : i64, scratch_operands = 0 : i64, tpu.core_type = #tpu.core_type<tc>, window_params = [{transform_indices = @transform_0, window_bounds = array<i64: 1, 64, 64>}, {pipeline_mode = #tpu.pipeline_mode<synchronous>, transform_indices = @transform_1, window_bounds = array<i64: 64, 32>}, {pipeline_mode = #tpu.pipeline_mode<synchronous>, transform_indices = @transform_2, window_bounds = array<i64: 1, 32>}, {pipeline_mode = #tpu.pipeline_mode<synchronous>, transform_indices = @transform_3, window_bounds = array<i64: 1, 32>}, {pipeline_mode = #tpu.pipeline_mode<synchronous>, transform_indices = @transform_4, window_bounds = array<i64: 1, 32>}, {transform_indices = @transform_5, window_bounds = array<i64: 1, 64, 32>}]} {
    %c0 = arith.constant 0 : index
    %c0_0 = arith.constant 0 : index
    %c0_1 = arith.constant 0 : index
    %0 = vector.load %arg1[%c0, %c0_0, %c0_1] : memref<1x64x64xbf16, #tpu.memory_space<vmem>>, vector<1x64x64xbf16>
    %1 = vector.shape_cast %0 : vector<1x64x64xbf16> to vector<64x64xbf16>
    %c0_2 = arith.constant 0 : index
    %c0_3 = arith.constant 0 : index
    %2 = vector.load %arg2[%c0_2, %c0_3] : memref<64x32xbf16, #tpu.memory_space<vmem>>, vector<64x32xbf16>
    %cst = arith.constant dense<0.000000e+00> : vector<64x32xf32>
    %3 = tpu.matmul %1, %2, %cst {dimension_numbers = #tpu.dot_dimension_numbers<[1], [0], [0], [1], [0, 0, 1, 1], [], []>} : vector<64x64xbf16>, vector<64x32xbf16>, vector<64x32xf32> -> vector<64x32xf32>
    %c0_4 = arith.constant 0 : index
    %c0_5 = arith.constant 0 : index
    %4 = vector.load %arg3[%c0_4, %c0_5] : memref<1x32xf32, #tpu.memory_space<vmem>>, vector<1x32xf32>
    %5 = vector.broadcast %4 : vector<1x32xf32> to vector<64x32xf32>
    %6 = arith.addf %3, %5 : vector<64x32xf32>
    %cst_6 = arith.constant dense<0.000000e+00> : vector<32xf32>
    %7 = vector.multi_reduction <add>, %6, %cst_6 [0] : vector<64x32xf32> to vector<32xf32>
    %8 = vector.shape_cast %7 : vector<32xf32> to vector<1x32xf32>
    %9 = arith.mulf %6, %6 : vector<64x32xf32>
    %cst_7 = arith.constant dense<0.000000e+00> : vector<32xf32>
    %10 = vector.multi_reduction <add>, %9, %cst_7 [0] : vector<64x32xf32> to vector<32xf32>
    %11 = vector.shape_cast %10 : vector<32xf32> to vector<1x32xf32>
    %cst_8 = arith.constant 1.562500e-02 : f32
    %12 = vector.broadcast %cst_8 : f32 to vector<1x32xf32>
    %13 = arith.mulf %8, %12 : vector<1x32xf32>
    %cst_9 = arith.constant 1.562500e-02 : f32
    %14 = vector.broadcast %cst_9 : f32 to vector<1x32xf32>
    %15 = arith.mulf %11, %14 : vector<1x32xf32>
    %16 = arith.mulf %13, %13 : vector<1x32xf32>
    %17 = arith.subf %15, %16 : vector<1x32xf32>
    %cst_10 = arith.constant 0.000000e+00 : f32
    %18 = vector.broadcast %cst_10 : f32 to vector<1x32xf32>
    %19 = arith.maximumf %17, %18 : vector<1x32xf32>
    %20 = vector.broadcast %13 : vector<1x32xf32> to vector<64x32xf32>
    %21 = arith.subf %6, %20 : vector<64x32xf32>
    %cst_11 = arith.constant 9.99999974E-6 : f32
    %22 = vector.broadcast %cst_11 : f32 to vector<1x32xf32>
    %23 = arith.addf %19, %22 : vector<1x32xf32>
    %24 = math.rsqrt %23 : vector<1x32xf32>
    %25 = vector.broadcast %24 : vector<1x32xf32> to vector<64x32xf32>
    %26 = arith.mulf %21, %25 : vector<64x32xf32>
    %c0_12 = arith.constant 0 : index
    %c0_13 = arith.constant 0 : index
    %27 = vector.load %arg4[%c0_12, %c0_13] : memref<1x32xf32, #tpu.memory_space<vmem>>, vector<1x32xf32>
    %28 = vector.broadcast %27 : vector<1x32xf32> to vector<64x32xf32>
    %29 = arith.mulf %26, %28 : vector<64x32xf32>
    %c0_14 = arith.constant 0 : index
    %c0_15 = arith.constant 0 : index
    %30 = vector.load %arg5[%c0_14, %c0_15] : memref<1x32xf32, #tpu.memory_space<vmem>>, vector<1x32xf32>
    %31 = vector.broadcast %30 : vector<1x32xf32> to vector<64x32xf32>
    %32 = arith.addf %29, %31 : vector<64x32xf32>
    %c0_16 = arith.constant 0 : index
    %c0_17 = arith.constant 0 : index
    %c0_18 = arith.constant 0 : index
    %33 = vector.load %arg6[%c0_16, %c0_17, %c0_18] : memref<1x64x32xf32, #tpu.memory_space<vmem>>, vector<1x64x32xf32>
    %34 = vector.shape_cast %33 : vector<1x64x32xf32> to vector<64x32xf32>
    %35 = vector.shape_cast %32 : vector<64x32xf32> to vector<1x64x32xf32>
    tpu.vector_store %arg6[%c0_16, %c0_17, %c0_18], %35 {strides = array<i32>} : memref<1x64x32xf32, #tpu.memory_space<vmem>>, vector<1x64x32xf32>,
    return
  }
  func.func @transform_0(%arg0: i32) -> (i32, i32, i32) {
    %c0_i32 = arith.constant 0 : i32
    %c0_i32_0 = arith.constant 0 : i32
    %c0_i32_1 = arith.constant 0 : i32
    return %arg0, %c0_i32, %c0_i32_0 : i32, i32, i32
  }
  func.func @transform_1(%arg0: i32) -> (i32, i32) {
    %c0_i32 = arith.constant 0 : i32
    %c0_i32_0 = arith.constant 0 : i32
    %c0_i32_1 = arith.constant 0 : i32
    return %c0_i32, %c0_i32_0 : i32, i32
  }
  func.func @transform_2(%arg0: i32) -> (i32, i32) {
    %c0_i32 = arith.constant 0 : i32
    %c0_i32_0 = arith.constant 0 : i32
    %c0_i32_1 = arith.constant 0 : i32
    return %c0_i32, %c0_i32_0 : i32, i32
  }
  func.func @transform_3(%arg0: i32) -> (i32, i32) {
    %c0_i32 = arith.constant 0 : i32
    %c0_i32_0 = arith.constant 0 : i32
    %c0_i32_1 = arith.constant 0 : i32
    return %c0_i32, %c0_i32_0 : i32, i32
  }
  func.func @transform_4(%arg0: i32) -> (i32, i32) {
    %c0_i32 = arith.constant 0 : i32
    %c0_i32_0 = arith.constant 0 : i32
    %c0_i32_1 = arith.constant 0 : i32
    return %c0_i32, %c0_i32_0 : i32, i32
  }
  func.func @transform_5(%arg0: i32) -> (i32, i32, i32) {
    %c0_i32 = arith.constant 0 : i32
    %c0_i32_0 = arith.constant 0 : i32
    %c0_i32_1 = arith.constant 0 : i32
    return %arg0, %c0_i32, %c0_i32_0 : i32, i32, i32
  }
}

</mosaic_0001>

<llo_original>
// kernel: squeeze.17
$region0: #{squeeze.17}
  %s0 = inlined_call_operand.vmem [shape: f32[128], index: 0, kind: input, shape index: {}]
  %s1 = inlined_call_operand.hbm [shape: f32[2,8,8,1], index: 1, kind: output, shape index: {}]
  $region1: #{squeeze.17} parent=0
    #allocation0 [shape = 'u8[8192]{0}', space=vmem, size = 0x2000, scoped, tag = 'operand span for operand 1']
    #allocation1 [shape = 's32[1]{0}', space=sflag, size = 0x4, scoped, tag = 'scoped memory for squeeze.17']
    #allocation2 [shape = 'u8[4096]{0}', space=vmem, size = 0x1000, scoped, tag = 'scoped mem for input reshape']
    %2 = vsyncpa [#allocation1], 0
    %s4 = ssub.s32 2, 1
    %v5 = vld [vmem:[%s0] sm:%s4]
    %6 = vst [vmem:[#allocation2] sm:%s4] %v5
    %v7 = vld [vmem:[#allocation2] sm:$0x1]
    %vm8 = vcmask 64512
    %9 = vst.msk [vmem:[#allocation0] sm:$0x1] %vm8, %v7
    %v10 = vld [vmem:[#allocation2] sm:$0x1]
    %11 = vrot.lane.b32.xlu0 %v10, 120
    %v12 = vpop.permute.xlu0 %11
    %vm13 = vcmask 64512
    %s14 = scalar_lea.vmem [#allocation0], 1
    %15 = vst.msk [vmem:[%s14] sm:$0x1] %vm13, %v12
    %v16 = vld [vmem:[#allocation2] sm:$0x1]
    %17 = vrot.lane.b32.xlu0 %v16, 112
    %v18 = vpop.permute.xlu0 %17
    %vm19 = vcmask 64512
    %s20 = scalar_lea.vmem [#allocation0], 2
    %21 = vst.msk [vmem:[%s20] sm:$0x1] %vm19, %v18
    %v22 = vld [vmem:[#allocation2] sm:$0x1]
    %23 = vrot.lane.b32.xlu0 %v22, 104
    %v24 = vpop.permute.xlu0 %23
    %vm25 = vcmask 64512
    %s26 = scalar_lea.vmem [#allocation0], 3
    %27 = vst.msk [vmem:[%s26] sm:$0x1] %vm25, %v24
    %v28 = vld [vmem:[#allocation2] sm:$0x1]
    %29 = vrot.lane.b32.xlu0 %v28, 96
    %v30 = vpop.permute.xlu0 %29
    %vm31 = vcmask 64512
    %s32 = scalar_lea.vmem [#allocation0], 4
    %33 = vst.msk [vmem:[%s32] sm:$0x1] %vm31, %v30
    %v34 = vld [vmem:[#allocation2] sm:$0x1]
    %35 = vrot.lane.b32.xlu0 %v34, 88
    %v36 = vpop.permute.xlu0 %35
    %vm37 = vcmask 64512
    %s38 = scalar_lea.vmem [#allocation0], 5
    %39 = vst.msk [vmem:[%s38] sm:$0x1] %vm37, %v36
    %v40 = vld [vmem:[#allocation2] sm:$0x1]
    %41 = vrot.lane.b32.xlu0 %v40, 80
    %v42 = vpop.permute.xlu0 %41
    %vm43 = vcmask 64512
    %s44 = scalar_lea.vmem [#allocation0], 6
    %45 = vst.msk [vmem:[%s44] sm:$0x1] %vm43, %v42
    %v46 = vld [vmem:[#allocation2] sm:$0x1]
    %47 = vrot.lane.b32.xlu0 %v46, 72
    %v48 = vpop.permute.xlu0 %47
    %vm49 = vcmask 64512
    %s50 = scalar_lea.vmem [#allocation0], 7
    %51 = vst.msk [vmem:[%s50] sm:$0x1] %vm49, %v48
    %v52 = vld [vmem:[#allocation2] sm:$0x1]
    %53 = vrot.lane.b32.xlu0 %v52, 64
    %v54 = vpop.permute.xlu0 %53
    %vm55 = vcmask 64512
    %s56 = scalar_lea.vmem [#allocation0], 8
    %57 = vst.msk [vmem:[%s56] sm:$0x1] %vm55, %v54
    %v58 = vld [vmem:[#allocation2] sm:$0x1]
    %59 = vrot.lane.b32.xlu0 %v58, 56
    %v60 = vpop.permute.xlu0 %59
    %vm61 = vcmask 64512
    %s62 = scalar_lea.vmem [#allocation0], 9
    %63 = vst.msk [vmem:[%s62] sm:$0x1] %vm61, %v60
    %v64 = vld [vmem:[#allocation2] sm:$0x1]
    %65 = vrot.lane.b32.xlu0 %v64, 48
    %v66 = vpop.permute.xlu0 %65
    %vm67 = vcmask 64512
    %s68 = scalar_lea.vmem [#allocation0], 10
    %69 = vst.msk [vmem:[%s68] sm:$0x1] %vm67, %v66
    %v70 = vld [vmem:[#allocation2] sm:$0x1]
    %71 = vrot.lane.b32.xlu0 %v70, 40
    %v72 = vpop.permute.xlu0 %71
    %vm73 = vcmask 64512
    %s74 = scalar_lea.vmem [#allocation0], 11
    %75 = vst.msk [vmem:[%s74] sm:$0x1] %vm73, %v72
    %v76 = vld [vmem:[#allocation2] sm:$0x1]
    %77 = vrot.lane.b32.xlu0 %v76, 32
    %v78 = vpop.permute.xlu0 %77
    %vm79 = vcmask 64512
    %s80 = scalar_lea.vmem [#allocation0], 12
    %81 = vst.msk [vmem:[%s80] sm:$0x1] %vm79, %v78
    %v82 = vld [vmem:[#allocation2] sm:$0x1]
    %83 = vrot.lane.b32.xlu0 %v82, 24
    %v84 = vpop.permute.xlu0 %83
    %vm85 = vcmask 64512
    %s86 = scalar_lea.vmem [#allocation0], 13
    %87 = vst.msk [vmem:[%s86] sm:$0x1] %vm85, %v84
    %v88 = vld [vmem:[#allocation2] sm:$0x1]
    %89 = vrot.lane.b32.xlu0 %v88, 16
    %v90 = vpop.permute.xlu0 %89
    %vm91 = vcmask 64512
    %s92 = scalar_lea.vmem [#allocation0], 14
    %93 = vst.msk [vmem:[%s92] sm:$0x1] %vm91, %v90
    %v94 = vld [vmem:[#allocation2] sm:$0x1]
    %95 = vrot.lane.b32.xlu0 %v94, 8
    %v96 = vpop.permute.xlu0 %95
    %vm97 = vcmask 64512
    %s98 = scalar_lea.vmem [#allocation0], 15
    %99 = vst.msk [vmem:[%s98] sm:$0x1] %vm97, %v96
    %101 = vsyncadd [#allocation1], 0
    %s103 = sshll.u32 [#allocation0], 4
    %s104 = int_to_ptr.vmem [resolvable:$true] %s103
    %s105 = sshll.u32 %s1, 4
    %s106 = int_to_ptr.hbm [resolvable:$true] %s105
    %108 = dma.vmem_to_hbm [thread:$0]  %s104, 256, %s106, [#allocation1]
    %110 = dma.done [#allocation1], 256
    %111 = vsyncpa [#allocation1], 1

// kernel: testr_forward.3
$region0: #{testr_forward.3}
  #allocation0 [shape = 'u32[]', space=smem, size = 0x4, offset = 0x4, fixed_abs, tag = 'smem constant byte address 0x4 - core index']
  #allocation1 [shape = 'u32[72,128]{1,0:T(1,128)}', space=vmem, size = 0x9000, scoped, tag = 'internal scratch']
  %s0 = inlined_call_operand.vmem [shape: bf16[512,32], index: 0, kind: input, shape index: {}]
  %s1 = inlined_call_operand.vmem [shape: bf16[512,32], index: 1, kind: input, shape index: {}]
  %s2 = inlined_call_operand.vmem [shape: f32[512,8], index: 2, kind: input, shape index: {}]
  %s3 = inlined_call_operand.vmem [shape: bf16[32,32], index: 3, kind: input, shape index: {}]
  %s4 = inlined_call_operand.vmem [shape: f32[1,32], index: 4, kind: input, shape index: {}]
  %s5 = inlined_call_operand.vmem [shape: bf16[32,32], index: 5, kind: input, shape index: {}]
  %s6 = inlined_call_operand.vmem [shape: f32[1,32], index: 6, kind: input, shape index: {}]
  %s7 = inlined_call_operand.vmem [shape: bf16[64,8], index: 7, kind: input, shape index: {}]
  %s8 = inlined_call_operand.vmem [shape: bf16[32,16], index: 8, kind: input, shape index: {}]
  %s9 = inlined_call_operand.vmem [shape: f32[1,16], index: 9, kind: input, shape index: {}]
  %s10 = inlined_call_operand.vmem [shape: f32[512,8], index: 10, kind: output, shape index: {0}]
  %s11 = inlined_call_operand.vmem [shape: f32[512,16], index: 11, kind: output, shape index: {1}]
  %12 = xla_tuple %s10, %s11
  %s13 = sld [smem:[#allocation0]]
  $region81: #{testr_forward.3} parent=0
    _
  %s15 = ssub.s32 1, %s13
  %s16 = scalar_select 0, %s15, %s13
  loop: start=0, step=1, limit=4
  $region2: #{testr_forward.3} parent=0 // loop_pre_header
    _
  $region3: #{testr_forward.3} parent=0 // loop_header
    %s18 = sphi 0, %s22
    %p19 = scmp.ge.s32.totalorder %s18, 4
    %s28 = sphi 0, %s30
    %s31 = sphi 0, %s28
    %s32 = sphi 0, %s31
    %s48 = sphi 0, %s32
    %s54 = sphi 0, %s56
    %s57 = sphi 0, %s54
    %s58 = sphi 0, %s57
    %s74 = sphi 0, %s58
    %s80 = sphi 0, %s82
    %s83 = sphi 0, %s80
    %s84 = sphi 0, %s83
    %s100 = sphi 0, %s84
    %s104 = sphi 0, %s104
    %s106 = sphi 0, %s104
    %s107 = sphi 0, %s106
    %s121 = sphi 0, %s107
    %s125 = sphi 0, %s125
    %s127 = sphi 0, %s125
    %s128 = sphi 0, %s127
    %s142 = sphi 0, %s128
    %s146 = sphi 0, %s146
    %s148 = sphi 0, %s146
    %s149 = sphi 0, %s148
    %s163 = sphi 0, %s149
    %s167 = sphi 0, %s167
    %s169 = sphi 0, %s167
    %s170 = sphi 0, %s169
    %s184 = sphi 0, %s170
    %s188 = sphi 0, %s188
    %s190 = sphi 0, %s188
    %s191 = sphi 0, %s190
    %s205 = sphi 0, %s191
    %s209 = sphi 0, %s209
    %s211 = sphi 0, %s209
    %s212 = sphi 0, %s211
    %s226 = sphi 0, %s212
    %s230 = sphi 0, %s230
    %s232 = sphi 0, %s230
    %s233 = sphi 0, %s232
    %s247 = sphi 0, %s233
    %s253 = sphi 0, %s255
    %s256 = sphi 0, %s253
    %s257 = sphi 0, %s256
    %s273 = sphi 0, %s257
    %s279 = sphi 0, %s281
    %s282 = sphi 0, %s279
    %s283 = sphi 0, %s282
    %s299 = sphi 0, %s283
  $region4: #{testr_forward.3} parent=0 // loop_header_branch
    %21 = sbr.rel (%p19) target = $region8
  $region5: #{testr_forward.3} parent=0 // loop_body
    %s23 = ssub.s32 %s18, 1
    %s24 = ssub.s32 %s18, 2
    %s25 = sadd.s32 %s18, 1
    %s26 = ssub.s32 %s18, %s25
    %p27 = scmp.eq.s32.totalorder %s26, 0
    %s29 = sadd.s32 %s28, 1
    %s30 = scalar_select %p27, %s28, %s29
    %p33 = pneg %p27
    %p34 = scmp.eq.s32.totalorder %s18, 1
    %p35 = por %p33, %p34
    %p36 = scmp.ne.s32.totalorder %s28, %s31
    %p37 = scmp.eq.s32.totalorder %s18, 0
    %p38 = por %p36, %p37
    %p39 = scmp.ne.s32.totalorder %s28, %s31
    %p40 = scmp.eq.s32.totalorder %s23, 1
    %p41 = por %p39, %p40
    %p42 = scmp.ne.s32.totalorder %s31, %s32
    %p43 = scmp.eq.s32.totalorder %s23, 0
    %p44 = por %p42, %p43
    %p45 = scmp.ne.s32.totalorder %s31, %s32
    %p46 = scmp.eq.s32.totalorder %s24, 1
    %p47 = por %p45, %p46
    %p49 = scmp.ne.s32.totalorder %s32, %s48
    %p50 = scmp.eq.s32.totalorder %s24, 0
    %p51 = por %p49, %p50
    %s52 = ssub.s32 %s18, %s25
    %p53 = scmp.eq.s32.totalorder %s52, 0
    %s55 = sadd.s32 %s54, 1
    %s56 = scalar_select %p53, %s54, %s55
    %p59 = pneg %p53
    %p60 = scmp.eq.s32.totalorder %s18, 1
    %p61 = por %p59, %p60
    %p62 = scmp.ne.s32.totalorder %s54, %s57
    %p63 = scmp.eq.s32.totalorder %s18, 0
    %p64 = por %p62, %p63
    %p65 = scmp.ne.s32.totalorder %s54, %s57
    %p66 = scmp.eq.s32.totalorder %s23, 1
    %p67 = por %p65, %p66
    %p68 = scmp.ne.s32.totalorder %s57, %s58
    %p69 = scmp.eq.s32.totalorder %s23, 0
    %p70 = por %p68, %p69
    %p71 = scmp.ne.s32.totalorder %s57, %s58
    %p72 = scmp.eq.s32.totalorder %s24, 1
    %p73 = por %p71, %p72
    %p75 = scmp.ne.s32.totalorder %s58, %s74
    %p76 = scmp.eq.s32.totalorder %s24, 0
    %p77 = por %p75, %p76
    %s78 = ssub.s32 %s18, %s25
    %p79 = scmp.eq.s32.totalorder %s78, 0
    %s81 = sadd.s32 %s80, 1
    %s82 = scalar_select %p79, %s80, %s81
    %p85 = pneg %p79
    %p86 = scmp.eq.s32.totalorder %s18, 1
    %p87 = por %p85, %p86
    %p88 = scmp.ne.s32.totalorder %s80, %s83
    %p89 = scmp.eq.s32.totalorder %s18, 0
    %p90 = por %p88, %p89
    %p91 = scmp.ne.s32.totalorder %s80, %s83
    %p92 = scmp.eq.s32.totalorder %s23, 1
    %p93 = por %p91, %p92
    %p94 = scmp.ne.s32.totalorder %s83, %s84
    %p95 = scmp.eq.s32.totalorder %s23, 0
    %p96 = por %p94, %p95
    %p97 = scmp.ne.s32.totalorder %s83, %s84
    %p98 = scmp.eq.s32.totalorder %s24, 1
    %p99 = por %p97, %p98
    %p101 = scmp.ne.s32.totalorder %s84, %s100
    %p102 = scmp.eq.s32.totalorder %s24, 0
    %p103 = por %p101, %p102
    %s105 = sadd.s32 %s104, 1
    %p108 = scmp.eq.s32.totalorder %s18, 1
    %p109 = scmp.ne.s32.totalorder %s104, %s106
    %p110 = scmp.eq.s32.totalorder %s18, 0
    %p111 = por %p109, %p110
    %p112 = scmp.ne.s32.totalorder %s104, %s106
    %p113 = scmp.eq.s32.totalorder %s23, 1
    %p114 = por %p112, %p113
    %p115 = scmp.ne.s32.totalorder %s106, %s107
    %p116 = scmp.eq.s32.totalorder %s23, 0
    %p117 = por %p115, %p116
    %p118 = scmp.ne.s32.totalorder %s106, %s107
    %p119 = scmp.eq.s32.totalorder %s24, 1
    %p120 = por %p118, %p119
    %p122 = scmp.ne.s32.totalorder %s107, %s121
    %p123 = scmp.eq.s32.totalorder %s24, 0
    %p124 = por %p122, %p123
    %s126 = sadd.s32 %s125, 1
    %p129 = scmp.eq.s32.totalorder %s18, 1
    %p130 = scmp.ne.s32.totalorder %s125, %s127
    %p131 = scmp.eq.s32.totalorder %s18, 0
    %p132 = por %p130, %p131
    %p133 = scmp.ne.s32.totalorder %s125, %s127
    %p134 = scmp.eq.s32.totalorder %s23, 1
    %p135 = por %p133, %p134
    %p136 = scmp.ne.s32.totalorder %s127, %s128
    %p137 = scmp.eq.s32.totalorder %s23, 0
    %p138 = por %p136, %p137
    %p139 = scmp.ne.s32.totalorder %s127, %s128
    %p140 = scmp.eq.s32.totalorder %s24, 1
    %p141 = por %p139, %p140
    %p143 = scmp.ne.s32.totalorder %s128, %s142
    %p144 = scmp.eq.s32.totalorder %s24, 0
    %p145 = por %p143, %p144
    %s147 = sadd.s32 %s146, 1
    %p150 = scmp.eq.s32.totalorder %s18, 1
    %p151 = scmp.ne.s32.totalorder %s146, %s148
    %p152 = scmp.eq.s32.totalorder %s18, 0
    %p153 = por %p151, %p152
    %p154 = scmp.ne.s32.totalorder %s146, %s148
    %p155 = scmp.eq.s32.totalorder %s23, 1
    %p156 = por %p154, %p155
    %p157 = scmp.ne.s32.totalorder %s148, %s149
    %p158 = scmp.eq.s32.totalorder %s23, 0
    %p159 = por %p157, %p158
    %p160 = scmp.ne.s32.totalorder %s148, %s149
    %p161 = scmp.eq.s32.totalorder %s24, 1
    %p162 = por %p160, %p161
    %p164 = scmp.ne.s32.totalorder %s149, %s163
    %p165 = scmp.eq.s32.totalorder %s24, 0
    %p166 = por %p164, %p165
    %s168 = sadd.s32 %s167, 1
    %p171 = scmp.eq.s32.totalorder %s18, 1
    %p172 = scmp.ne.s32.totalorder %s167, %s169
    %p173 = scmp.eq.s32.totalorder %s18, 0
    %p174 = por %p172, %p173
    %p175 = scmp.ne.s32.totalorder %s167, %s169
    %p176 = scmp.eq.s32.totalorder %s23, 1
    %p177 = por %p175, %p176
    %p178 = scmp.ne.s32.totalorder %s169, %s170
    %p179 = scmp.eq.s32.totalorder %s23, 0
    %p180 = por %p178, %p179
    %p181 = scmp.ne.s32.totalorder %s169, %s170
    %p182 = scmp.eq.s32.totalorder %s24, 1
    %p183 = por %p181, %p182
    %p185 = scmp.ne.s32.totalorder %s170, %s184
    %p186 = scmp.eq.s32.totalorder %s24, 0
    %p187 = por %p185, %p186
    %s189 = sadd.s32 %s188, 1
    %p192 = scmp.eq.s32.totalorder %s18, 1
    %p193 = scmp.ne.s32.totalorder %s188, %s190
    %p194 = scmp.eq.s32.totalorder %s18, 0
    %p195 = por %p193, %p194
    %p196 = scmp.ne.s32.totalorder %s188, %s190
    %p197 = scmp.eq.s32.totalorder %s23, 1
    %p198 = por %p196, %p197
    %p199 = scmp.ne.s32.totalorder %s190, %s191
    %p200 = scmp.eq.s32.totalorder %s23, 0
    %p201 = por %p199, %p200
    %p202 = scmp.ne.s32.totalorder %s190, %s191
    %p203 = scmp.eq.s32.totalorder %s24, 1
    %p204 = por %p202, %p203
    %p206 = scmp.ne.s32.totalorder %s191, %s205
    %p207 = scmp.eq.s32.totalorder %s24, 0
    %p208 = por %p206, %p207
    %s210 = sadd.s32 %s209, 1
    %p213 = scmp.eq.s32.totalorder %s18, 1
    %p214 = scmp.ne.s32.totalorder %s209, %s211
    %p215 = scmp.eq.s32.totalorder %s18, 0
    %p216 = por %p214, %p215
    %p217 = scmp.ne.s32.totalorder %s209, %s211
    %p218 = scmp.eq.s32.totalorder %s23, 1
    %p219 = por %p217, %p218
    %p220 = scmp.ne.s32.totalorder %s211, %s212
    %p221 = scmp.eq.s32.totalorder %s23, 0
    %p222 = por %p220, %p221
    %p223 = scmp.ne.s32.totalorder %s211, %s212
    %p224 = scmp.eq.s32.totalorder %s24, 1
    %p225 = por %p223, %p224
    %p227 = scmp.ne.s32.totalorder %s212, %s226
    %p228 = scmp.eq.s32.totalorder %s24, 0
    %p229 = por %p227, %p228
    %s231 = sadd.s32 %s230, 1
    %p234 = scmp.eq.s32.totalorder %s18, 1
    %p235 = scmp.ne.s32.totalorder %s230, %s232
    %p236 = scmp.eq.s32.totalorder %s18, 0
    %p237 = por %p235, %p236
    %p238 = scmp.ne.s32.totalorder %s230, %s232
    %p239 = scmp.eq.s32.totalorder %s23, 1
    %p240 = por %p238, %p239
    %p241 = scmp.ne.s32.totalorder %s232, %s233
    %p242 = scmp.eq.s32.totalorder %s23, 0
    %p243 = por %p241, %p242
    %p244 = scmp.ne.s32.totalorder %s232, %s233
    %p245 = scmp.eq.s32.totalorder %s24, 1
    %p246 = por %p244, %p245
    %p248 = scmp.ne.s32.totalorder %s233, %s247
    %p249 = scmp.eq.s32.totalorder %s24, 0
    %p250 = por %p248, %p249
    %s251 = ssub.s32 %s18, %s25
    %p252 = scmp.eq.s32.totalorder %s251, 0
    %s254 = sadd.s32 %s253, 1
    %s255 = scalar_select %p252, %s253, %s254
    %p258 = pneg %p252
    %p259 = scmp.eq.s32.totalorder %s18, 1
    %p260 = por %p258, %p259
    %p261 = scmp.ne.s32.totalorder %s253, %s256
    %p262 = scmp.eq.s32.totalorder %s18, 0
    %p263 = por %p261, %p262
    %p264 = scmp.ne.s32.totalorder %s253, %s256
    %p265 = scmp.eq.s32.totalorder %s23, 1
    %p266 = por %p264, %p265
    %p267 = scmp.ne.s32.totalorder %s256, %s257
    %p268 = scmp.eq.s32.totalorder %s23, 0
    %p269 = por %p267, %p268
    %p270 = scmp.ne.s32.totalorder %s256, %s257
    %p271 = scmp.eq.s32.totalorder %s24, 1
    %p272 = por %p270, %p271
    %p274 = scmp.ne.s32.totalorder %s257, %s273
    %p275 = scmp.eq.s32.totalorder %s24, 0
    %p276 = por %p274, %p275
    %s277 = ssub.s32 %s18, %s25
    %p278 = scmp.eq.s32.totalorder %s277, 0
    %s280 = sadd.s32 %s279, 1
    %s281 = scalar_select %p278, %s279, %s280
    %p284 = pneg %p278
    %p285 = scmp.eq.s32.totalorder %s18, 1
    %p286 = por %p284, %p285
    %p287 = scmp.ne.s32.totalorder %s279, %s282
    %p288 = scmp.eq.s32.totalorder %s18, 0
    %p289 = por %p287, %p288
    %p290 = scmp.ne.s32.totalorder %s279, %s282
    %p291 = scmp.eq.s32.totalorder %s23, 1
    %p292 = por %p290, %p291
    %p293 = scmp.ne.s32.totalorder %s282, %s283
    %p294 = scmp.eq.s32.totalorder %s23, 0
    %p295 = por %p293, %p294
    %p296 = scmp.ne.s32.totalorder %s282, %s283
    %p297 = scmp.eq.s32.totalorder %s24, 1
    %p298 = por %p296, %p297
    %p300 = scmp.ne.s32.totalorder %s283, %s299
    %p301 = scmp.eq.s32.totalorder %s24, 0
    %p302 = por %p300, %p301
    %p303 = scmp.le.s32.totalorder 1, %s18
    %p304 = scmp.lt.s32.totalorder %s18, 3
    %p305 = pnand %p303, %p304
    %p306 = pneg %p305
    // Predicated region
    $region9: #{testr_forward.3} parent=5 // pred_check
      _
    $region10: #{testr_forward.3} parent=5 // pred_check_branch
      %308 = sbr.rel (%p305) target = $region12
    $region11: #{testr_forward.3} parent=5 // pred_region
      %s309 = ssub.s32 %s18, 1
      // Predicated region
      $region13: #{testr_forward.3} parent=11 // pred_check
        %p310 = pneg %p117
      $region14: #{testr_forward.3} parent=11 // pred_check_branch
        %312 = sbr.rel (%p310) target = $region16
      $region15: #{testr_forward.3} parent=11 // pred_region
        _
      $region16: #{testr_forward.3} parent=11 // pred_fallthru
        _
      // Predicated region
      $region17: #{testr_forward.3} parent=11 // pred_check
        %p313 = pneg %p138
      $region18: #{testr_forward.3} parent=11 // pred_check_branch
        %315 = sbr.rel (%p313) target = $region20
      $region19: #{testr_forward.3} parent=11 // pred_region
        _
      $region20: #{testr_forward.3} parent=11 // pred_fallthru
        _
      // Predicated region
      $region21: #{testr_forward.3} parent=11 // pred_check
        %p316 = pneg %p159
      $region22: #{testr_forward.3} parent=11 // pred_check_branch
        %318 = sbr.rel (%p316) target = $region24
      $region23: #{testr_forward.3} parent=11 // pred_region
        _
      $region24: #{testr_forward.3} parent=11 // pred_fallthru
        _
      // Predicated region
      $region25: #{testr_forward.3} parent=11 // pred_check
        %p319 = pneg %p180
      $region26: #{testr_forward.3} parent=11 // pred_check_branch
        %321 = sbr.rel (%p319) target = $region28
      $region27: #{testr_forward.3} parent=11 // pred_region
        _
      $region28: #{testr_forward.3} parent=11 // pred_fallthru
        _
      // Predicated region
      $region29: #{testr_forward.3} parent=11 // pred_check
        %p322 = pneg %p201
      $region30: #{testr_forward.3} parent=11 // pred_check_branch
        %324 = sbr.rel (%p322) target = $region32
      $region31: #{testr_forward.3} parent=11 // pred_region
        _
      $region32: #{testr_forward.3} parent=11 // pred_fallthru
        _
      // Predicated region
      $region33: #{testr_forward.3} parent=11 // pred_check
        %p325 = pneg %p222
      $region34: #{testr_forward.3} parent=11 // pred_check_branch
        %327 = sbr.rel (%p325) target = $region36
      $region35: #{testr_forward.3} parent=11 // pred_region
        _
      $region36: #{testr_forward.3} parent=11 // pred_fallthru
        _
      // Predicated region
      $region37: #{testr_forward.3} parent=11 // pred_check
        %p328 = pneg %p243
      $region38: #{testr_forward.3} parent=11 // pred_check_branch
        %330 = sbr.rel (%p328) target = $region40
      $region39: #{testr_forward.3} parent=11 // pred_region
        _
      $region40: #{testr_forward.3} parent=11 // pred_fallthru
        _
    $region12: #{testr_forward.3} parent=5 // pred_fallthru
      _
    %p331 = scmp.lt.s32.totalorder %s18, 2
    // Predicated region
    $region41: #{testr_forward.3} parent=5 // pred_check
      %p332 = pneg %p331
    $region42: #{testr_forward.3} parent=5 // pred_check_branch
      %334 = sbr.rel (%p332) target = $region44
    $region43: #{testr_forward.3} parent=5 // pred_region
      // Predicated region
      $region45: #{testr_forward.3} parent=43 // pred_check
        %p335 = pneg %p38
      $region46: #{testr_forward.3} parent=43 // pred_check_branch
        %337 = sbr.rel (%p335) target = $region48
      $region47: #{testr_forward.3} parent=43 // pred_region
        %s338 = smul.u32 32, %s18
        %p339 = scmp.lt.s32.totalorder %s338, 63
        %s340 = scalar_select %p339, %s338, 63
        %s341 = smul.addr %s340, 4
        %s342 = scalar_lea.vmem %s0, %s341
        %s343 = smul.u32 32, %s18
      $region48: #{testr_forward.3} parent=43 // pred_fallthru
        _
      // Predicated region
      $region49: #{testr_forward.3} parent=43 // pred_check
        %p344 = pneg %p64
      $region50: #{testr_forward.3} parent=43 // pred_check_branch
        %346 = sbr.rel (%p344) target = $region52
      $region51: #{testr_forward.3} parent=43 // pred_region
        %s347 = smul.u32 32, %s18
        %p348 = scmp.lt.s32.totalorder %s347, 63
        %s349 = scalar_select %p348, %s347, 63
        %s350 = smul.addr %s349, 4
        %s351 = scalar_lea.vmem %s1, %s350
        %s352 = smul.u32 32, %s18
      $region52: #{testr_forward.3} parent=43 // pred_fallthru
        _
      // Predicated region
      $region53: #{testr_forward.3} parent=43 // pred_check
        %p353 = pneg %p90
      $region54: #{testr_forward.3} parent=43 // pred_check_branch
        %355 = sbr.rel (%p353) target = $region56
      $region55: #{testr_forward.3} parent=43 // pred_region
        %s356 = smul.u32 32, %s18
        %p357 = scmp.lt.s32.totalorder %s356, 63
        %s358 = scalar_select %p357, %s356, 63
        %s359 = smul.addr %s358, 8
        %s360 = scalar_lea.vmem %s2, %s359
        %s361 = smul.u32 32, %s18
      $region56: #{testr_forward.3} parent=43 // pred_fallthru
        _
    $region44: #{testr_forward.3} parent=5 // pred_fallthru
      _
    %p362 = scmp.le.s32.totalorder 1, %s18
    %p363 = scmp.lt.s32.totalorder %s18, 3
    %p364 = pnand %p362, %p363
    %p365 = pneg %p364
    // Predicated region
    $region57: #{testr_forward.3} parent=5 // pred_check
      _
    $region58: #{testr_forward.3} parent=5 // pred_check_branch
      %367 = sbr.rel (%p364) target = $region60
    $region59: #{testr_forward.3} parent=5 // pred_region
      %s368 = ssub.s32 %s18, 1
      %s369 = smul.u32 32, %s23
      %p370 = scmp.lt.s32.totalorder %s369, 63
      %s371 = scalar_select %p370, %s369, 63
      %s372 = smul.addr %s371, 4
      %s373 = scalar_lea.vmem %s0, %s372
      %p374 = pneg %p44
      %p375 = pneg %p41
      %s376 = smul.u32 32, %s23
      %p377 = scmp.lt.s32.totalorder %s376, 63
      %s378 = scalar_select %p377, %s376, 63
      %s379 = smul.addr %s378, 4
      %s380 = scalar_lea.vmem %s1, %s379
      %p381 = pneg %p70
      %p382 = pneg %p67
      %s383 = smul.u32 32, %s23
      %p384 = scmp.lt.s32.totalorder %s383, 63
      %s385 = scalar_select %p384, %s383, 63
      %s386 = smul.addr %s385, 8
      %s387 = scalar_lea.vmem %s2, %s386
      %p388 = pneg %p96
      %p389 = pneg %p93
      %p390 = pneg %p117
      %p391 = pneg %p114
      %p392 = pneg %p138
      %p393 = pneg %p135
      %p394 = pneg %p159
      %p395 = pneg %p156
      %p396 = pneg %p180
      %p397 = pneg %p177
      %p398 = pneg %p201
      %p399 = pneg %p198
      %p400 = pneg %p222
      %p401 = pneg %p219
      %p402 = pneg %p243
      %p403 = pneg %p240
      %p404 = pneg %p269
      %p405 = pneg %p266
      %s406 = smul.u32 32, %s23
      %p407 = scmp.lt.s32.totalorder %s406, 63
      %s408 = scalar_select %p407, %s406, 63
      %s409 = smul.addr %s408, 8
      %s410 = scalar_lea.vmem %s10, %s409
      %p411 = pneg %p295
      %p412 = pneg %p292
      %s413 = smul.u32 32, %s23
      %p414 = scmp.lt.s32.totalorder %s413, 63
      %s415 = scalar_select %p414, %s413, 63
      %s416 = smul.addr %s415, 8
      %s417 = scalar_lea.vmem %s11, %s416
      %s418 = smul.u32 32, %s23
      %p419 = scmp.lt.s32.totalorder %s418, 63
      %s420 = scalar_select %p419, %s418, 63
      %s421 = smul.addr %s420, 4
      %s422 = scalar_lea.vmem %s0, %s421
      %s423 = smul.u32 32, %s23
      %s424 = smul.u32 32, %s23
      %p425 = scmp.lt.s32.totalorder %s424, 63
      %s426 = scalar_select %p425, %s424, 63
      %s427 = smul.addr %s426, 4
      %s428 = scalar_lea.vmem %s1, %s427
      %s429 = smul.u32 32, %s23
      %s430 = smul.u32 32, %s23
      %p431 = scmp.lt.s32.totalorder %s430, 63
      %s432 = scalar_select %p431, %s430, 63
      %s433 = smul.addr %s432, 8
      %s434 = scalar_lea.vmem %s2, %s433
      %s435 = smul.u32 32, %s23
      %s436 = smul.u32 32, %s23
      %p437 = scmp.lt.s32.totalorder %s436, 63
      %s438 = scalar_select %p437, %s436, 63
      %s439 = smul.addr %s438, 8
      %s440 = scalar_lea.vmem %s10, %s439
      %s441 = smul.u32 32, %s23
      %s442 = smul.u32 32, %s23
      %p443 = scmp.lt.s32.totalorder %s442, 63
      %s444 = scalar_select %p443, %s442, 63
      %s445 = smul.addr %s444, 8
      %s446 = scalar_lea.vmem %s11, %s445
      %s447 = smul.u32 32, %s23
      %v449 = vld [vmem:[%s422] sm:$0xf]
      %v450 = vld [vmem:[%s422 + $0x4] sm:$0xf]
      %v451 = vld [vmem:[%s422 + $0x8] sm:$0xf]
      %v452 = vld [vmem:[%s422 + $0xc] sm:$0xf]
      %v453 = vld [vmem:[%s422 + $0x10] sm:$0xf]
      %v454 = vld [vmem:[%s422 + $0x14] sm:$0xf]
      %v455 = vld [vmem:[%s422 + $0x18] sm:$0xf]
      %v456 = vld [vmem:[%s422 + $0x1c] sm:$0xf]
      %v457 = vld [vmem:[%s422 + $0x20] sm:$0xf]
      %v458 = vld [vmem:[%s422 + $0x24] sm:$0xf]
      %v459 = vld [vmem:[%s422 + $0x28] sm:$0xf]
      %v460 = vld [vmem:[%s422 + $0x2c] sm:$0xf]
      %v461 = vld [vmem:[%s422 + $0x30] sm:$0xf]
      %v462 = vld [vmem:[%s422 + $0x34] sm:$0xf]
      %v463 = vld [vmem:[%s422 + $0x38] sm:$0xf]
      %v464 = vld [vmem:[%s422 + $0x3c] sm:$0xf]
      %v465 = vld [vmem:[%s422 + $0x40] sm:$0xf]
      %v466 = vld [vmem:[%s422 + $0x44] sm:$0xf]
      %v467 = vld [vmem:[%s422 + $0x48] sm:$0xf]
      %v468 = vld [vmem:[%s422 + $0x4c] sm:$0xf]
      %v469 = vld [vmem:[%s422 + $0x50] sm:$0xf]
      %v470 = vld [vmem:[%s422 + $0x54] sm:$0xf]
      %v471 = vld [vmem:[%s422 + $0x58] sm:$0xf]
      %v472 = vld [vmem:[%s422 + $0x5c] sm:$0xf]
      %v473 = vld [vmem:[%s422 + $0x60] sm:$0xf]
      %v474 = vld [vmem:[%s422 + $0x64] sm:$0xf]
      %v475 = vld [vmem:[%s422 + $0x68] sm:$0xf]
      %v476 = vld [vmem:[%s422 + $0x6c] sm:$0xf]
      %v477 = vld [vmem:[%s422 + $0x70] sm:$0xf]
      %v478 = vld [vmem:[%s422 + $0x74] sm:$0xf]
      %v479 = vld [vmem:[%s422 + $0x78] sm:$0xf]
      %v480 = vld [vmem:[%s422 + $0x7c] sm:$0xf]
      %v481 = vld [vmem:[%s3] sm:$0xf]
      %v482 = vld [vmem:[%s3 + $0x4] sm:$0xf]
      %v483 = vld [vmem:[%s3 + $0x8] sm:$0xf]
      %v484 = vld [vmem:[%s3 + $0xc] sm:$0xf]
      %v485 = vld [vmem:[%s4] sm:$0x1]
      %v487 = vperm.slane %v485, 0
      %v521 = vunpack.c.l.b16 %v449
      %v522 = vunpack.c.l.b16 %v450
      %v523 = vunpack.c.l.b16 %v451
      %v524 = vunpack.c.l.b16 %v452
      %v525 = vunpack.c.l.b16 %v453
      %v526 = vunpack.c.l.b16 %v454
      %v527 = vunpack.c.l.b16 %v455
      %v528 = vunpack.c.l.b16 %v456
      %v529 = vunpack.c.l.b16 %v457
      %v530 = vunpack.c.l.b16 %v458
      %v531 = vunpack.c.l.b16 %v459
      %v532 = vunpack.c.l.b16 %v460
      %v533 = vunpack.c.l.b16 %v461
      %v534 = vunpack.c.l.b16 %v462
      %v535 = vunpack.c.l.b16 %v463
      %v536 = vunpack.c.l.b16 %v464
      %v537 = vunpack.c.l.b16 %v465
      %v538 = vunpack.c.l.b16 %v466
      %v539 = vunpack.c.l.b16 %v467
      %v540 = vunpack.c.l.b16 %v468
      %v541 = vunpack.c.l.b16 %v469
      %v542 = vunpack.c.l.b16 %v470
      %v543 = vunpack.c.l.b16 %v471
      %v544 = vunpack.c.l.b16 %v472
      %v545 = vunpack.c.l.b16 %v473
      %v546 = vunpack.c.l.b16 %v474
      %v547 = vunpack.c.l.b16 %v475
      %v548 = vunpack.c.l.b16 %v476
      %v549 = vunpack.c.l.b16 %v477
      %v550 = vunpack.c.l.b16 %v478
      %v551 = vunpack.c.l.b16 %v479
      %v552 = vunpack.c.l.b16 %v480
      %v553 = vpack.c.b16 %v522, %v521
      %v554 = vpack.c.b16 %v524, %v523
      %v555 = vpack.c.b16 %v526, %v525
      %v556 = vpack.c.b16 %v528, %v527
      %v557 = vpack.c.b16 %v530, %v529
      %v558 = vpack.c.b16 %v532, %v531
      %v559 = vpack.c.b16 %v534, %v533
      %v560 = vpack.c.b16 %v536, %v535
      %v561 = vpack.c.b16 %v538, %v537
      %v562 = vpack.c.b16 %v540, %v539
      %v563 = vpack.c.b16 %v542, %v541
      %v564 = vpack.c.b16 %v544, %v543
      %v565 = vpack.c.b16 %v546, %v545
      %v566 = vpack.c.b16 %v548, %v547
      %v567 = vpack.c.b16 %v550, %v549
      %v568 = vpack.c.b16 %v552, %v551
      %v573 = vunpack.c.l.b16 %v481
      %v574 = vunpack.c.l.b16 %v482
      %v575 = vunpack.c.l.b16 %v483
      %v576 = vunpack.c.l.b16 %v484
      %v577 = vpack.c.b16 %v574, %v573
      %v578 = vpack.c.b16 %v576, %v575
      %vm581 = vcmask 261120
      %v583 = vsel %vm581, %v553, 0
      %v586 = vsel %vm581, %v554, 0
      %v589 = vsel %vm581, %v555, 0
      %v592 = vsel %vm581, %v556, 0
      %v595 = vsel %vm581, %v557, 0
      %v598 = vsel %vm581, %v558, 0
      %v601 = vsel %vm581, %v559, 0
      %v604 = vsel %vm581, %v560, 0
      %v607 = vsel %vm581, %v561, 0
      %v610 = vsel %vm581, %v562, 0
      %v613 = vsel %vm581, %v563, 0
      %v616 = vsel %vm581, %v564, 0
      %v619 = vsel %vm581, %v565, 0
      %v622 = vsel %vm581, %v566, 0
      %v625 = vsel %vm581, %v567, 0
      %v628 = vsel %vm581, %v568, 0
      %630 = vmatpush.bf16.msra.mxu0 0
      %631 = vmatpush.bf16.msra.mxu0 0
      %632 = vmatpush.bf16.msra.mxu0 0
      %633 = vmatpush.bf16.msra.mxu0 0
      %634 = vmatpush.bf16.msra.mxu0 0
      %635 = vmatpush.bf16.msra.mxu0 0
      %636 = vmatpush.bf16.msra.mxu0 %v578
      %637 = vmatpush.bf16.msra.mxu0 %v577
      %638 = vmatmul.bf16.gmra.mxu0 %v583
      %v639 = vpop.f32.mrf.mxu0
      %v640 = vadd.f32 %v487, %v639
      %v641 = vpop.f32.mrf.mxu0
      %v642 = vadd.f32 %v487, %v641
      %643 = vmatmul.bf16.gmra.mxu0 %v586
      %v644 = vpop.f32.mrf.mxu0
      %v645 = vadd.f32 %v487, %v644
      %v646 = vpop.f32.mrf.mxu0
      %v647 = vadd.f32 %v487, %v646
      %648 = vmatmul.bf16.gmra.mxu0 %v589
      %v649 = vpop.f32.mrf.mxu0
      %v650 = vadd.f32 %v487, %v649
      %v651 = vpop.f32.mrf.mxu0
      %v652 = vadd.f32 %v487, %v651
      %653 = vmatmul.bf16.gmra.mxu0 %v592
      %v654 = vpop.f32.mrf.mxu0
      %v655 = vadd.f32 %v487, %v654
      %v656 = vpop.f32.mrf.mxu0
      %v657 = vadd.f32 %v487, %v656
      %658 = vmatmul.bf16.gmra.mxu0 %v595
      %v659 = vpop.f32.mrf.mxu0
      %v660 = vadd.f32 %v487, %v659
      %v661 = vpop.f32.mrf.mxu0
      %v662 = vadd.f32 %v487, %v661
      %663 = vmatmul.bf16.gmra.mxu0 %v598
      %v664 = vpop.f32.mrf.mxu0
      %v665 = vadd.f32 %v487, %v664
      %v666 = vpop.f32.mrf.mxu0
      %v667 = vadd.f32 %v487, %v666
      %668 = vmatmul.bf16.gmra.mxu0 %v601
      %v669 = vpop.f32.mrf.mxu0
      %v670 = vadd.f32 %v487, %v669
      %v671 = vpop.f32.mrf.mxu0
      %v672 = vadd.f32 %v487, %v671
      %673 = vmatmul.bf16.gmra.mxu0 %v604
      %v674 = vpop.f32.mrf.mxu0
      %v675 = vadd.f32 %v487, %v674
      %v676 = vpop.f32.mrf.mxu0
      %v677 = vadd.f32 %v487, %v676
      %678 = vmatmul.bf16.gmra.mxu0 %v607
      %v679 = vpop.f32.mrf.mxu0
      %v680 = vadd.f32 %v487, %v679
      %v681 = vpop.f32.mrf.mxu0
      %v682 = vadd.f32 %v487, %v681
      %683 = vmatmul.bf16.gmra.mxu0 %v610
      %v684 = vpop.f32.mrf.mxu0
      %v685 = vadd.f32 %v487, %v684
      %v686 = vpop.f32.mrf.mxu0
      %v687 = vadd.f32 %v487, %v686
      %688 = vmatmul.bf16.gmra.mxu0 %v613
      %v689 = vpop.f32.mrf.mxu0
      %v690 = vadd.f32 %v487, %v689
      %v691 = vpop.f32.mrf.mxu0
      %v692 = vadd.f32 %v487, %v691
      %693 = vmatmul.bf16.gmra.mxu0 %v616
      %v694 = vpop.f32.mrf.mxu0
      %v695 = vadd.f32 %v487, %v694
      %v696 = vpop.f32.mrf.mxu0
      %v697 = vadd.f32 %v487, %v696
      %698 = vmatmul.bf16.gmra.mxu0 %v619
      %v699 = vpop.f32.mrf.mxu0
      %v700 = vadd.f32 %v487, %v699
      %v701 = vpop.f32.mrf.mxu0
      %v702 = vadd.f32 %v487, %v701
      %703 = vmatmul.bf16.gmra.mxu0 %v622
      %v704 = vpop.f32.mrf.mxu0
      %v705 = vadd.f32 %v487, %v704
      %v706 = vpop.f32.mrf.mxu0
      %v707 = vadd.f32 %v487, %v706
      %708 = vmatmul.bf16.gmra.mxu0 %v625
      %v709 = vpop.f32.mrf.mxu0
      %v710 = vadd.f32 %v487, %v709
      %v711 = vpop.f32.mrf.mxu0
      %v712 = vadd.f32 %v487, %v711
      %713 = vmatmul.bf16.gmra.mxu0 %v628
      %v714 = vpop.f32.mrf.mxu0
      %v715 = vadd.f32 %v487, %v714
      %v716 = vpop.f32.mrf.mxu0
      %v717 = vadd.f32 %v487, %v716
      %718 = vdwg.mxu0
      %v719 = vmax.f32 %v640, 0.0
      %v720 = vmax.f32 %v642, 0.0
      %v721 = vmax.f32 %v645, 0.0
      %v722 = vmax.f32 %v647, 0.0
      %v723 = vmax.f32 %v650, 0.0
      %v724 = vmax.f32 %v652, 0.0
      %v725 = vmax.f32 %v655, 0.0
      %v726 = vmax.f32 %v657, 0.0
      %v727 = vmax.f32 %v660, 0.0
      %v728 = vmax.f32 %v662, 0.0
      %v729 = vmax.f32 %v665, 0.0
      %v730 = vmax.f32 %v667, 0.0
      %v731 = vmax.f32 %v670, 0.0
      %v732 = vmax.f32 %v672, 0.0
      %v733 = vmax.f32 %v675, 0.0
      %v734 = vmax.f32 %v677, 0.0
      %v735 = vmax.f32 %v680, 0.0
      %v736 = vmax.f32 %v682, 0.0
      %v737 = vmax.f32 %v685, 0.0
      %v738 = vmax.f32 %v687, 0.0
      %v739 = vmax.f32 %v690, 0.0
      %v740 = vmax.f32 %v692, 0.0
      %v741 = vmax.f32 %v695, 0.0
      %v742 = vmax.f32 %v697, 0.0
      %v743 = vmax.f32 %v700, 0.0
      %v744 = vmax.f32 %v702, 0.0
      %v745 = vmax.f32 %v705, 0.0
      %v746 = vmax.f32 %v707, 0.0
      %v747 = vmax.f32 %v710, 0.0
      %v748 = vmax.f32 %v712, 0.0
      %v749 = vmax.f32 %v715, 0.0
      %v750 = vmax.f32 %v717, 0.0
      %v751 = vpack.c.bf16 %v720, %v719
      %v752 = vpack.c.bf16 %v722, %v721
      %v753 = vpack.c.bf16 %v724, %v723
      %v754 = vpack.c.bf16 %v726, %v725
      %v755 = vpack.c.bf16 %v728, %v727
      %v756 = vpack.c.bf16 %v730, %v729
      %v757 = vpack.c.bf16 %v732, %v731
      %v758 = vpack.c.bf16 %v734, %v733
      %v759 = vpack.c.bf16 %v736, %v735
      %v760 = vpack.c.bf16 %v738, %v737
      %v761 = vpack.c.bf16 %v740, %v739
      %v762 = vpack.c.bf16 %v742, %v741
      %v763 = vpack.c.bf16 %v744, %v743
      %v764 = vpack.c.bf16 %v746, %v745
      %v765 = vpack.c.bf16 %v748, %v747
      %v766 = vpack.c.bf16 %v750, %v749
      %v767 = vld [vmem:[%s5] sm:$0xf]
      %v768 = vld [vmem:[%s5 + $0x4] sm:$0xf]
      %v769 = vld [vmem:[%s5 + $0x8] sm:$0xf]
      %v770 = vld [vmem:[%s5 + $0xc] sm:$0xf]
      %v771 = vld [vmem:[%s6] sm:$0x1]
      %v773 = vperm.slane %v771, 0
      %v779 = vunpack.c.l.b16 %v767
      %v780 = vunpack.c.l.b16 %v768
      %v781 = vunpack.c.l.b16 %v769
      %v782 = vunpack.c.l.b16 %v770
      %v783 = vpack.c.b16 %v780, %v779
      %v784 = vpack.c.b16 %v782, %v781
      %v788 = vsel %vm581, %v751, 0
      %v791 = vsel %vm581, %v752, 0
      %v794 = vsel %vm581, %v753, 0
      %v797 = vsel %vm581, %v754, 0
      %v800 = vsel %vm581, %v755, 0
      %v803 = vsel %vm581, %v756, 0
      %v806 = vsel %vm581, %v757, 0
      %v809 = vsel %vm581, %v758, 0
      %v812 = vsel %vm581, %v759, 0
      %v815 = vsel %vm581, %v760, 0
      %v818 = vsel %vm581, %v761, 0
      %v821 = vsel %vm581, %v762, 0
      %v824 = vsel %vm581, %v763, 0
      %v827 = vsel %vm581, %v764, 0
      %v830 = vsel %vm581, %v765, 0
      %v833 = vsel %vm581, %v766, 0
      %835 = vmatpush.bf16.msra.mxu0 0
      %836 = vmatpush.bf16.msra.mxu0 0
      %837 = vmatpush.bf16.msra.mxu0 0
      %838 = vmatpush.bf16.msra.mxu0 0
      %839 = vmatpush.bf16.msra.mxu0 0
      %840 = vmatpush.bf16.msra.mxu0 0
      %841 = vmatpush.bf16.msra.mxu0 %v784
      %842 = vmatpush.bf16.msra.mxu0 %v783
      %843 = vmatmul.bf16.gmra.mxu0 %v788
      %v844 = vpop.f32.mrf.mxu0
      %v845 = vadd.f32 %v773, %v844
      %v846 = vpop.f32.mrf.mxu0
      %v847 = vadd.f32 %v773, %v846
      %848 = vmatmul.bf16.gmra.mxu0 %v791
      %v849 = vpop.f32.mrf.mxu0
      %v850 = vadd.f32 %v773, %v849
      %v851 = vpop.f32.mrf.mxu0
      %v852 = vadd.f32 %v773, %v851
      %853 = vmatmul.bf16.gmra.mxu0 %v794
      %v854 = vpop.f32.mrf.mxu0
      %v855 = vadd.f32 %v773, %v854
      %v856 = vpop.f32.mrf.mxu0
      %v857 = vadd.f32 %v773, %v856
      %858 = vmatmul.bf16.gmra.mxu0 %v797
      %v859 = vpop.f32.mrf.mxu0
      %v860 = vadd.f32 %v773, %v859
      %v861 = vpop.f32.mrf.mxu0
      %v862 = vadd.f32 %v773, %v861
      %863 = vmatmul.bf16.gmra.mxu0 %v800
      %v864 = vpop.f32.mrf.mxu0
      %v865 = vadd.f32 %v773, %v864
      %v866 = vpop.f32.mrf.mxu0
      %v867 = vadd.f32 %v773, %v866
      %868 = vmatmul.bf16.gmra.mxu0 %v803
      %v869 = vpop.f32.mrf.mxu0
      %v870 = vadd.f32 %v773, %v869
      %v871 = vpop.f32.mrf.mxu0
      %v872 = vadd.f32 %v773, %v871
      %873 = vmatmul.bf16.gmra.mxu0 %v806
      %v874 = vpop.f32.mrf.mxu0
      %v875 = vadd.f32 %v773, %v874
      %v876 = vpop.f32.mrf.mxu0
      %v877 = vadd.f32 %v773, %v876
      %878 = vmatmul.bf16.gmra.mxu0 %v809
      %v879 = vpop.f32.mrf.mxu0
      %v880 = vadd.f32 %v773, %v879
      %v881 = vpop.f32.mrf.mxu0
      %v882 = vadd.f32 %v773, %v881
      %883 = vmatmul.bf16.gmra.mxu0 %v812
      %v884 = vpop.f32.mrf.mxu0
      %v885 = vadd.f32 %v773, %v884
      %v886 = vpop.f32.mrf.mxu0
      %v887 = vadd.f32 %v773, %v886
      %888 = vmatmul.bf16.gmra.mxu0 %v815
      %v889 = vpop.f32.mrf.mxu0
      %v890 = vadd.f32 %v773, %v889
      %v891 = vpop.f32.mrf.mxu0
      %v892 = vadd.f32 %v773, %v891
      %893 = vmatmul.bf16.gmra.mxu0 %v818
      %v894 = vpop.f32.mrf.mxu0
      %v895 = vadd.f32 %v773, %v894
      %v896 = vpop.f32.mrf.mxu0
      %v897 = vadd.f32 %v773, %v896
      %898 = vmatmul.bf16.gmra.mxu0 %v821
      %v899 = vpop.f32.mrf.mxu0
      %v900 = vadd.f32 %v773, %v899
      %v901 = vpop.f32.mrf.mxu0
      %v902 = vadd.f32 %v773, %v901
      %903 = vmatmul.bf16.gmra.mxu0 %v824
      %v904 = vpop.f32.mrf.mxu0
      %v905 = vadd.f32 %v773, %v904
      %v906 = vpop.f32.mrf.mxu0
      %v907 = vadd.f32 %v773, %v906
      %908 = vmatmul.bf16.gmra.mxu0 %v827
      %v909 = vpop.f32.mrf.mxu0
      %v910 = vadd.f32 %v773, %v909
      %v911 = vpop.f32.mrf.mxu0
      %v912 = vadd.f32 %v773, %v911
      %913 = vmatmul.bf16.gmra.mxu0 %v830
      %v914 = vpop.f32.mrf.mxu0
      %v915 = vadd.f32 %v773, %v914
      %v916 = vpop.f32.mrf.mxu0
      %v917 = vadd.f32 %v773, %v916
      %918 = vmatmul.bf16.gmra.mxu0 %v833
      %v919 = vpop.f32.mrf.mxu0
      %v920 = vadd.f32 %v773, %v919
      %v921 = vpop.f32.mrf.mxu0
      %v922 = vadd.f32 %v773, %v921
      %923 = vdwg.mxu0
      %v924 = vmax.f32 %v845, 0.0
      %v925 = vmax.f32 %v847, 0.0
      %v926 = vmax.f32 %v850, 0.0
      %v927 = vmax.f32 %v852, 0.0
      %v928 = vmax.f32 %v855, 0.0
      %v929 = vmax.f32 %v857, 0.0
      %v930 = vmax.f32 %v860, 0.0
      %v931 = vmax.f32 %v862, 0.0
      %v932 = vmax.f32 %v865, 0.0
      %v933 = vmax.f32 %v867, 0.0
      %v934 = vmax.f32 %v870, 0.0
      %v935 = vmax.f32 %v872, 0.0
      %v936 = vmax.f32 %v875, 0.0
      %v937 = vmax.f32 %v877, 0.0
      %v938 = vmax.f32 %v880, 0.0
      %v939 = vmax.f32 %v882, 0.0
      %v940 = vmax.f32 %v885, 0.0
      %v941 = vmax.f32 %v887, 0.0
      %v942 = vmax.f32 %v890, 0.0
      %v943 = vmax.f32 %v892, 0.0
      %v944 = vmax.f32 %v895, 0.0
      %v945 = vmax.f32 %v897, 0.0
      %v946 = vmax.f32 %v900, 0.0
      %v947 = vmax.f32 %v902, 0.0
      %v948 = vmax.f32 %v905, 0.0
      %v949 = vmax.f32 %v907, 0.0
      %v950 = vmax.f32 %v910, 0.0
      %v951 = vmax.f32 %v912, 0.0
      %v952 = vmax.f32 %v915, 0.0
      %v953 = vmax.f32 %v917, 0.0
      %v954 = vmax.f32 %v920, 0.0
      %v955 = vmax.f32 %v922, 0.0
      %v956 = vunpack.c.l.bf16 %v449
      %v957 = vunpack.c.l.bf16 %v450
      %v958 = vunpack.c.l.bf16 %v451
      %v959 = vunpack.c.l.bf16 %v452
      %v960 = vunpack.c.l.bf16 %v453
      %v961 = vunpack.c.l.bf16 %v454
      %v962 = vunpack.c.l.bf16 %v455
      %v963 = vunpack.c.l.bf16 %v456
      %v964 = vunpack.c.l.bf16 %v457
      %v965 = vunpack.c.l.bf16 %v458
      %v966 = vunpack.c.l.bf16 %v459
      %v967 = vunpack.c.l.bf16 %v460
      %v968 = vunpack.c.l.bf16 %v461
      %v969 = vunpack.c.l.bf16 %v462
      %v970 = vunpack.c.l.bf16 %v463
      %v971 = vunpack.c.l.bf16 %v464
      %v972 = vunpack.c.l.bf16 %v465
      %v973 = vunpack.c.l.bf16 %v466
      %v974 = vunpack.c.l.bf16 %v467
      %v975 = vunpack.c.l.bf16 %v468
      %v976 = vunpack.c.l.bf16 %v469
      %v977 = vunpack.c.l.bf16 %v470
      %v978 = vunpack.c.l.bf16 %v471
      %v979 = vunpack.c.l.bf16 %v472
      %v980 = vunpack.c.l.bf16 %v473
      %v981 = vunpack.c.l.bf16 %v474
      %v982 = vunpack.c.l.bf16 %v475
      %v983 = vunpack.c.l.bf16 %v476
      %v984 = vunpack.c.l.bf16 %v477
      %v985 = vunpack.c.l.bf16 %v478
      %v986 = vunpack.c.l.bf16 %v479
      %v987 = vunpack.c.l.bf16 %v480
      %1020 = vrot.lane.b32.xlu0 %v924, 32
      %v1021 = vpop.permute.xlu0 %1020
      %1022 = vrot.lane.b32.xlu0 %v925, 32
      %v1023 = vpop.permute.xlu0 %1022
      %1024 = vrot.lane.b32.xlu0 %v926, 32
      %v1025 = vpop.permute.xlu0 %1024
      %1026 = vrot.lane.b32.xlu0 %v927, 32
      %v1027 = vpop.permute.xlu0 %1026
      %1028 = vrot.lane.b32.xlu0 %v928, 32
      %v1029 = vpop.permute.xlu0 %1028
      %1030 = vrot.lane.b32.xlu0 %v929, 32
      %v1031 = vpop.permute.xlu0 %1030
      %1032 = vrot.lane.b32.xlu0 %v930, 32
      %v1033 = vpop.permute.xlu0 %1032
      %1034 = vrot.lane.b32.xlu0 %v931, 32
      %v1035 = vpop.permute.xlu0 %1034
      %1036 = vrot.lane.b32.xlu0 %v932, 32
      %v1037 = vpop.permute.xlu0 %1036
      %1038 = vrot.lane.b32.xlu0 %v933, 32
      %v1039 = vpop.permute.xlu0 %1038
      %1040 = vrot.lane.b32.xlu0 %v934, 32
      %v1041 = vpop.permute.xlu0 %1040
      %1042 = vrot.lane.b32.xlu0 %v935, 32
      %v1043 = vpop.permute.xlu0 %1042
      %1044 = vrot.lane.b32.xlu0 %v936, 32
      %v1045 = vpop.permute.xlu0 %1044
      %1046 = vrot.lane.b32.xlu0 %v937, 32
      %v1047 = vpop.permute.xlu0 %1046
      %1048 = vrot.lane.b32.xlu0 %v938, 32
      %v1049 = vpop.permute.xlu0 %1048
      %1050 = vrot.lane.b32.xlu0 %v939, 32
      %v1051 = vpop.permute.xlu0 %1050
      %1052 = vrot.lane.b32.xlu0 %v940, 32
      %v1053 = vpop.permute.xlu0 %1052
      %1054 = vrot.lane.b32.xlu0 %v941, 32
      %v1055 = vpop.permute.xlu0 %1054
      %1056 = vrot.lane.b32.xlu0 %v942, 32
      %v1057 = vpop.permute.xlu0 %1056
      %1058 = vrot.lane.b32.xlu0 %v943, 32
      %v1059 = vpop.permute.xlu0 %1058
      %1060 = vrot.lane.b32.xlu0 %v944, 32
      %v1061 = vpop.permute.xlu0 %1060
      %1062 = vrot.lane.b32.xlu0 %v945, 32
      %v1063 = vpop.permute.xlu0 %1062
      %1064 = vrot.lane.b32.xlu0 %v946, 32
      %v1065 = vpop.permute.xlu0 %1064
      %1066 = vrot.lane.b32.xlu0 %v947, 32
      %v1067 = vpop.permute.xlu0 %1066
      %1068 = vrot.lane.b32.xlu0 %v948, 32
      %v1069 = vpop.permute.xlu0 %1068
      %1070 = vrot.lane.b32.xlu0 %v949, 32
      %v1071 = vpop.permute.xlu0 %1070
      %1072 = vrot.lane.b32.xlu0 %v950, 32
      %v1073 = vpop.permute.xlu0 %1072
      %1074 = vrot.lane.b32.xlu0 %v951, 32
      %v1075 = vpop.permute.xlu0 %1074
      %1076 = vrot.lane.b32.xlu0 %v952, 32
      %v1077 = vpop.permute.xlu0 %1076
      %1078 = vrot.lane.b32.xlu0 %v953, 32
      %v1079 = vpop.permute.xlu0 %1078
      %1080 = vrot.lane.b32.xlu0 %v954, 32
      %v1081 = vpop.permute.xlu0 %1080
      %1082 = vrot.lane.b32.xlu0 %v955, 32
      %v1083 = vpop.permute.xlu0 %1082
      %v1116 = vsel %vm581, %v956, %v1021
      %v1117 = vsel %vm581, %v957, %v1023
      %v1118 = vsel %vm581, %v958, %v1025
      %v1119 = vsel %vm581, %v959, %v1027
      %v1120 = vsel %vm581, %v960, %v1029
      %v1121 = vsel %vm581, %v961, %v1031
      %v1122 = vsel %vm581, %v962, %v1033
      %v1123 = vsel %vm581, %v963, %v1035
      %v1124 = vsel %vm581, %v964, %v1037
      %v1125 = vsel %vm581, %v965, %v1039
      %v1126 = vsel %vm581, %v966, %v1041
      %v1127 = vsel %vm581, %v967, %v1043
      %v1128 = vsel %vm581, %v968, %v1045
      %v1129 = vsel %vm581, %v969, %v1047
      %v1130 = vsel %vm581, %v970, %v1049
      %v1131 = vsel %vm581, %v971, %v1051
      %v1132 = vsel %vm581, %v972, %v1053
      %v1133 = vsel %vm581, %v973, %v1055
      %v1134 = vsel %vm581, %v974, %v1057
      %v1135 = vsel %vm581, %v975, %v1059
      %v1136 = vsel %vm581, %v976, %v1061
      %v1137 = vsel %vm581, %v977, %v1063
      %v1138 = vsel %vm581, %v978, %v1065
      %v1139 = vsel %vm581, %v979, %v1067
      %v1140 = vsel %vm581, %v980, %v1069
      %v1141 = vsel %vm581, %v981, %v1071
      %v1142 = vsel %vm581, %v982, %v1073
      %v1143 = vsel %vm581, %v983, %v1075
      %v1144 = vsel %vm581, %v984, %v1077
      %v1145 = vsel %vm581, %v985, %v1079
      %v1146 = vsel %vm581, %v986, %v1081
      %v1147 = vsel %vm581, %v987, %v1083
      %v1148 = vpack.c.bf16 %v1117, %v1116
      %v1149 = vpack.c.bf16 %v1119, %v1118
      %v1150 = vpack.c.bf16 %v1121, %v1120
      %v1151 = vpack.c.bf16 %v1123, %v1122
      %v1152 = vpack.c.bf16 %v1125, %v1124
      %v1153 = vpack.c.bf16 %v1127, %v1126
      %v1154 = vpack.c.bf16 %v1129, %v1128
      %v1155 = vpack.c.bf16 %v1131, %v1130
      %v1156 = vpack.c.bf16 %v1133, %v1132
      %v1157 = vpack.c.bf16 %v1135, %v1134
      %v1158 = vpack.c.bf16 %v1137, %v1136
      %v1159 = vpack.c.bf16 %v1139, %v1138
      %v1160 = vpack.c.bf16 %v1141, %v1140
      %v1161 = vpack.c.bf16 %v1143, %v1142
      %v1162 = vpack.c.bf16 %v1145, %v1144
      %v1163 = vpack.c.bf16 %v1147, %v1146
      %v1164 = vld [vmem:[%s7] sm:$0xf]
      %v1165 = vld [vmem:[%s7 + $0x4] sm:$0xf]
      %v1166 = vld [vmem:[%s7 + $0x8] sm:$0xf]
      %v1167 = vld [vmem:[%s7 + $0xc] sm:$0xf]
      %v1168 = vld [vmem:[%s7 + $0x10] sm:$0xf]
      %v1169 = vld [vmem:[%s7 + $0x14] sm:$0xf]
      %v1170 = vld [vmem:[%s7 + $0x18] sm:$0xf]
      %v1171 = vld [vmem:[%s7 + $0x1c] sm:$0xf]
      %v1172 = vld [vmem:[%s434] sm:$0xff]
      %v1173 = vld [vmem:[%s434 + $0x8] sm:$0xff]
      %v1174 = vld [vmem:[%s434 + $0x10] sm:$0xff]
      %v1175 = vld [vmem:[%s434 + $0x18] sm:$0xff]
      %v1176 = vld [vmem:[%s434 + $0x20] sm:$0xff]
      %v1177 = vld [vmem:[%s434 + $0x28] sm:$0xff]
      %v1178 = vld [vmem:[%s434 + $0x30] sm:$0xff]
      %v1179 = vld [vmem:[%s434 + $0x38] sm:$0xff]
      %v1180 = vld [vmem:[%s434 + $0x40] sm:$0xff]
      %v1181 = vld [vmem:[%s434 + $0x48] sm:$0xff]
      %v1182 = vld [vmem:[%s434 + $0x50] sm:$0xff]
      %v1183 = vld [vmem:[%s434 + $0x58] sm:$0xff]
      %v1184 = vld [vmem:[%s434 + $0x60] sm:$0xff]
      %v1185 = vld [vmem:[%s434 + $0x68] sm:$0xff]
      %v1186 = vld [vmem:[%s434 + $0x70] sm:$0xff]
      %v1187 = vld [vmem:[%s434 + $0x78] sm:$0xff]
      %v1188 = vld [vmem:[%s434 + $0x80] sm:$0xff]
      %v1189 = vld [vmem:[%s434 + $0x88] sm:$0xff]
      %v1190 = vld [vmem:[%s434 + $0x90] sm:$0xff]
      %v1191 = vld [vmem:[%s434 + $0x98] sm:$0xff]
      %v1192 = vld [vmem:[%s434 + $0xa0] sm:$0xff]
      %v1193 = vld [vmem:[%s434 + $0xa8] sm:$0xff]
      %v1194 = vld [vmem:[%s434 + $0xb0] sm:$0xff]
      %v1195 = vld [vmem:[%s434 + $0xb8] sm:$0xff]
      %v1196 = vld [vmem:[%s434 + $0xc0] sm:$0xff]
      %v1197 = vld [vmem:[%s434 + $0xc8] sm:$0xff]
      %v1198 = vld [vmem:[%s434 + $0xd0] sm:$0xff]
      %v1199 = vld [vmem:[%s434 + $0xd8] sm:$0xff]
      %v1200 = vld [vmem:[%s434 + $0xe0] sm:$0xff]
      %v1201 = vld [vmem:[%s434 + $0xe8] sm:$0xff]
      %v1202 = vld [vmem:[%s434 + $0xf0] sm:$0xff]
      %v1203 = vld [vmem:[%s434 + $0xf8] sm:$0xff]
      %v1212 = vunpack.c.l.b16 %v1164
      %v1213 = vunpack.c.l.b16 %v1165
      %v1214 = vunpack.c.l.b16 %v1166
      %v1215 = vunpack.c.l.b16 %v1167
      %v1216 = vunpack.c.l.b16 %v1168
      %v1217 = vunpack.c.l.b16 %v1169
      %v1218 = vunpack.c.l.b16 %v1170
      %v1219 = vunpack.c.l.b16 %v1171
      %v1220 = vpack.c.b16 %v1213, %v1212
      %v1221 = vpack.c.b16 %v1215, %v1214
      %v1222 = vpack.c.b16 %v1217, %v1216
      %v1223 = vpack.c.b16 %v1219, %v1218
      %vm1228 = vcmask 523264
      %v1230 = vsel %vm1228, %v1148, 0
      %v1233 = vsel %vm1228, %v1149, 0
      %v1236 = vsel %vm1228, %v1150, 0
      %v1239 = vsel %vm1228, %v1151, 0
      %v1242 = vsel %vm1228, %v1152, 0
      %v1245 = vsel %vm1228, %v1153, 0
      %v1248 = vsel %vm1228, %v1154, 0
      %v1251 = vsel %vm1228, %v1155, 0
      %v1254 = vsel %vm1228, %v1156, 0
      %v1257 = vsel %vm1228, %v1157, 0
      %v1260 = vsel %vm1228, %v1158, 0
      %v1263 = vsel %vm1228, %v1159, 0
      %v1266 = vsel %vm1228, %v1160, 0
      %v1269 = vsel %vm1228, %v1161, 0
      %v1272 = vsel %vm1228, %v1162, 0
      %v1275 = vsel %vm1228, %v1163, 0
      %1277 = vmatpush.bf16.msra.mxu0 0
      %1278 = vmatpush.bf16.msra.mxu0 0
      %1279 = vmatpush.bf16.msra.mxu0 0
      %1280 = vmatpush.bf16.msra.mxu0 0
      %1281 = vmatpush.bf16.msra.mxu0 %v1223
      %1282 = vmatpush.bf16.msra.mxu0 %v1222
      %1283 = vmatpush.bf16.msra.mxu0 %v1221
      %1284 = vmatpush.bf16.msra.mxu0 %v1220
      %1285 = vmatmul.bf16.gmra.mxu0 %v1230
      %v1286 = vpop.f32.mrf.mxu0
      %v1287 = vadd.f32 %v1172, %v1286
      %v1288 = vpop.f32.mrf.mxu0
      %v1289 = vadd.f32 %v1173, %v1288
      %1290 = vmatmul.bf16.gmra.mxu0 %v1233
      %v1291 = vpop.f32.mrf.mxu0
      %v1292 = vadd.f32 %v1174, %v1291
      %v1293 = vpop.f32.mrf.mxu0
      %v1294 = vadd.f32 %v1175, %v1293
      %1295 = vmatmul.bf16.gmra.mxu0 %v1236
      %v1296 = vpop.f32.mrf.mxu0
      %v1297 = vadd.f32 %v1176, %v1296
      %v1298 = vpop.f32.mrf.mxu0
      %v1299 = vadd.f32 %v1177, %v1298
      %1300 = vmatmul.bf16.gmra.mxu0 %v1239
      %v1301 = vpop.f32.mrf.mxu0
      %v1302 = vadd.f32 %v1178, %v1301
      %v1303 = vpop.f32.mrf.mxu0
      %v1304 = vadd.f32 %v1179, %v1303
      %1305 = vmatmul.bf16.gmra.mxu0 %v1242
      %v1306 = vpop.f32.mrf.mxu0
      %v1307 = vadd.f32 %v1180, %v1306
      %v1308 = vpop.f32.mrf.mxu0
      %v1309 = vadd.f32 %v1181, %v1308
      %1310 = vmatmul.bf16.gmra.mxu0 %v1245
      %v1311 = vpop.f32.mrf.mxu0
      %v1312 = vadd.f32 %v1182, %v1311
      %v1313 = vpop.f32.mrf.mxu0
      %v1314 = vadd.f32 %v1183, %v1313
      %1315 = vmatmul.bf16.gmra.mxu0 %v1248
      %v1316 = vpop.f32.mrf.mxu0
      %v1317 = vadd.f32 %v1184, %v1316
      %v1318 = vpop.f32.mrf.mxu0
      %v1319 = vadd.f32 %v1185, %v1318
      %1320 = vmatmul.bf16.gmra.mxu0 %v1251
      %v1321 = vpop.f32.mrf.mxu0
      %v1322 = vadd.f32 %v1186, %v1321
      %v1323 = vpop.f32.mrf.mxu0
      %v1324 = vadd.f32 %v1187, %v1323
      %1325 = vmatmul.bf16.gmra.mxu0 %v1254
      %v1326 = vpop.f32.mrf.mxu0
      %v1327 = vadd.f32 %v1188, %v1326
      %v1328 = vpop.f32.mrf.mxu0
      %v1329 = vadd.f32 %v1189, %v1328
      %1330 = vmatmul.bf16.gmra.mxu0 %v1257
      %v1331 = vpop.f32.mrf.mxu0
      %v1332 = vadd.f32 %v1190, %v1331
      %v1333 = vpop.f32.mrf.mxu0
      %v1334 = vadd.f32 %v1191, %v1333
      %1335 = vmatmul.bf16.gmra.mxu0 %v1260
      %v1336 = vpop.f32.mrf.mxu0
      %v1337 = vadd.f32 %v1192, %v1336
      %v1338 = vpop.f32.mrf.mxu0
      %v1339 = vadd.f32 %v1193, %v1338
      %1340 = vmatmul.bf16.gmra.mxu0 %v1263
      %v1341 = vpop.f32.mrf.mxu0
      %v1342 = vadd.f32 %v1194, %v1341
      %v1343 = vpop.f32.mrf.mxu0
      %v1344 = vadd.f32 %v1195, %v1343
      %1345 = vmatmul.bf16.gmra.mxu0 %v1266
      %v1346 = vpop.f32.mrf.mxu0
      %v1347 = vadd.f32 %v1196, %v1346
      %v1348 = vpop.f32.mrf.mxu0
      %v1349 = vadd.f32 %v1197, %v1348
      %1350 = vmatmul.bf16.gmra.mxu0 %v1269
      %v1351 = vpop.f32.mrf.mxu0
      %v1352 = vadd.f32 %v1198, %v1351
      %v1353 = vpop.f32.mrf.mxu0
      %v1354 = vadd.f32 %v1199, %v1353
      %1355 = vmatmul.bf16.gmra.mxu0 %v1272
      %v1356 = vpop.f32.mrf.mxu0
      %v1357 = vadd.f32 %v1200, %v1356
      %v1358 = vpop.f32.mrf.mxu0
      %v1359 = vadd.f32 %v1201, %v1358
      %1360 = vmatmul.bf16.gmra.mxu0 %v1275
      %v1361 = vpop.f32.mrf.mxu0
      %v1362 = vadd.f32 %v1202, %v1361
      %v1363 = vpop.f32.mrf.mxu0
      %v1364 = vadd.f32 %v1203, %v1363
      %1365 = vdwg.mxu0
      %v1366 = vlaneseq
      %v1367 = vand.u32 %v1366, 127
      %vm1368 = vcmp.ge.s32.totalorder %v1367, 1
      %vm1369 = vcmp.lt.s32.totalorder %v1367, 3
      %vm1370 = vmand %vm1368, %vm1369
      %v1371 = vxor.u32 %v1287, 2147483648
      %v1372 = vxor.u32 %v1289, 2147483648
      %v1373 = vxor.u32 %v1292, 2147483648
      %v1374 = vxor.u32 %v1294, 2147483648
      %v1375 = vxor.u32 %v1297, 2147483648
      %v1376 = vxor.u32 %v1299, 2147483648
      %v1377 = vxor.u32 %v1302, 2147483648
      %v1378 = vxor.u32 %v1304, 2147483648
      %v1379 = vxor.u32 %v1307, 2147483648
      %v1380 = vxor.u32 %v1309, 2147483648
      %v1381 = vxor.u32 %v1312, 2147483648
      %v1382 = vxor.u32 %v1314, 2147483648
      %v1383 = vxor.u32 %v1317, 2147483648
      %v1384 = vxor.u32 %v1319, 2147483648
      %v1385 = vxor.u32 %v1322, 2147483648
      %v1386 = vxor.u32 %v1324, 2147483648
      %v1387 = vxor.u32 %v1327, 2147483648
      %v1388 = vxor.u32 %v1329, 2147483648
      %v1389 = vxor.u32 %v1332, 2147483648
      %v1390 = vxor.u32 %v1334, 2147483648
      %v1391 = vxor.u32 %v1337, 2147483648
      %v1392 = vxor.u32 %v1339, 2147483648
      %v1393 = vxor.u32 %v1342, 2147483648
      %v1394 = vxor.u32 %v1344, 2147483648
      %v1395 = vxor.u32 %v1347, 2147483648
      %v1396 = vxor.u32 %v1349, 2147483648
      %v1397 = vxor.u32 %v1352, 2147483648
      %v1398 = vxor.u32 %v1354, 2147483648
      %v1399 = vxor.u32 %v1357, 2147483648
      %v1400 = vxor.u32 %v1359, 2147483648
      %v1401 = vxor.u32 %v1362, 2147483648
      %v1402 = vxor.u32 %v1364, 2147483648
      %v1403 = vmul.f32 %v1371, 1.442695
      %v1404 = vpow.pop %v1403
      %v1405 = vmul.f32 %v1372, 1.442695
      %v1406 = vpow.pop %v1405
      %v1407 = vmul.f32 %v1373, 1.442695
      %v1408 = vpow.pop %v1407
      %v1409 = vmul.f32 %v1374, 1.442695
      %v1410 = vpow.pop %v1409
      %v1411 = vmul.f32 %v1375, 1.442695
      %v1412 = vpow.pop %v1411
      %v1413 = vmul.f32 %v1376, 1.442695
      %v1414 = vpow.pop %v1413
      %v1415 = vmul.f32 %v1377, 1.442695
      %v1416 = vpow.pop %v1415
      %v1417 = vmul.f32 %v1378, 1.442695
      %v1418 = vpow.pop %v1417
      %v1419 = vmul.f32 %v1379, 1.442695
      %v1420 = vpow.pop %v1419
      %v1421 = vmul.f32 %v1380, 1.442695
      %v1422 = vpow.pop %v1421
      %v1423 = vmul.f32 %v1381, 1.442695
      %v1424 = vpow.pop %v1423
      %v1425 = vmul.f32 %v1382, 1.442695
      %v1426 = vpow.pop %v1425
      %v1427 = vmul.f32 %v1383, 1.442695
      %v1428 = vpow.pop %v1427
      %v1429 = vmul.f32 %v1384, 1.442695
      %v1430 = vpow.pop %v1429
      %v1431 = vmul.f32 %v1385, 1.442695
      %v1432 = vpow.pop %v1431
      %v1433 = vmul.f32 %v1386, 1.442695
      %v1434 = vpow.pop %v1433
      %v1435 = vmul.f32 %v1387, 1.442695
      %v1436 = vpow.pop %v1435
      %v1437 = vmul.f32 %v1388, 1.442695
      %v1438 = vpow.pop %v1437
      %v1439 = vmul.f32 %v1389, 1.442695
      %v1440 = vpow.pop %v1439
      %v1441 = vmul.f32 %v1390, 1.442695
      %v1442 = vpow.pop %v1441
      %v1443 = vmul.f32 %v1391, 1.442695
      %v1444 = vpow.pop %v1443
      %v1445 = vmul.f32 %v1392, 1.442695
      %v1446 = vpow.pop %v1445
      %v1447 = vmul.f32 %v1393, 1.442695
      %v1448 = vpow.pop %v1447
      %v1449 = vmul.f32 %v1394, 1.442695
      %v1450 = vpow.pop %v1449
      %v1451 = vmul.f32 %v1395, 1.442695
      %v1452 = vpow.pop %v1451
      %v1453 = vmul.f32 %v1396, 1.442695
      %v1454 = vpow.pop %v1453
      %v1455 = vmul.f32 %v1397, 1.442695
      %v1456 = vpow.pop %v1455
      %v1457 = vmul.f32 %v1398, 1.442695
      %v1458 = vpow.pop %v1457
      %v1459 = vmul.f32 %v1399, 1.442695
      %v1460 = vpow.pop %v1459
      %v1461 = vmul.f32 %v1400, 1.442695
      %v1462 = vpow.pop %v1461
      %v1463 = vmul.f32 %v1401, 1.442695
      %v1464 = vpow.pop %v1463
      %v1465 = vmul.f32 %v1402, 1.442695
      %v1466 = vpow.pop %v1465
      %v1467 = vadd.f32 %v1404, 1.0
      %v1468 = vadd.f32 %v1406, 1.0
      %v1469 = vadd.f32 %v1408, 1.0
      %v1470 = vadd.f32 %v1410, 1.0
      %v1471 = vadd.f32 %v1412, 1.0
      %v1472 = vadd.f32 %v1414, 1.0
      %v1473 = vadd.f32 %v1416, 1.0
      %v1474 = vadd.f32 %v1418, 1.0
      %v1475 = vadd.f32 %v1420, 1.0
      %v1476 = vadd.f32 %v1422, 1.0
      %v1477 = vadd.f32 %v1424, 1.0
      %v1478 = vadd.f32 %v1426, 1.0
      %v1479 = vadd.f32 %v1428, 1.0
      %v1480 = vadd.f32 %v1430, 1.0
      %v1481 = vadd.f32 %v1432, 1.0
      %v1482 = vadd.f32 %v1434, 1.0
      %v1483 = vadd.f32 %v1436, 1.0
      %v1484 = vadd.f32 %v1438, 1.0
      %v1485 = vadd.f32 %v1440, 1.0
      %v1486 = vadd.f32 %v1442, 1.0
      %v1487 = vadd.f32 %v1444, 1.0
      %v1488 = vadd.f32 %v1446, 1.0
      %v1489 = vadd.f32 %v1448, 1.0
      %v1490 = vadd.f32 %v1450, 1.0
      %v1491 = vadd.f32 %v1452, 1.0
      %v1492 = vadd.f32 %v1454, 1.0
      %v1493 = vadd.f32 %v1456, 1.0
      %v1494 = vadd.f32 %v1458, 1.0
      %v1495 = vadd.f32 %v1460, 1.0
      %v1496 = vadd.f32 %v1462, 1.0
      %v1497 = vadd.f32 %v1464, 1.0
      %v1498 = vadd.f32 %v1466, 1.0
      %v1499 = vrcp.pop %v1467
      %v1500 = vmul.f32 %v1467, %v1499
      %v1501 = vsub.f32 1.0, %v1500
      %v1502 = vmul.f32 %v1499, %v1501
      %v1503 = vadd.f32 %v1499, %v1502
      %vm1504 = vweird.f32 %v1467
      %vm1505 = vweird.f32 %v1499
      %vm1506 = vmor %vm1504, %vm1505
      %v1507 = vsel %vm1506, %v1499, %v1503
      %v1508 = vand.u32 2147483647, %v1467
      %vm1509 = vcmp.eq.f32.partialorder %v1508, 8.507059e+37
      %v1510 = vand.u32 %v1467, 2147483648
      %v1511 = vor.u32 1.1754944e-38, %v1510
      %v1512 = vsel %vm1509, %v1511, %v1507
      %v1513 = vmul.f32 1.0, %v1512
      %v1514 = vrcp.pop %v1468
      %v1515 = vmul.f32 %v1468, %v1514
      %v1516 = vsub.f32 1.0, %v1515
      %v1517 = vmul.f32 %v1514, %v1516
      %v1518 = vadd.f32 %v1514, %v1517
      %vm1519 = vweird.f32 %v1468
      %vm1520 = vweird.f32 %v1514
      %vm1521 = vmor %vm1519, %vm1520
      %v1522 = vsel %vm1521, %v1514, %v1518
      %v1523 = vand.u32 2147483647, %v1468
      %vm1524 = vcmp.eq.f32.partialorder %v1523, 8.507059e+37
      %v1525 = vand.u32 %v1468, 2147483648
      %v1526 = vor.u32 1.1754944e-38, %v1525
      %v1527 = vsel %vm1524, %v1526, %v1522
      %v1528 = vmul.f32 1.0, %v1527
      %v1529 = vrcp.pop %v1469
      %v1530 = vmul.f32 %v1469, %v1529
      %v1531 = vsub.f32 1.0, %v1530
      %v1532 = vmul.f32 %v1529, %v1531
      %v1533 = vadd.f32 %v1529, %v1532
      %vm1534 = vweird.f32 %v1469
      %vm1535 = vweird.f32 %v1529
      %vm1536 = vmor %vm1534, %vm1535
      %v1537 = vsel %vm1536, %v1529, %v1533
      %v1538 = vand.u32 2147483647, %v1469
      %vm1539 = vcmp.eq.f32.partialorder %v1538, 8.507059e+37
      %v1540 = vand.u32 %v1469, 2147483648
      %v1541 = vor.u32 1.1754944e-38, %v1540
      %v1542 = vsel %vm1539, %v1541, %v1537
      %v1543 = vmul.f32 1.0, %v1542
      %v1544 = vrcp.pop %v1470
      %v1545 = vmul.f32 %v1470, %v1544
      %v1546 = vsub.f32 1.0, %v1545
      %v1547 = vmul.f32 %v1544, %v1546
      %v1548 = vadd.f32 %v1544, %v1547
      %vm1549 = vweird.f32 %v1470
      %vm1550 = vweird.f32 %v1544
      %vm1551 = vmor %vm1549, %vm1550
      %v1552 = vsel %vm1551, %v1544, %v1548
      %v1553 = vand.u32 2147483647, %v1470
      %vm1554 = vcmp.eq.f32.partialorder %v1553, 8.507059e+37
      %v1555 = vand.u32 %v1470, 2147483648
      %v1556 = vor.u32 1.1754944e-38, %v1555
      %v1557 = vsel %vm1554, %v1556, %v1552
      %v1558 = vmul.f32 1.0, %v1557
      %v1559 = vrcp.pop %v1471
      %v1560 = vmul.f32 %v1471, %v1559
      %v1561 = vsub.f32 1.0, %v1560
      %v1562 = vmul.f32 %v1559, %v1561
      %v1563 = vadd.f32 %v1559, %v1562
      %vm1564 = vweird.f32 %v1471
      %vm1565 = vweird.f32 %v1559
      %vm1566 = vmor %vm1564, %vm1565
      %v1567 = vsel %vm1566, %v1559, %v1563
      %v1568 = vand.u32 2147483647, %v1471
      %vm1569 = vcmp.eq.f32.partialorder %v1568, 8.507059e+37
      %v1570 = vand.u32 %v1471, 2147483648
      %v1571 = vor.u32 1.1754944e-38, %v1570
      %v1572 = vsel %vm1569, %v1571, %v1567
      %v1573 = vmul.f32 1.0, %v1572
      %v1574 = vrcp.pop %v1472
      %v1575 = vmul.f32 %v1472, %v1574
      %v1576 = vsub.f32 1.0, %v1575
      %v1577 = vmul.f32 %v1574, %v1576
      %v1578 = vadd.f32 %v1574, %v1577
      %vm1579 = vweird.f32 %v1472
      %vm1580 = vweird.f32 %v1574
      %vm1581 = vmor %vm1579, %vm1580
      %v1582 = vsel %vm1581, %v1574, %v1578
      %v1583 = vand.u32 2147483647, %v1472
      %vm1584 = vcmp.eq.f32.partialorder %v1583, 8.507059e+37
      %v1585 = vand.u32 %v1472, 2147483648
      %v1586 = vor.u32 1.1754944e-38, %v1585
      %v1587 = vsel %vm1584, %v1586, %v1582
      %v1588 = vmul.f32 1.0, %v1587
      %v1589 = vrcp.pop %v1473
      %v1590 = vmul.f32 %v1473, %v1589
      %v1591 = vsub.f32 1.0, %v1590
      %v1592 = vmul.f32 %v1589, %v1591
      %v1593 = vadd.f32 %v1589, %v1592
      %vm1594 = vweird.f32 %v1473
      %vm1595 = vweird.f32 %v1589
      %vm1596 = vmor %vm1594, %vm1595
      %v1597 = vsel %vm1596, %v1589, %v1593
      %v1598 = vand.u32 2147483647, %v1473
      %vm1599 = vcmp.eq.f32.partialorder %v1598, 8.507059e+37
      %v1600 = vand.u32 %v1473, 2147483648
      %v1601 = vor.u32 1.1754944e-38, %v1600
      %v1602 = vsel %vm1599, %v1601, %v1597
      %v1603 = vmul.f32 1.0, %v1602
      %v1604 = vrcp.pop %v1474
      %v1605 = vmul.f32 %v1474, %v1604
      %v1606 = vsub.f32 1.0, %v1605
      %v1607 = vmul.f32 %v1604, %v1606
      %v1608 = vadd.f32 %v1604, %v1607
      %vm1609 = vweird.f32 %v1474
      %vm1610 = vweird.f32 %v1604
      %vm1611 = vmor %vm1609, %vm1610
      %v1612 = vsel %vm1611, %v1604, %v1608
      %v1613 = vand.u32 2147483647, %v1474
      %vm1614 = vcmp.eq.f32.partialorder %v1613, 8.507059e+37
      %v1615 = vand.u32 %v1474, 2147483648
      %v1616 = vor.u32 1.1754944e-38, %v1615
      %v1617 = vsel %vm1614, %v1616, %v1612
      %v1618 = vmul.f32 1.0, %v1617
      %v1619 = vrcp.pop %v1475
      %v1620 = vmul.f32 %v1475, %v1619
      %v1621 = vsub.f32 1.0, %v1620
      %v1622 = vmul.f32 %v1619, %v1621
      %v1623 = vadd.f32 %v1619, %v1622
      %vm1624 = vweird.f32 %v1475
      %vm1625 = vweird.f32 %v1619
      %vm1626 = vmor %vm1624, %vm1625
      %v1627 = vsel %vm1626, %v1619, %v1623
      %v1628 = vand.u32 2147483647, %v1475
      %vm1629 = vcmp.eq.f32.partialorder %v1628, 8.507059e+37
      %v1630 = vand.u32 %v1475, 2147483648
      %v1631 = vor.u32 1.1754944e-38, %v1630
      %v1632 = vsel %vm1629, %v1631, %v1627
      %v1633 = vmul.f32 1.0, %v1632
      %v1634 = vrcp.pop %v1476
      %v1635 = vmul.f32 %v1476, %v1634
      %v1636 = vsub.f32 1.0, %v1635
      %v1637 = vmul.f32 %v1634, %v1636
      %v1638 = vadd.f32 %v1634, %v1637
      %vm1639 = vweird.f32 %v1476
      %vm1640 = vweird.f32 %v1634
      %vm1641 = vmor %vm1639, %vm1640
      %v1642 = vsel %vm1641, %v1634, %v1638
      %v1643 = vand.u32 2147483647, %v1476
      %vm1644 = vcmp.eq.f32.partialorder %v1643, 8.507059e+37
      %v1645 = vand.u32 %v1476, 2147483648
      %v1646 = vor.u32 1.1754944e-38, %v1645
      %v1647 = vsel %vm1644, %v1646, %v1642
      %v1648 = vmul.f32 1.0, %v1647
      %v1649 = vrcp.pop %v1477
      %v1650 = vmul.f32 %v1477, %v1649
      %v1651 = vsub.f32 1.0, %v1650
      %v1652 = vmul.f32 %v1649, %v1651
      %v1653 = vadd.f32 %v1649, %v1652
      %vm1654 = vweird.f32 %v1477
      %vm1655 = vweird.f32 %v1649
      %vm1656 = vmor %vm1654, %vm1655
      %v1657 = vsel %vm1656, %v1649, %v1653
      %v1658 = vand.u32 2147483647, %v1477
      %vm1659 = vcmp.eq.f32.partialorder %v1658, 8.507059e+37
      %v1660 = vand.u32 %v1477, 2147483648
      %v1661 = vor.u32 1.1754944e-38, %v1660
      %v1662 = vsel %vm1659, %v1661, %v1657
      %v1663 = vmul.f32 1.0, %v1662
      %v1664 = vrcp.pop %v1478
      %v1665 = vmul.f32 %v1478, %v1664
      %v1666 = vsub.f32 1.0, %v1665
      %v1667 = vmul.f32 %v1664, %v1666
      %v1668 = vadd.f32 %v1664, %v1667
      %vm1669 = vweird.f32 %v1478
      %vm1670 = vweird.f32 %v1664
      %vm1671 = vmor %vm1669, %vm1670
      %v1672 = vsel %vm1671, %v1664, %v1668
      %v1673 = vand.u32 2147483647, %v1478
      %vm1674 = vcmp.eq.f32.partialorder %v1673, 8.507059e+37
      %v1675 = vand.u32 %v1478, 2147483648
      %v1676 = vor.u32 1.1754944e-38, %v1675
      %v1677 = vsel %vm1674, %v1676, %v1672
      %v1678 = vmul.f32 1.0, %v1677
      %v1679 = vrcp.pop %v1479
      %v1680 = vmul.f32 %v1479, %v1679
      %v1681 = vsub.f32 1.0, %v1680
      %v1682 = vmul.f32 %v1679, %v1681
      %v1683 = vadd.f32 %v1679, %v1682
      %vm1684 = vweird.f32 %v1479
      %vm1685 = vweird.f32 %v1679
      %vm1686 = vmor %vm1684, %vm1685
      %v1687 = vsel %vm1686, %v1679, %v1683
      %v1688 = vand.u32 2147483647, %v1479
      %vm1689 = vcmp.eq.f32.partialorder %v1688, 8.507059e+37
      %v1690 = vand.u32 %v1479, 2147483648
      %v1691 = vor.u32 1.1754944e-38, %v1690
      %v1692 = vsel %vm1689, %v1691, %v1687
      %v1693 = vmul.f32 1.0, %v1692
      %v1694 = vrcp.pop %v1480
      %v1695 = vmul.f32 %v1480, %v1694
      %v1696 = vsub.f32 1.0, %v1695
      %v1697 = vmul.f32 %v1694, %v1696
      %v1698 = vadd.f32 %v1694, %v1697
      %vm1699 = vweird.f32 %v1480
      %vm1700 = vweird.f32 %v1694
      %vm1701 = vmor %vm1699, %vm1700
      %v1702 = vsel %vm1701, %v1694, %v1698
      %v1703 = vand.u32 2147483647, %v1480
      %vm1704 = vcmp.eq.f32.partialorder %v1703, 8.507059e+37
      %v1705 = vand.u32 %v1480, 2147483648
      %v1706 = vor.u32 1.1754944e-38, %v1705
      %v1707 = vsel %vm1704, %v1706, %v1702
      %v1708 = vmul.f32 1.0, %v1707
      %v1709 = vrcp.pop %v1481
      %v1710 = vmul.f32 %v1481, %v1709
      %v1711 = vsub.f32 1.0, %v1710
      %v1712 = vmul.f32 %v1709, %v1711
      %v1713 = vadd.f32 %v1709, %v1712
      %vm1714 = vweird.f32 %v1481
      %vm1715 = vweird.f32 %v1709
      %vm1716 = vmor %vm1714, %vm1715
      %v1717 = vsel %vm1716, %v1709, %v1713
      %v1718 = vand.u32 2147483647, %v1481
      %vm1719 = vcmp.eq.f32.partialorder %v1718, 8.507059e+37
      %v1720 = vand.u32 %v1481, 2147483648
      %v1721 = vor.u32 1.1754944e-38, %v1720
      %v1722 = vsel %vm1719, %v1721, %v1717
      %v1723 = vmul.f32 1.0, %v1722
      %v1724 = vrcp.pop %v1482
      %v1725 = vmul.f32 %v1482, %v1724
      %v1726 = vsub.f32 1.0, %v1725
      %v1727 = vmul.f32 %v1724, %v1726
      %v1728 = vadd.f32 %v1724, %v1727
      %vm1729 = vweird.f32 %v1482
      %vm1730 = vweird.f32 %v1724
      %vm1731 = vmor %vm1729, %vm1730
      %v1732 = vsel %vm1731, %v1724, %v1728
      %v1733 = vand.u32 2147483647, %v1482
      %vm1734 = vcmp.eq.f32.partialorder %v1733, 8.507059e+37
      %v1735 = vand.u32 %v1482, 2147483648
      %v1736 = vor.u32 1.1754944e-38, %v1735
      %v1737 = vsel %vm1734, %v1736, %v1732
      %v1738 = vmul.f32 1.0, %v1737
      %v1739 = vrcp.pop %v1483
      %v1740 = vmul.f32 %v1483, %v1739
      %v1741 = vsub.f32 1.0, %v1740
      %v1742 = vmul.f32 %v1739, %v1741
      %v1743 = vadd.f32 %v1739, %v1742
      %vm1744 = vweird.f32 %v1483
      %vm1745 = vweird.f32 %v1739
      %vm1746 = vmor %vm1744, %vm1745
      %v1747 = vsel %vm1746, %v1739, %v1743
      %v1748 = vand.u32 2147483647, %v1483
      %vm1749 = vcmp.eq.f32.partialorder %v1748, 8.507059e+37
      %v1750 = vand.u32 %v1483, 2147483648
      %v1751 = vor.u32 1.1754944e-38, %v1750
      %v1752 = vsel %vm1749, %v1751, %v1747
      %v1753 = vmul.f32 1.0, %v1752
      %v1754 = vrcp.pop %v1484
      %v1755 = vmul.f32 %v1484, %v1754
      %v1756 = vsub.f32 1.0, %v1755
      %v1757 = vmul.f32 %v1754, %v1756
      %v1758 = vadd.f32 %v1754, %v1757
      %vm1759 = vweird.f32 %v1484
      %vm1760 = vweird.f32 %v1754
      %vm1761 = vmor %vm1759, %vm1760
      %v1762 = vsel %vm1761, %v1754, %v1758
      %v1763 = vand.u32 2147483647, %v1484
      %vm1764 = vcmp.eq.f32.partialorder %v1763, 8.507059e+37
      %v1765 = vand.u32 %v1484, 2147483648
      %v1766 = vor.u32 1.1754944e-38, %v1765
      %v1767 = vsel %vm1764, %v1766, %v1762
      %v1768 = vmul.f32 1.0, %v1767
      %v1769 = vrcp.pop %v1485
      %v1770 = vmul.f32 %v1485, %v1769
      %v1771 = vsub.f32 1.0, %v1770
      %v1772 = vmul.f32 %v1769, %v1771
      %v1773 = vadd.f32 %v1769, %v1772
      %vm1774 = vweird.f32 %v1485
      %vm1775 = vweird.f32 %v1769
      %vm1776 = vmor %vm1774, %vm1775
      %v1777 = vsel %vm1776, %v1769, %v1773
      %v1778 = vand.u32 2147483647, %v1485
      %vm1779 = vcmp.eq.f32.partialorder %v1778, 8.507059e+37
      %v1780 = vand.u32 %v1485, 2147483648
      %v1781 = vor.u32 1.1754944e-38, %v1780
      %v1782 = vsel %vm1779, %v1781, %v1777
      %v1783 = vmul.f32 1.0, %v1782
      %v1784 = vrcp.pop %v1486
      %v1785 = vmul.f32 %v1486, %v1784
      %v1786 = vsub.f32 1.0, %v1785
      %v1787 = vmul.f32 %v1784, %v1786
      %v1788 = vadd.f32 %v1784, %v1787
      %vm1789 = vweird.f32 %v1486
      %vm1790 = vweird.f32 %v1784
      %vm1791 = vmor %vm1789, %vm1790
      %v1792 = vsel %vm1791, %v1784, %v1788
      %v1793 = vand.u32 2147483647, %v1486
      %vm1794 = vcmp.eq.f32.partialorder %v1793, 8.507059e+37
      %v1795 = vand.u32 %v1486, 2147483648
      %v1796 = vor.u32 1.1754944e-38, %v1795
      %v1797 = vsel %vm1794, %v1796, %v1792
      %v1798 = vmul.f32 1.0, %v1797
      %v1799 = vrcp.pop %v1487
      %v1800 = vmul.f32 %v1487, %v1799
      %v1801 = vsub.f32 1.0, %v1800
      %v1802 = vmul.f32 %v1799, %v1801
      %v1803 = vadd.f32 %v1799, %v1802
      %vm1804 = vweird.f32 %v1487
      %vm1805 = vweird.f32 %v1799
      %vm1806 = vmor %vm1804, %vm1805
      %v1807 = vsel %vm1806, %v1799, %v1803
      %v1808 = vand.u32 2147483647, %v1487
      %vm1809 = vcmp.eq.f32.partialorder %v1808, 8.507059e+37
      %v1810 = vand.u32 %v1487, 2147483648
      %v1811 = vor.u32 1.1754944e-38, %v1810
      %v1812 = vsel %vm1809, %v1811, %v1807
      %v1813 = vmul.f32 1.0, %v1812
      %v1814 = vrcp.pop %v1488
      %v1815 = vmul.f32 %v1488, %v1814
      %v1816 = vsub.f32 1.0, %v1815
      %v1817 = vmul.f32 %v1814, %v1816
      %v1818 = vadd.f32 %v1814, %v1817
      %vm1819 = vweird.f32 %v1488
      %vm1820 = vweird.f32 %v1814
      %vm1821 = vmor %vm1819, %vm1820
      %v1822 = vsel %vm1821, %v1814, %v1818
      %v1823 = vand.u32 2147483647, %v1488
      %vm1824 = vcmp.eq.f32.partialorder %v1823, 8.507059e+37
      %v1825 = vand.u32 %v1488, 2147483648
      %v1826 = vor.u32 1.1754944e-38, %v1825
      %v1827 = vsel %vm1824, %v1826, %v1822
      %v1828 = vmul.f32 1.0, %v1827
      %v1829 = vrcp.pop %v1489
      %v1830 = vmul.f32 %v1489, %v1829
      %v1831 = vsub.f32 1.0, %v1830
      %v1832 = vmul.f32 %v1829, %v1831
      %v1833 = vadd.f32 %v1829, %v1832
      %vm1834 = vweird.f32 %v1489
      %vm1835 = vweird.f32 %v1829
      %vm1836 = vmor %vm1834, %vm1835
      %v1837 = vsel %vm1836, %v1829, %v1833
      %v1838 = vand.u32 2147483647, %v1489
      %vm1839 = vcmp.eq.f32.partialorder %v1838, 8.507059e+37
      %v1840 = vand.u32 %v1489, 2147483648
      %v1841 = vor.u32 1.1754944e-38, %v1840
      %v1842 = vsel %vm1839, %v1841, %v1837
      %v1843 = vmul.f32 1.0, %v1842
      %v1844 = vrcp.pop %v1490
      %v1845 = vmul.f32 %v1490, %v1844
      %v1846 = vsub.f32 1.0, %v1845
      %v1847 = vmul.f32 %v1844, %v1846
      %v1848 = vadd.f32 %v1844, %v1847
      %vm1849 = vweird.f32 %v1490
      %vm1850 = vweird.f32 %v1844
      %vm1851 = vmor %vm1849, %vm1850
      %v1852 = vsel %vm1851, %v1844, %v1848
      %v1853 = vand.u32 2147483647, %v1490
      %vm1854 = vcmp.eq.f32.partialorder %v1853, 8.507059e+37
      %v1855 = vand.u32 %v1490, 2147483648
      %v1856 = vor.u32 1.1754944e-38, %v1855
      %v1857 = vsel %vm1854, %v1856, %v1852
      %v1858 = vmul.f32 1.0, %v1857
      %v1859 = vrcp.pop %v1491
      %v1860 = vmul.f32 %v1491, %v1859
      %v1861 = vsub.f32 1.0, %v1860
      %v1862 = vmul.f32 %v1859, %v1861
      %v1863 = vadd.f32 %v1859, %v1862
      %vm1864 = vweird.f32 %v1491
      %vm1865 = vweird.f32 %v1859
      %vm1866 = vmor %vm1864, %vm1865
      %v1867 = vsel %vm1866, %v1859, %v1863
      %v1868 = vand.u32 2147483647, %v1491
      %vm1869 = vcmp.eq.f32.partialorder %v1868, 8.507059e+37
      %v1870 = vand.u32 %v1491, 2147483648
      %v1871 = vor.u32 1.1754944e-38, %v1870
      %v1872 = vsel %vm1869, %v1871, %v1867
      %v1873 = vmul.f32 1.0, %v1872
      %v1874 = vrcp.pop %v1492
      %v1875 = vmul.f32 %v1492, %v1874
      %v1876 = vsub.f32 1.0, %v1875
      %v1877 = vmul.f32 %v1874, %v1876
      %v1878 = vadd.f32 %v1874, %v1877
      %vm1879 = vweird.f32 %v1492
      %vm1880 = vweird.f32 %v1874
      %vm1881 = vmor %vm1879, %vm1880
      %v1882 = vsel %vm1881, %v1874, %v1878
      %v1883 = vand.u32 2147483647, %v1492
      %vm1884 = vcmp.eq.f32.partialorder %v1883, 8.507059e+37
      %v1885 = vand.u32 %v1492, 2147483648
      %v1886 = vor.u32 1.1754944e-38, %v1885
      %v1887 = vsel %vm1884, %v1886, %v1882
      %v1888 = vmul.f32 1.0, %v1887
      %v1889 = vrcp.pop %v1493
      %v1890 = vmul.f32 %v1493, %v1889
      %v1891 = vsub.f32 1.0, %v1890
      %v1892 = vmul.f32 %v1889, %v1891
      %v1893 = vadd.f32 %v1889, %v1892
      %vm1894 = vweird.f32 %v1493
      %vm1895 = vweird.f32 %v1889
      %vm1896 = vmor %vm1894, %vm1895
      %v1897 = vsel %vm1896, %v1889, %v1893
      %v1898 = vand.u32 2147483647, %v1493
      %vm1899 = vcmp.eq.f32.partialorder %v1898, 8.507059e+37
      %v1900 = vand.u32 %v1493, 2147483648
      %v1901 = vor.u32 1.1754944e-38, %v1900
      %v1902 = vsel %vm1899, %v1901, %v1897
      %v1903 = vmul.f32 1.0, %v1902
      %v1904 = vrcp.pop %v1494
      %v1905 = vmul.f32 %v1494, %v1904
      %v1906 = vsub.f32 1.0, %v1905
      %v1907 = vmul.f32 %v1904, %v1906
      %v1908 = vadd.f32 %v1904, %v1907
      %vm1909 = vweird.f32 %v1494
      %vm1910 = vweird.f32 %v1904
      %vm1911 = vmor %vm1909, %vm1910
      %v1912 = vsel %vm1911, %v1904, %v1908
      %v1913 = vand.u32 2147483647, %v1494
      %vm1914 = vcmp.eq.f32.partialorder %v1913, 8.507059e+37
      %v1915 = vand.u32 %v1494, 2147483648
      %v1916 = vor.u32 1.1754944e-38, %v1915
      %v1917 = vsel %vm1914, %v1916, %v1912
      %v1918 = vmul.f32 1.0, %v1917
      %v1919 = vrcp.pop %v1495
      %v1920 = vmul.f32 %v1495, %v1919
      %v1921 = vsub.f32 1.0, %v1920
      %v1922 = vmul.f32 %v1919, %v1921
      %v1923 = vadd.f32 %v1919, %v1922
      %vm1924 = vweird.f32 %v1495
      %vm1925 = vweird.f32 %v1919
      %vm1926 = vmor %vm1924, %vm1925
      %v1927 = vsel %vm1926, %v1919, %v1923
      %v1928 = vand.u32 2147483647, %v1495
      %vm1929 = vcmp.eq.f32.partialorder %v1928, 8.507059e+37
      %v1930 = vand.u32 %v1495, 2147483648
      %v1931 = vor.u32 1.1754944e-38, %v1930
      %v1932 = vsel %vm1929, %v1931, %v1927
      %v1933 = vmul.f32 1.0, %v1932
      %v1934 = vrcp.pop %v1496
      %v1935 = vmul.f32 %v1496, %v1934
      %v1936 = vsub.f32 1.0, %v1935
      %v1937 = vmul.f32 %v1934, %v1936
      %v1938 = vadd.f32 %v1934, %v1937
      %vm1939 = vweird.f32 %v1496
      %vm1940 = vweird.f32 %v1934
      %vm1941 = vmor %vm1939, %vm1940
      %v1942 = vsel %vm1941, %v1934, %v1938
      %v1943 = vand.u32 2147483647, %v1496
      %vm1944 = vcmp.eq.f32.partialorder %v1943, 8.507059e+37
      %v1945 = vand.u32 %v1496, 2147483648
      %v1946 = vor.u32 1.1754944e-38, %v1945
      %v1947 = vsel %vm1944, %v1946, %v1942
      %v1948 = vmul.f32 1.0, %v1947
      %v1949 = vrcp.pop %v1497
      %v1950 = vmul.f32 %v1497, %v1949
      %v1951 = vsub.f32 1.0, %v1950
      %v1952 = vmul.f32 %v1949, %v1951
      %v1953 = vadd.f32 %v1949, %v1952
      %vm1954 = vweird.f32 %v1497
      %vm1955 = vweird.f32 %v1949
      %vm1956 = vmor %vm1954, %vm1955
      %v1957 = vsel %vm1956, %v1949, %v1953
      %v1958 = vand.u32 2147483647, %v1497
      %vm1959 = vcmp.eq.f32.partialorder %v1958, 8.507059e+37
      %v1960 = vand.u32 %v1497, 2147483648
      %v1961 = vor.u32 1.1754944e-38, %v1960
      %v1962 = vsel %vm1959, %v1961, %v1957
      %v1963 = vmul.f32 1.0, %v1962
      %v1964 = vrcp.pop %v1498
      %v1965 = vmul.f32 %v1498, %v1964
      %v1966 = vsub.f32 1.0, %v1965
      %v1967 = vmul.f32 %v1964, %v1966
      %v1968 = vadd.f32 %v1964, %v1967
      %vm1969 = vweird.f32 %v1498
      %vm1970 = vweird.f32 %v1964
      %vm1971 = vmor %vm1969, %vm1970
      %v1972 = vsel %vm1971, %v1964, %v1968
      %v1973 = vand.u32 2147483647, %v1498
      %vm1974 = vcmp.eq.f32.partialorder %v1973, 8.507059e+37
      %v1975 = vand.u32 %v1498, 2147483648
      %v1976 = vor.u32 1.1754944e-38, %v1975
      %v1977 = vsel %vm1974, %v1976, %v1972
      %v1978 = vmul.f32 1.0, %v1977
      %v1979 = vmul.f32 %v1513, 2.0
      %v1980 = vmul.f32 %v1528, 2.0
      %v1981 = vmul.f32 %v1543, 2.0
      %v1982 = vmul.f32 %v1558, 2.0
      %v1983 = vmul.f32 %v1573, 2.0
      %v1984 = vmul.f32 %v1588, 2.0
      %v1985 = vmul.f32 %v1603, 2.0
      %v1986 = vmul.f32 %v1618, 2.0
      %v1987 = vmul.f32 %v1633, 2.0
      %v1988 = vmul.f32 %v1648, 2.0
      %v1989 = vmul.f32 %v1663, 2.0
      %v1990 = vmul.f32 %v1678, 2.0
      %v1991 = vmul.f32 %v1693, 2.0
      %v1992 = vmul.f32 %v1708, 2.0
      %v1993 = vmul.f32 %v1723, 2.0
      %v1994 = vmul.f32 %v1738, 2.0
      %v1995 = vmul.f32 %v1753, 2.0
      %v1996 = vmul.f32 %v1768, 2.0
      %v1997 = vmul.f32 %v1783, 2.0
      %v1998 = vmul.f32 %v1798, 2.0
      %v1999 = vmul.f32 %v1813, 2.0
      %v2000 = vmul.f32 %v1828, 2.0
      %v2001 = vmul.f32 %v1843, 2.0
      %v2002 = vmul.f32 %v1858, 2.0
      %v2003 = vmul.f32 %v1873, 2.0
      %v2004 = vmul.f32 %v1888, 2.0
      %v2005 = vmul.f32 %v1903, 2.0
      %v2006 = vmul.f32 %v1918, 2.0
      %v2007 = vmul.f32 %v1933, 2.0
      %v2008 = vmul.f32 %v1948, 2.0
      %v2009 = vmul.f32 %v1963, 2.0
      %v2010 = vmul.f32 %v1978, 2.0
      %v2011 = vsub.f32 %v1979, 0.5
      %v2012 = vsub.f32 %v1980, 0.5
      %v2013 = vsub.f32 %v1981, 0.5
      %v2014 = vsub.f32 %v1982, 0.5
      %v2015 = vsub.f32 %v1983, 0.5
      %v2016 = vsub.f32 %v1984, 0.5
      %v2017 = vsub.f32 %v1985, 0.5
      %v2018 = vsub.f32 %v1986, 0.5
      %v2019 = vsub.f32 %v1987, 0.5
      %v2020 = vsub.f32 %v1988, 0.5
      %v2021 = vsub.f32 %v1989, 0.5
      %v2022 = vsub.f32 %v1990, 0.5
      %v2023 = vsub.f32 %v1991, 0.5
      %v2024 = vsub.f32 %v1992, 0.5
      %v2025 = vsub.f32 %v1993, 0.5
      %v2026 = vsub.f32 %v1994, 0.5
      %v2027 = vsub.f32 %v1995, 0.5
      %v2028 = vsub.f32 %v1996, 0.5
      %v2029 = vsub.f32 %v1997, 0.5
      %v2030 = vsub.f32 %v1998, 0.5
      %v2031 = vsub.f32 %v1999, 0.5
      %v2032 = vsub.f32 %v2000, 0.5
      %v2033 = vsub.f32 %v2001, 0.5
      %v2034 = vsub.f32 %v2002, 0.5
      %v2035 = vsub.f32 %v2003, 0.5
      %v2036 = vsub.f32 %v2004, 0.5
      %v2037 = vsub.f32 %v2005, 0.5
      %v2038 = vsub.f32 %v2006, 0.5
      %v2039 = vsub.f32 %v2007, 0.5
      %v2040 = vsub.f32 %v2008, 0.5
      %v2041 = vsub.f32 %v2009, 0.5
      %v2042 = vsub.f32 %v2010, 0.5
      %v2043 = vsel %vm1370, %v2011, %v1287
      %v2044 = vsel %vm1370, %v2012, %v1289
      %v2045 = vsel %vm1370, %v2013, %v1292
      %v2046 = vsel %vm1370, %v2014, %v1294
      %v2047 = vsel %vm1370, %v2015, %v1297
      %v2048 = vsel %vm1370, %v2016, %v1299
      %v2049 = vsel %vm1370, %v2017, %v1302
      %v2050 = vsel %vm1370, %v2018, %v1304
      %v2051 = vsel %vm1370, %v2019, %v1307
      %v2052 = vsel %vm1370, %v2020, %v1309
      %v2053 = vsel %vm1370, %v2021, %v1312
      %v2054 = vsel %vm1370, %v2022, %v1314
      %v2055 = vsel %vm1370, %v2023, %v1317
      %v2056 = vsel %vm1370, %v2024, %v1319
      %v2057 = vsel %vm1370, %v2025, %v1322
      %v2058 = vsel %vm1370, %v2026, %v1324
      %v2059 = vsel %vm1370, %v2027, %v1327
      %v2060 = vsel %vm1370, %v2028, %v1329
      %v2061 = vsel %vm1370, %v2029, %v1332
      %v2062 = vsel %vm1370, %v2030, %v1334
      %v2063 = vsel %vm1370, %v2031, %v1337
      %v2064 = vsel %vm1370, %v2032, %v1339
      %v2065 = vsel %vm1370, %v2033, %v1342
      %v2066 = vsel %vm1370, %v2034, %v1344
      %v2067 = vsel %vm1370, %v2035, %v1347
      %v2068 = vsel %vm1370, %v2036, %v1349
      %v2069 = vsel %vm1370, %v2037, %v1352
      %v2070 = vsel %vm1370, %v2038, %v1354
      %v2071 = vsel %vm1370, %v2039, %v1357
      %v2072 = vsel %vm1370, %v2040, %v1359
      %v2073 = vsel %vm1370, %v2041, %v1362
      %v2074 = vsel %vm1370, %v2042, %v1364
      %vm2075 = vcmask 64512
      %2076 = vst.msk [vmem:[%s440] sm:$0xff] %vm2075, %v2043
      %2077 = vst.msk [vmem:[%s440 + $0x8] sm:$0xff] %vm2075, %v2044
      %2078 = vst.msk [vmem:[%s440 + $0x10] sm:$0xff] %vm2075, %v2045
      %2079 = vst.msk [vmem:[%s440 + $0x18] sm:$0xff] %vm2075, %v2046
      %2080 = vst.msk [vmem:[%s440 + $0x20] sm:$0xff] %vm2075, %v2047
      %2081 = vst.msk [vmem:[%s440 + $0x28] sm:$0xff] %vm2075, %v2048
      %2082 = vst.msk [vmem:[%s440 + $0x30] sm:$0xff] %vm2075, %v2049
      %2083 = vst.msk [vmem:[%s440 + $0x38] sm:$0xff] %vm2075, %v2050
      %2084 = vst.msk [vmem:[%s440 + $0x40] sm:$0xff] %vm2075, %v2051
      %2085 = vst.msk [vmem:[%s440 + $0x48] sm:$0xff] %vm2075, %v2052
      %2086 = vst.msk [vmem:[%s440 + $0x50] sm:$0xff] %vm2075, %v2053
      %2087 = vst.msk [vmem:[%s440 + $0x58] sm:$0xff] %vm2075, %v2054
      %2088 = vst.msk [vmem:[%s440 + $0x60] sm:$0xff] %vm2075, %v2055
      %2089 = vst.msk [vmem:[%s440 + $0x68] sm:$0xff] %vm2075, %v2056
      %2090 = vst.msk [vmem:[%s440 + $0x70] sm:$0xff] %vm2075, %v2057
      %2091 = vst.msk [vmem:[%s440 + $0x78] sm:$0xff] %vm2075, %v2058
      %2092 = vst.msk [vmem:[%s440 + $0x80] sm:$0xff] %vm2075, %v2059
      %2093 = vst.msk [vmem:[%s440 + $0x88] sm:$0xff] %vm2075, %v2060
      %2094 = vst.msk [vmem:[%s440 + $0x90] sm:$0xff] %vm2075, %v2061
      %2095 = vst.msk [vmem:[%s440 + $0x98] sm:$0xff] %vm2075, %v2062
      %2096 = vst.msk [vmem:[%s440 + $0xa0] sm:$0xff] %vm2075, %v2063
      %2097 = vst.msk [vmem:[%s440 + $0xa8] sm:$0xff] %vm2075, %v2064
      %2098 = vst.msk [vmem:[%s440 + $0xb0] sm:$0xff] %vm2075, %v2065
      %2099 = vst.msk [vmem:[%s440 + $0xb8] sm:$0xff] %vm2075, %v2066
      %2100 = vst.msk [vmem:[%s440 + $0xc0] sm:$0xff] %vm2075, %v2067
      %2101 = vst.msk [vmem:[%s440 + $0xc8] sm:$0xff] %vm2075, %v2068
      %2102 = vst.msk [vmem:[%s440 + $0xd0] sm:$0xff] %vm2075, %v2069
      %2103 = vst.msk [vmem:[%s440 + $0xd8] sm:$0xff] %vm2075, %v2070
      %2104 = vst.msk [vmem:[%s440 + $0xe0] sm:$0xff] %vm2075, %v2071
      %2105 = vst.msk [vmem:[%s440 + $0xe8] sm:$0xff] %vm2075, %v2072
      %2106 = vst.msk [vmem:[%s440 + $0xf0] sm:$0xff] %vm2075, %v2073
      %2107 = vst.msk [vmem:[%s440 + $0xf8] sm:$0xff] %vm2075, %v2074
      %v2108 = vld [vmem:[%s428] sm:$0xf]
      %v2109 = vld [vmem:[%s428 + $0x4] sm:$0xf]
      %v2110 = vld [vmem:[%s428 + $0x8] sm:$0xf]
      %v2111 = vld [vmem:[%s428 + $0xc] sm:$0xf]
      %v2112 = vld [vmem:[%s428 + $0x10] sm:$0xf]
      %v2113 = vld [vmem:[%s428 + $0x14] sm:$0xf]
      %v2114 = vld [vmem:[%s428 + $0x18] sm:$0xf]
      %v2115 = vld [vmem:[%s428 + $0x1c] sm:$0xf]
      %v2116 = vld [vmem:[%s428 + $0x20] sm:$0xf]
      %v2117 = vld [vmem:[%s428 + $0x24] sm:$0xf]
      %v2118 = vld [vmem:[%s428 + $0x28] sm:$0xf]
      %v2119 = vld [vmem:[%s428 + $0x2c] sm:$0xf]
      %v2120 = vld [vmem:[%s428 + $0x30] sm:$0xf]
      %v2121 = vld [vmem:[%s428 + $0x34] sm:$0xf]
      %v2122 = vld [vmem:[%s428 + $0x38] sm:$0xf]
      %v2123 = vld [vmem:[%s428 + $0x3c] sm:$0xf]
      %v2124 = vld [vmem:[%s428 + $0x40] sm:$0xf]
      %v2125 = vld [vmem:[%s428 + $0x44] sm:$0xf]
      %v2126 = vld [vmem:[%s428 + $0x48] sm:$0xf]
      %v2127 = vld [vmem:[%s428 + $0x4c] sm:$0xf]
      %v2128 = vld [vmem:[%s428 + $0x50] sm:$0xf]
      %v2129 = vld [vmem:[%s428 + $0x54] sm:$0xf]
      %v2130 = vld [vmem:[%s428 + $0x58] sm:$0xf]
      %v2131 = vld [vmem:[%s428 + $0x5c] sm:$0xf]
      %v2132 = vld [vmem:[%s428 + $0x60] sm:$0xf]
      %v2133 = vld [vmem:[%s428 + $0x64] sm:$0xf]
      %v2134 = vld [vmem:[%s428 + $0x68] sm:$0xf]
      %v2135 = vld [vmem:[%s428 + $0x6c] sm:$0xf]
      %v2136 = vld [vmem:[%s428 + $0x70] sm:$0xf]
      %v2137 = vld [vmem:[%s428 + $0x74] sm:$0xf]
      %v2138 = vld [vmem:[%s428 + $0x78] sm:$0xf]
      %v2139 = vld [vmem:[%s428 + $0x7c] sm:$0xf]
      %v2140 = vld [vmem:[%s8] sm:$0xf]
      %v2141 = vld [vmem:[%s8 + $0x4] sm:$0xf]
      %v2142 = vld [vmem:[%s8 + $0x8] sm:$0xf]
      %v2143 = vld [vmem:[%s8 + $0xc] sm:$0xf]
      %v2144 = vld [vmem:[%s9] sm:$0x1]
      %v2146 = vperm.slane %v2144, 0
      %v2180 = vunpack.c.l.b16 %v2108
      %v2181 = vunpack.c.l.b16 %v2109
      %v2182 = vunpack.c.l.b16 %v2110
      %v2183 = vunpack.c.l.b16 %v2111
      %v2184 = vunpack.c.l.b16 %v2112
      %v2185 = vunpack.c.l.b16 %v2113
      %v2186 = vunpack.c.l.b16 %v2114
      %v2187 = vunpack.c.l.b16 %v2115
      %v2188 = vunpack.c.l.b16 %v2116
      %v2189 = vunpack.c.l.b16 %v2117
      %v2190 = vunpack.c.l.b16 %v2118
      %v2191 = vunpack.c.l.b16 %v2119
      %v2192 = vunpack.c.l.b16 %v2120
      %v2193 = vunpack.c.l.b16 %v2121
      %v2194 = vunpack.c.l.b16 %v2122
      %v2195 = vunpack.c.l.b16 %v2123
      %v2196 = vunpack.c.l.b16 %v2124
      %v2197 = vunpack.c.l.b16 %v2125
      %v2198 = vunpack.c.l.b16 %v2126
      %v2199 = vunpack.c.l.b16 %v2127
      %v2200 = vunpack.c.l.b16 %v2128
      %v2201 = vunpack.c.l.b16 %v2129
      %v2202 = vunpack.c.l.b16 %v2130
      %v2203 = vunpack.c.l.b16 %v2131
      %v2204 = vunpack.c.l.b16 %v2132
      %v2205 = vunpack.c.l.b16 %v2133
      %v2206 = vunpack.c.l.b16 %v2134
      %v2207 = vunpack.c.l.b16 %v2135
      %v2208 = vunpack.c.l.b16 %v2136
      %v2209 = vunpack.c.l.b16 %v2137
      %v2210 = vunpack.c.l.b16 %v2138
      %v2211 = vunpack.c.l.b16 %v2139
      %v2212 = vpack.c.b16 %v2181, %v2180
      %v2213 = vpack.c.b16 %v2183, %v2182
      %v2214 = vpack.c.b16 %v2185, %v2184
      %v2215 = vpack.c.b16 %v2187, %v2186
      %v2216 = vpack.c.b16 %v2189, %v2188
      %v2217 = vpack.c.b16 %v2191, %v2190
      %v2218 = vpack.c.b16 %v2193, %v2192
      %v2219 = vpack.c.b16 %v2195, %v2194
      %v2220 = vpack.c.b16 %v2197, %v2196
      %v2221 = vpack.c.b16 %v2199, %v2198
      %v2222 = vpack.c.b16 %v2201, %v2200
      %v2223 = vpack.c.b16 %v2203, %v2202
      %v2224 = vpack.c.b16 %v2205, %v2204
      %v2225 = vpack.c.b16 %v2207, %v2206
      %v2226 = vpack.c.b16 %v2209, %v2208
      %v2227 = vpack.c.b16 %v2211, %v2210
      %v2232 = vunpack.c.l.b16 %v2140
      %v2233 = vunpack.c.l.b16 %v2141
      %v2234 = vunpack.c.l.b16 %v2142
      %v2235 = vunpack.c.l.b16 %v2143
      %v2236 = vpack.c.b16 %v2233, %v2232
      %v2237 = vpack.c.b16 %v2235, %v2234
      %v2241 = vsel %vm581, %v2212, 0
      %v2244 = vsel %vm581, %v2213, 0
      %v2247 = vsel %vm581, %v2214, 0
      %v2250 = vsel %vm581, %v2215, 0
      %v2253 = vsel %vm581, %v2216, 0
      %v2256 = vsel %vm581, %v2217, 0
      %v2259 = vsel %vm581, %v2218, 0
      %v2262 = vsel %vm581, %v2219, 0
      %v2265 = vsel %vm581, %v2220, 0
      %v2268 = vsel %vm581, %v2221, 0
      %v2271 = vsel %vm581, %v2222, 0
      %v2274 = vsel %vm581, %v2223, 0
      %v2277 = vsel %vm581, %v2224, 0
      %v2280 = vsel %vm581, %v2225, 0
      %v2283 = vsel %vm581, %v2226, 0
      %v2286 = vsel %vm581, %v2227, 0
      %2288 = vmatpush.bf16.msra.mxu0 0
      %2289 = vmatpush.bf16.msra.mxu0 0
      %2290 = vmatpush.bf16.msra.mxu0 0
      %2291 = vmatpush.bf16.msra.mxu0 0
      %2292 = vmatpush.bf16.msra.mxu0 0
      %2293 = vmatpush.bf16.msra.mxu0 0
      %2294 = vmatpush.bf16.msra.mxu0 %v2237
      %2295 = vmatpush.bf16.msra.mxu0 %v2236
      %2296 = vmatmul.bf16.gmra.mxu0 %v2241
      %v2297 = vpop.f32.mrf.mxu0
      %v2298 = vadd.f32 %v2146, %v2297
      %v2299 = vpop.f32.mrf.mxu0
      %v2300 = vadd.f32 %v2146, %v2299
      %2301 = vmatmul.bf16.gmra.mxu0 %v2244
      %v2302 = vpop.f32.mrf.mxu0
      %v2303 = vadd.f32 %v2146, %v2302
      %v2304 = vpop.f32.mrf.mxu0
      %v2305 = vadd.f32 %v2146, %v2304
      %2306 = vmatmul.bf16.gmra.mxu0 %v2247
      %v2307 = vpop.f32.mrf.mxu0
      %v2308 = vadd.f32 %v2146, %v2307
      %v2309 = vpop.f32.mrf.mxu0
      %v2310 = vadd.f32 %v2146, %v2309
      %2311 = vmatmul.bf16.gmra.mxu0 %v2250
      %v2312 = vpop.f32.mrf.mxu0
      %v2313 = vadd.f32 %v2146, %v2312
      %v2314 = vpop.f32.mrf.mxu0
      %v2315 = vadd.f32 %v2146, %v2314
      %2316 = vmatmul.bf16.gmra.mxu0 %v2253
      %v2317 = vpop.f32.mrf.mxu0
      %v2318 = vadd.f32 %v2146, %v2317
      %v2319 = vpop.f32.mrf.mxu0
      %v2320 = vadd.f32 %v2146, %v2319
      %2321 = vmatmul.bf16.gmra.mxu0 %v2256
      %v2322 = vpop.f32.mrf.mxu0
      %v2323 = vadd.f32 %v2146, %v2322
      %v2324 = vpop.f32.mrf.mxu0
      %v2325 = vadd.f32 %v2146, %v2324
      %2326 = vmatmul.bf16.gmra.mxu0 %v2259
      %v2327 = vpop.f32.mrf.mxu0
      %v2328 = vadd.f32 %v2146, %v2327
      %v2329 = vpop.f32.mrf.mxu0
      %v2330 = vadd.f32 %v2146, %v2329
      %2331 = vmatmul.bf16.gmra.mxu0 %v2262
      %v2332 = vpop.f32.mrf.mxu0
      %v2333 = vadd.f32 %v2146, %v2332
      %v2334 = vpop.f32.mrf.mxu0
      %v2335 = vadd.f32 %v2146, %v2334
      %2336 = vmatmul.bf16.gmra.mxu0 %v2265
      %v2337 = vpop.f32.mrf.mxu0
      %v2338 = vadd.f32 %v2146, %v2337
      %v2339 = vpop.f32.mrf.mxu0
      %v2340 = vadd.f32 %v2146, %v2339
      %2341 = vmatmul.bf16.gmra.mxu0 %v2268
      %v2342 = vpop.f32.mrf.mxu0
      %v2343 = vadd.f32 %v2146, %v2342
      %v2344 = vpop.f32.mrf.mxu0
      %v2345 = vadd.f32 %v2146, %v2344
      %2346 = vmatmul.bf16.gmra.mxu0 %v2271
      %v2347 = vpop.f32.mrf.mxu0
      %v2348 = vadd.f32 %v2146, %v2347
      %v2349 = vpop.f32.mrf.mxu0
      %v2350 = vadd.f32 %v2146, %v2349
      %2351 = vmatmul.bf16.gmra.mxu0 %v2274
      %v2352 = vpop.f32.mrf.mxu0
      %v2353 = vadd.f32 %v2146, %v2352
      %v2354 = vpop.f32.mrf.mxu0
      %v2355 = vadd.f32 %v2146, %v2354
      %2356 = vmatmul.bf16.gmra.mxu0 %v2277
      %v2357 = vpop.f32.mrf.mxu0
      %v2358 = vadd.f32 %v2146, %v2357
      %v2359 = vpop.f32.mrf.mxu0
      %v2360 = vadd.f32 %v2146, %v2359
      %2361 = vmatmul.bf16.gmra.mxu0 %v2280
      %v2362 = vpop.f32.mrf.mxu0
      %v2363 = vadd.f32 %v2146, %v2362
      %v2364 = vpop.f32.mrf.mxu0
      %v2365 = vadd.f32 %v2146, %v2364
      %2366 = vmatmul.bf16.gmra.mxu0 %v2283
      %v2367 = vpop.f32.mrf.mxu0
      %v2368 = vadd.f32 %v2146, %v2367
      %v2369 = vpop.f32.mrf.mxu0
      %v2370 = vadd.f32 %v2146, %v2369
      %2371 = vmatmul.bf16.gmra.mxu0 %v2286
      %v2372 = vpop.f32.mrf.mxu0
      %v2373 = vadd.f32 %v2146, %v2372
      %v2374 = vpop.f32.mrf.mxu0
      %v2375 = vadd.f32 %v2146, %v2374
      %2376 = vdwg.mxu0
      %vm2377 = vcmask 130048
      %2378 = vst.msk [vmem:[%s446] sm:$0xff] %vm2377, %v2298
      %2379 = vst.msk [vmem:[%s446 + $0x8] sm:$0xff] %vm2377, %v2300
      %2380 = vst.msk [vmem:[%s446 + $0x10] sm:$0xff] %vm2377, %v2303
      %2381 = vst.msk [vmem:[%s446 + $0x18] sm:$0xff] %vm2377, %v2305
      %2382 = vst.msk [vmem:[%s446 + $0x20] sm:$0xff] %vm2377, %v2308
      %2383 = vst.msk [vmem:[%s446 + $0x28] sm:$0xff] %vm2377, %v2310
      %2384 = vst.msk [vmem:[%s446 + $0x30] sm:$0xff] %vm2377, %v2313
      %2385 = vst.msk [vmem:[%s446 + $0x38] sm:$0xff] %vm2377, %v2315
      %2386 = vst.msk [vmem:[%s446 + $0x40] sm:$0xff] %vm2377, %v2318
      %2387 = vst.msk [vmem:[%s446 + $0x48] sm:$0xff] %vm2377, %v2320
      %2388 = vst.msk [vmem:[%s446 + $0x50] sm:$0xff] %vm2377, %v2323
      %2389 = vst.msk [vmem:[%s446 + $0x58] sm:$0xff] %vm2377, %v2325
      %2390 = vst.msk [vmem:[%s446 + $0x60] sm:$0xff] %vm2377, %v2328
      %2391 = vst.msk [vmem:[%s446 + $0x68] sm:$0xff] %vm2377, %v2330
      %2392 = vst.msk [vmem:[%s446 + $0x70] sm:$0xff] %vm2377, %v2333
      %2393 = vst.msk [vmem:[%s446 + $0x78] sm:$0xff] %vm2377, %v2335
      %2394 = vst.msk [vmem:[%s446 + $0x80] sm:$0xff] %vm2377, %v2338
      %2395 = vst.msk [vmem:[%s446 + $0x88] sm:$0xff] %vm2377, %v2340
      %2396 = vst.msk [vmem:[%s446 + $0x90] sm:$0xff] %vm2377, %v2343
      %2397 = vst.msk [vmem:[%s446 + $0x98] sm:$0xff] %vm2377, %v2345
      %2398 = vst.msk [vmem:[%s446 + $0xa0] sm:$0xff] %vm2377, %v2348
      %2399 = vst.msk [vmem:[%s446 + $0xa8] sm:$0xff] %vm2377, %v2350
      %2400 = vst.msk [vmem:[%s446 + $0xb0] sm:$0xff] %vm2377, %v2353
      %2401 = vst.msk [vmem:[%s446 + $0xb8] sm:$0xff] %vm2377, %v2355
      %2402 = vst.msk [vmem:[%s446 + $0xc0] sm:$0xff] %vm2377, %v2358
      %2403 = vst.msk [vmem:[%s446 + $0xc8] sm:$0xff] %vm2377, %v2360
      %2404 = vst.msk [vmem:[%s446 + $0xd0] sm:$0xff] %vm2377, %v2363
      %2405 = vst.msk [vmem:[%s446 + $0xd8] sm:$0xff] %vm2377, %v2365
      %2406 = vst.msk [vmem:[%s446 + $0xe0] sm:$0xff] %vm2377, %v2368
      %2407 = vst.msk [vmem:[%s446 + $0xe8] sm:$0xff] %vm2377, %v2370
      %2408 = vst.msk [vmem:[%s446 + $0xf0] sm:$0xff] %vm2377, %v2373
      %2409 = vst.msk [vmem:[%s446 + $0xf8] sm:$0xff] %vm2377, %v2375
      %s2410 = smul.u32 32, %s23
      %p2411 = scmp.lt.s32.totalorder %s2410, 63
      %s2412 = scalar_select %p2411, %s2410, 63
      %s2413 = smul.addr %s2412, 8
      %s2414 = scalar_lea.vmem %s10, %s2413
      %s2415 = smul.u32 32, %s23
      %p2416 = scmp.lt.s32.totalorder %s2415, 63
      %s2417 = scalar_select %p2416, %s2415, 63
      %s2418 = smul.addr %s2417, 8
      %s2419 = scalar_lea.vmem %s11, %s2418
      // Predicated region
      $region61: #{testr_forward.3} parent=59 // pred_check
        %p2420 = pneg %p266
      $region62: #{testr_forward.3} parent=59 // pred_check_branch
        %2422 = sbr.rel (%p2420) target = $region64
      $region63: #{testr_forward.3} parent=59 // pred_region
        %s2423 = smul.u32 32, %s23
      $region64: #{testr_forward.3} parent=59 // pred_fallthru
        _
      // Predicated region
      $region65: #{testr_forward.3} parent=59 // pred_check
        %p2424 = pneg %p292
      $region66: #{testr_forward.3} parent=59 // pred_check_branch
        %2426 = sbr.rel (%p2424) target = $region68
      $region67: #{testr_forward.3} parent=59 // pred_region
        %s2427 = smul.u32 32, %s23
      $region68: #{testr_forward.3} parent=59 // pred_fallthru
        _
    $region60: #{testr_forward.3} parent=5 // pred_fallthru
      _
    %p2428 = scmp.le.s32.totalorder 2, %s18
    // Predicated region
    $region69: #{testr_forward.3} parent=5 // pred_check
      %p2429 = pneg %p2428
    $region70: #{testr_forward.3} parent=5 // pred_check_branch
      %2431 = sbr.rel (%p2429) target = $region72
    $region71: #{testr_forward.3} parent=5 // pred_region
      %s2432 = ssub.s32 %s18, 2
      // Predicated region
      $region73: #{testr_forward.3} parent=71 // pred_check
        %p2433 = pneg %p272
      $region74: #{testr_forward.3} parent=71 // pred_check_branch
        %2435 = sbr.rel (%p2433) target = $region76
      $region75: #{testr_forward.3} parent=71 // pred_region
        %s2436 = smul.u32 32, %s24
        %p2437 = scmp.lt.s32.totalorder %s2436, 63
        %s2438 = scalar_select %p2437, %s2436, 63
        %s2439 = smul.addr %s2438, 8
        %s2440 = scalar_lea.vmem %s10, %s2439
      $region76: #{testr_forward.3} parent=71 // pred_fallthru
        _
      // Predicated region
      $region77: #{testr_forward.3} parent=71 // pred_check
        %p2441 = pneg %p298
      $region78: #{testr_forward.3} parent=71 // pred_check_branch
        %2443 = sbr.rel (%p2441) target = $region80
      $region79: #{testr_forward.3} parent=71 // pred_region
        %s2444 = smul.u32 32, %s24
        %p2445 = scmp.lt.s32.totalorder %s2444, 63
        %s2446 = scalar_select %p2445, %s2444, 63
        %s2447 = smul.addr %s2446, 8
        %s2448 = scalar_lea.vmem %s11, %s2447
      $region80: #{testr_forward.3} parent=71 // pred_fallthru
        _
    $region72: #{testr_forward.3} parent=5 // pred_fallthru
      _
  $region6: #{testr_forward.3} parent=0 // loop_footer
    %s22 = sadd.s32 1, %s18
  $region7: #{testr_forward.3} parent=0 // loop_footer_branch
    %17 = sbr.rel target = $region3
  $region8: #{testr_forward.3} parent=0 // loop_exit
    _

// kernel: testr_forward.2
$region0: #{testr_forward.2}
  #allocation0 [shape = 'u32[]', space=smem, size = 0x4, offset = 0x4, fixed_abs, tag = 'smem constant byte address 0x4 - core index']
  #allocation1 [shape = 'u32[72,128]{1,0:T(1,128)}', space=vmem, size = 0x9000, scoped, tag = 'internal scratch']
  %s0 = inlined_call_operand.vmem [shape: bf16[2,64,64], index: 0, kind: input, shape index: {}]
  %s1 = inlined_call_operand.vmem [shape: bf16[64,32], index: 1, kind: input, shape index: {}]
  %s2 = inlined_call_operand.vmem [shape: f32[1,32], index: 2, kind: input, shape index: {}]
  %s3 = inlined_call_operand.vmem [shape: f32[1,32], index: 3, kind: input, shape index: {}]
  %s4 = inlined_call_operand.vmem [shape: f32[1,32], index: 4, kind: input, shape index: {}]
  %s5 = inlined_call_operand.vmem [shape: f32[2,64,32], index: 5, kind: output, shape index: {}]
  %s6 = sld [smem:[#allocation0]]
  $region53: #{testr_forward.2} parent=0
    _
  %s8 = ssub.s32 1, %s6
  %s9 = scalar_select 0, %s8, %s6
  loop: start=0, step=1, limit=4
  $region2: #{testr_forward.2} parent=0 // loop_pre_header
    _
  $region3: #{testr_forward.2} parent=0 // loop_header
    %s11 = sphi 0, %s15
    %p12 = scmp.ge.s32.totalorder %s11, 4
    %s21 = sphi 0, %s23
    %s24 = sphi 0, %s21
    %s25 = sphi 0, %s24
    %s41 = sphi 0, %s25
    %s45 = sphi 0, %s45
    %s47 = sphi 0, %s45
    %s48 = sphi 0, %s47
    %s62 = sphi 0, %s48
    %s66 = sphi 0, %s66
    %s68 = sphi 0, %s66
    %s69 = sphi 0, %s68
    %s83 = sphi 0, %s69
    %s87 = sphi 0, %s87
    %s89 = sphi 0, %s87
    %s90 = sphi 0, %s89
    %s104 = sphi 0, %s90
    %s108 = sphi 0, %s108
    %s110 = sphi 0, %s108
    %s111 = sphi 0, %s110
    %s125 = sphi 0, %s111
    %s131 = sphi 0, %s133
    %s134 = sphi 0, %s131
    %s135 = sphi 0, %s134
    %s151 = sphi 0, %s135
  $region4: #{testr_forward.2} parent=0 // loop_header_branch
    %14 = sbr.rel (%p12) target = $region8
  $region5: #{testr_forward.2} parent=0 // loop_body
    %s16 = ssub.s32 %s11, 1
    %s17 = ssub.s32 %s11, 2
    %s18 = sadd.s32 %s11, 1
    %s19 = ssub.s32 %s11, %s18
    %p20 = scmp.eq.s32.totalorder %s19, 0
    %s22 = sadd.s32 %s21, 1
    %s23 = scalar_select %p20, %s21, %s22
    %p26 = pneg %p20
    %p27 = scmp.eq.s32.totalorder %s11, 1
    %p28 = por %p26, %p27
    %p29 = scmp.ne.s32.totalorder %s21, %s24
    %p30 = scmp.eq.s32.totalorder %s11, 0
    %p31 = por %p29, %p30
    %p32 = scmp.ne.s32.totalorder %s21, %s24
    %p33 = scmp.eq.s32.totalorder %s16, 1
    %p34 = por %p32, %p33
    %p35 = scmp.ne.s32.totalorder %s24, %s25
    %p36 = scmp.eq.s32.totalorder %s16, 0
    %p37 = por %p35, %p36
    %p38 = scmp.ne.s32.totalorder %s24, %s25
    %p39 = scmp.eq.s32.totalorder %s17, 1
    %p40 = por %p38, %p39
    %p42 = scmp.ne.s32.totalorder %s25, %s41
    %p43 = scmp.eq.s32.totalorder %s17, 0
    %p44 = por %p42, %p43
    %s46 = sadd.s32 %s45, 1
    %p49 = scmp.eq.s32.totalorder %s11, 1
    %p50 = scmp.ne.s32.totalorder %s45, %s47
    %p51 = scmp.eq.s32.totalorder %s11, 0
    %p52 = por %p50, %p51
    %p53 = scmp.ne.s32.totalorder %s45, %s47
    %p54 = scmp.eq.s32.totalorder %s16, 1
    %p55 = por %p53, %p54
    %p56 = scmp.ne.s32.totalorder %s47, %s48
    %p57 = scmp.eq.s32.totalorder %s16, 0
    %p58 = por %p56, %p57
    %p59 = scmp.ne.s32.totalorder %s47, %s48
    %p60 = scmp.eq.s32.totalorder %s17, 1
    %p61 = por %p59, %p60
    %p63 = scmp.ne.s32.totalorder %s48, %s62
    %p64 = scmp.eq.s32.totalorder %s17, 0
    %p65 = por %p63, %p64
    %s67 = sadd.s32 %s66, 1
    %p70 = scmp.eq.s32.totalorder %s11, 1
    %p71 = scmp.ne.s32.totalorder %s66, %s68
    %p72 = scmp.eq.s32.totalorder %s11, 0
    %p73 = por %p71, %p72
    %p74 = scmp.ne.s32.totalorder %s66, %s68
    %p75 = scmp.eq.s32.totalorder %s16, 1
    %p76 = por %p74, %p75
    %p77 = scmp.ne.s32.totalorder %s68, %s69
    %p78 = scmp.eq.s32.totalorder %s16, 0
    %p79 = por %p77, %p78
    %p80 = scmp.ne.s32.totalorder %s68, %s69
    %p81 = scmp.eq.s32.totalorder %s17, 1
    %p82 = por %p80, %p81
    %p84 = scmp.ne.s32.totalorder %s69, %s83
    %p85 = scmp.eq.s32.totalorder %s17, 0
    %p86 = por %p84, %p85
    %s88 = sadd.s32 %s87, 1
    %p91 = scmp.eq.s32.totalorder %s11, 1
    %p92 = scmp.ne.s32.totalorder %s87, %s89
    %p93 = scmp.eq.s32.totalorder %s11, 0
    %p94 = por %p92, %p93
    %p95 = scmp.ne.s32.totalorder %s87, %s89
    %p96 = scmp.eq.s32.totalorder %s16, 1
    %p97 = por %p95, %p96
    %p98 = scmp.ne.s32.totalorder %s89, %s90
    %p99 = scmp.eq.s32.totalorder %s16, 0
    %p100 = por %p98, %p99
    %p101 = scmp.ne.s32.totalorder %s89, %s90
    %p102 = scmp.eq.s32.totalorder %s17, 1
    %p103 = por %p101, %p102
    %p105 = scmp.ne.s32.totalorder %s90, %s104
    %p106 = scmp.eq.s32.totalorder %s17, 0
    %p107 = por %p105, %p106
    %s109 = sadd.s32 %s108, 1
    %p112 = scmp.eq.s32.totalorder %s11, 1
    %p113 = scmp.ne.s32.totalorder %s108, %s110
    %p114 = scmp.eq.s32.totalorder %s11, 0
    %p115 = por %p113, %p114
    %p116 = scmp.ne.s32.totalorder %s108, %s110
    %p117 = scmp.eq.s32.totalorder %s16, 1
    %p118 = por %p116, %p117
    %p119 = scmp.ne.s32.totalorder %s110, %s111
    %p120 = scmp.eq.s32.totalorder %s16, 0
    %p121 = por %p119, %p120
    %p122 = scmp.ne.s32.totalorder %s110, %s111
    %p123 = scmp.eq.s32.totalorder %s17, 1
    %p124 = por %p122, %p123
    %p126 = scmp.ne.s32.totalorder %s111, %s125
    %p127 = scmp.eq.s32.totalorder %s17, 0
    %p128 = por %p126, %p127
    %s129 = ssub.s32 %s11, %s18
    %p130 = scmp.eq.s32.totalorder %s129, 0
    %s132 = sadd.s32 %s131, 1
    %s133 = scalar_select %p130, %s131, %s132
    %p136 = pneg %p130
    %p137 = scmp.eq.s32.totalorder %s11, 1
    %p138 = por %p136, %p137
    %p139 = scmp.ne.s32.totalorder %s131, %s134
    %p140 = scmp.eq.s32.totalorder %s11, 0
    %p141 = por %p139, %p140
    %p142 = scmp.ne.s32.totalorder %s131, %s134
    %p143 = scmp.eq.s32.totalorder %s16, 1
    %p144 = por %p142, %p143
    %p145 = scmp.ne.s32.totalorder %s134, %s135
    %p146 = scmp.eq.s32.totalorder %s16, 0
    %p147 = por %p145, %p146
    %p148 = scmp.ne.s32.totalorder %s134, %s135
    %p149 = scmp.eq.s32.totalorder %s17, 1
    %p150 = por %p148, %p149
    %p152 = scmp.ne.s32.totalorder %s135, %s151
    %p153 = scmp.eq.s32.totalorder %s17, 0
    %p154 = por %p152, %p153
    %p155 = scmp.le.s32.totalorder 1, %s11
    %p156 = scmp.lt.s32.totalorder %s11, 3
    %p157 = pnand %p155, %p156
    %p158 = pneg %p157
    // Predicated region
    $region9: #{testr_forward.2} parent=5 // pred_check
      _
    $region10: #{testr_forward.2} parent=5 // pred_check_branch
      %160 = sbr.rel (%p157) target = $region12
    $region11: #{testr_forward.2} parent=5 // pred_region
      %s161 = ssub.s32 %s11, 1
      // Predicated region
      $region13: #{testr_forward.2} parent=11 // pred_check
        %p162 = pneg %p58
      $region14: #{testr_forward.2} parent=11 // pred_check_branch
        %164 = sbr.rel (%p162) target = $region16
      $region15: #{testr_forward.2} parent=11 // pred_region
        _
      $region16: #{testr_forward.2} parent=11 // pred_fallthru
        _
      // Predicated region
      $region17: #{testr_forward.2} parent=11 // pred_check
        %p165 = pneg %p79
      $region18: #{testr_forward.2} parent=11 // pred_check_branch
        %167 = sbr.rel (%p165) target = $region20
      $region19: #{testr_forward.2} parent=11 // pred_region
        _
      $region20: #{testr_forward.2} parent=11 // pred_fallthru
        _
      // Predicated region
      $region21: #{testr_forward.2} parent=11 // pred_check
        %p168 = pneg %p100
      $region22: #{testr_forward.2} parent=11 // pred_check_branch
        %170 = sbr.rel (%p168) target = $region24
      $region23: #{testr_forward.2} parent=11 // pred_region
        _
      $region24: #{testr_forward.2} parent=11 // pred_fallthru
        _
      // Predicated region
      $region25: #{testr_forward.2} parent=11 // pred_check
        %p171 = pneg %p121
      $region26: #{testr_forward.2} parent=11 // pred_check_branch
        %173 = sbr.rel (%p171) target = $region28
      $region27: #{testr_forward.2} parent=11 // pred_region
        _
      $region28: #{testr_forward.2} parent=11 // pred_fallthru
        _
    $region12: #{testr_forward.2} parent=5 // pred_fallthru
      _
    %p174 = scmp.lt.s32.totalorder %s11, 2
    // Predicated region
    $region29: #{testr_forward.2} parent=5 // pred_check
      %p175 = pneg %p174
    $region30: #{testr_forward.2} parent=5 // pred_check_branch
      %177 = sbr.rel (%p175) target = $region32
    $region31: #{testr_forward.2} parent=5 // pred_region
      // Predicated region
      $region33: #{testr_forward.2} parent=31 // pred_check
        %p178 = pneg %p31
      $region34: #{testr_forward.2} parent=31 // pred_check_branch
        %180 = sbr.rel (%p178) target = $region36
      $region35: #{testr_forward.2} parent=31 // pred_region
        %p181 = scmp.lt.s32.totalorder %s11, 1
        %s182 = scalar_select %p181, %s11, 1
        %s183 = smul.addr %s182, 8
        %s184 = smul.addr %s183, 4
        %s185 = scalar_lea.vmem %s0, %s184
      $region36: #{testr_forward.2} parent=31 // pred_fallthru
        _
    $region32: #{testr_forward.2} parent=5 // pred_fallthru
      _
    %p186 = scmp.le.s32.totalorder 1, %s11
    %p187 = scmp.lt.s32.totalorder %s11, 3
    %p188 = pnand %p186, %p187
    %p189 = pneg %p188
    // Predicated region
    $region37: #{testr_forward.2} parent=5 // pred_check
      _
    $region38: #{testr_forward.2} parent=5 // pred_check_branch
      %191 = sbr.rel (%p188) target = $region40
    $region39: #{testr_forward.2} parent=5 // pred_region
      %s192 = ssub.s32 %s11, 1
      %p193 = scmp.lt.s32.totalorder %s16, 1
      %s194 = scalar_select %p193, %s16, 1
      %s195 = smul.addr %s194, 8
      %s196 = smul.addr %s195, 4
      %s197 = scalar_lea.vmem %s0, %s196
      %p198 = pneg %p37
      %p199 = pneg %p34
      %p200 = pneg %p58
      %p201 = pneg %p55
      %p202 = pneg %p79
      %p203 = pneg %p76
      %p204 = pneg %p100
      %p205 = pneg %p97
      %p206 = pneg %p121
      %p207 = pneg %p118
      %p208 = pneg %p147
      %p209 = pneg %p144
      %p210 = scmp.lt.s32.totalorder %s16, 1
      %s211 = scalar_select %p210, %s16, 1
      %s212 = smul.addr %s211, 8
      %s213 = smul.addr %s212, 8
      %s214 = scalar_lea.vmem %s5, %s213
      %p215 = scmp.lt.s32.totalorder %s16, 1
      %s216 = scalar_select %p215, %s16, 1
      %s217 = smul.addr %s216, 8
      %s218 = smul.addr %s217, 4
      %s219 = scalar_lea.vmem %s0, %s218
      %p220 = scmp.lt.s32.totalorder %s16, 1
      %s221 = scalar_select %p220, %s16, 1
      %s222 = smul.addr %s221, 8
      %s223 = smul.addr %s222, 8
      %s224 = scalar_lea.vmem %s5, %s223
      %v226 = vld [vmem:[%s219] sm:$0xf]
      %v227 = vld [vmem:[%s219 + $0x4] sm:$0xf]
      %v228 = vld [vmem:[%s219 + $0x8] sm:$0xf]
      %v229 = vld [vmem:[%s219 + $0xc] sm:$0xf]
      %v230 = vld [vmem:[%s219 + $0x10] sm:$0xf]
      %v231 = vld [vmem:[%s219 + $0x14] sm:$0xf]
      %v232 = vld [vmem:[%s219 + $0x18] sm:$0xf]
      %v233 = vld [vmem:[%s219 + $0x1c] sm:$0xf]
      %v234 = vld [vmem:[%s1] sm:$0xf]
      %v235 = vld [vmem:[%s1 + $0x4] sm:$0xf]
      %v236 = vld [vmem:[%s1 + $0x8] sm:$0xf]
      %v237 = vld [vmem:[%s1 + $0xc] sm:$0xf]
      %v238 = vld [vmem:[%s1 + $0x10] sm:$0xf]
      %v239 = vld [vmem:[%s1 + $0x14] sm:$0xf]
      %v240 = vld [vmem:[%s1 + $0x18] sm:$0xf]
      %v241 = vld [vmem:[%s1 + $0x1c] sm:$0xf]
      %v242 = vld [vmem:[%s2] sm:$0x1]
      %v244 = vperm.slane %v242, 0
      %v254 = vunpack.c.l.b16 %v226
      %v255 = vunpack.c.l.b16 %v227
      %v256 = vunpack.c.l.b16 %v228
      %v257 = vunpack.c.l.b16 %v229
      %v258 = vunpack.c.l.b16 %v230
      %v259 = vunpack.c.l.b16 %v231
      %v260 = vunpack.c.l.b16 %v232
      %v261 = vunpack.c.l.b16 %v233
      %v262 = vpack.c.b16 %v255, %v254
      %v263 = vpack.c.b16 %v257, %v256
      %v264 = vpack.c.b16 %v259, %v258
      %v265 = vpack.c.b16 %v261, %v260
      %v274 = vunpack.c.l.b16 %v234
      %v275 = vunpack.c.l.b16 %v235
      %v276 = vunpack.c.l.b16 %v236
      %v277 = vunpack.c.l.b16 %v237
      %v278 = vunpack.c.l.b16 %v238
      %v279 = vunpack.c.l.b16 %v239
      %v280 = vunpack.c.l.b16 %v240
      %v281 = vunpack.c.l.b16 %v241
      %v282 = vpack.c.b16 %v275, %v274
      %v283 = vpack.c.b16 %v277, %v276
      %v284 = vpack.c.b16 %v279, %v278
      %v285 = vpack.c.b16 %v281, %v280
      %vm290 = vcmask 523264
      %v292 = vsel %vm290, %v262, 0
      %v295 = vsel %vm290, %v263, 0
      %v298 = vsel %vm290, %v264, 0
      %v301 = vsel %vm290, %v265, 0
      %303 = vmatpush.bf16.msra.mxu0 0
      %304 = vmatpush.bf16.msra.mxu0 0
      %305 = vmatpush.bf16.msra.mxu0 0
      %306 = vmatpush.bf16.msra.mxu0 0
      %307 = vmatpush.bf16.msra.mxu0 %v285
      %308 = vmatpush.bf16.msra.mxu0 %v284
      %309 = vmatpush.bf16.msra.mxu0 %v283
      %310 = vmatpush.bf16.msra.mxu0 %v282
      %311 = vmatmul.bf16.gmra.mxu0 %v292
      %v312 = vpop.f32.mrf.mxu0
      %v313 = vadd.f32 %v244, %v312
      %v314 = vpop.f32.mrf.mxu0
      %v315 = vadd.f32 %v244, %v314
      %316 = vmatmul.bf16.gmra.mxu0 %v295
      %v317 = vpop.f32.mrf.mxu0
      %v318 = vadd.f32 %v244, %v317
      %v319 = vpop.f32.mrf.mxu0
      %v320 = vadd.f32 %v244, %v319
      %321 = vmatmul.bf16.gmra.mxu0 %v298
      %v322 = vpop.f32.mrf.mxu0
      %v323 = vadd.f32 %v244, %v322
      %v324 = vpop.f32.mrf.mxu0
      %v325 = vadd.f32 %v244, %v324
      %326 = vmatmul.bf16.gmra.mxu0 %v301
      %v327 = vpop.f32.mrf.mxu0
      %v328 = vadd.f32 %v244, %v327
      %v329 = vpop.f32.mrf.mxu0
      %v330 = vadd.f32 %v244, %v329
      %331 = vdwg.mxu0
      %vm332 = vcmask 261120
      %v333 = vsel %vm332, %v313, 0.0
      %v334 = vsel %vm332, %v315, 0.0
      %v335 = vadd.f32 %v333, %v334
      %v336 = vsel %vm332, %v318, 0.0
      %v337 = vadd.f32 %v335, %v336
      %v338 = vsel %vm332, %v320, 0.0
      %v339 = vadd.f32 %v337, %v338
      %v340 = vsel %vm332, %v323, 0.0
      %v341 = vadd.f32 %v339, %v340
      %v342 = vsel %vm332, %v325, 0.0
      %v343 = vadd.f32 %v341, %v342
      %v344 = vsel %vm332, %v328, 0.0
      %v345 = vadd.f32 %v343, %v344
      %v346 = vsel %vm332, %v330, 0.0
      %v347 = vadd.f32 %v345, %v346
      %v348 = vrot.slane %v347, 4
      %v349 = vadd.f32 %v347, %v348
      %v350 = vrot.slane %v349, 2
      %v351 = vadd.f32 %v349, %v350
      %v352 = vrot.slane %v351, 1
      %v353 = vadd.f32 %v351, %v352
      %v354 = vmul.f32 %v313, %v313
      %v355 = vmul.f32 %v315, %v315
      %v356 = vmul.f32 %v318, %v318
      %v357 = vmul.f32 %v320, %v320
      %v358 = vmul.f32 %v323, %v323
      %v359 = vmul.f32 %v325, %v325
      %v360 = vmul.f32 %v328, %v328
      %v361 = vmul.f32 %v330, %v330
      %v362 = vsel %vm332, %v354, 0.0
      %v363 = vsel %vm332, %v355, 0.0
      %v364 = vadd.f32 %v362, %v363
      %v365 = vsel %vm332, %v356, 0.0
      %v366 = vadd.f32 %v364, %v365
      %v367 = vsel %vm332, %v357, 0.0
      %v368 = vadd.f32 %v366, %v367
      %v369 = vsel %vm332, %v358, 0.0
      %v370 = vadd.f32 %v368, %v369
      %v371 = vsel %vm332, %v359, 0.0
      %v372 = vadd.f32 %v370, %v371
      %v373 = vsel %vm332, %v360, 0.0
      %v374 = vadd.f32 %v372, %v373
      %v375 = vsel %vm332, %v361, 0.0
      %v376 = vadd.f32 %v374, %v375
      %v377 = vrot.slane %v376, 4
      %v378 = vadd.f32 %v376, %v377
      %v379 = vrot.slane %v378, 2
      %v380 = vadd.f32 %v378, %v379
      %v381 = vrot.slane %v380, 1
      %v382 = vadd.f32 %v380, %v381
      %v383 = vmul.f32 %v353, 0.015625
      %v384 = vmul.f32 %v382, 0.015625
      %v385 = vmul.f32 %v383, %v383
      %v386 = vsub.f32 %v384, %v385
      %v387 = vmax.f32 %v386, 0.0
      %v388 = vsub.f32 %v313, %v383
      %v389 = vsub.f32 %v315, %v383
      %v390 = vsub.f32 %v318, %v383
      %v391 = vsub.f32 %v320, %v383
      %v392 = vsub.f32 %v323, %v383
      %v393 = vsub.f32 %v325, %v383
      %v394 = vsub.f32 %v328, %v383
      %v395 = vsub.f32 %v330, %v383
      %v396 = vadd.f32 %v387, 1e-05
      %v397 = vrsqrt.pop %v396
      %v398 = vmul.f32 %v397, %v396
      %v399 = vmul.f32 %v398, %v397
      %v400 = vmul.f32 0.5, %v399
      %v401 = vsub.f32 1.5, %v400
      %v402 = vmul.f32 %v397, %v401
      %vm403 = vweird.f32 %v396
      %vm404 = vweird.f32 %v397
      %vm405 = vmor %vm403, %vm404
      %v406 = vsel %vm405, %v397, %v402
      %v407 = vmul.f32 %v388, %v406
      %v408 = vmul.f32 %v389, %v406
      %v409 = vmul.f32 %v390, %v406
      %v410 = vmul.f32 %v391, %v406
      %v411 = vmul.f32 %v392, %v406
      %v412 = vmul.f32 %v393, %v406
      %v413 = vmul.f32 %v394, %v406
      %v414 = vmul.f32 %v395, %v406
      %v415 = vld [vmem:[%s3] sm:$0x1]
      %v417 = vperm.slane %v415, 0
      %v419 = vmul.f32 %v407, %v417
      %v420 = vmul.f32 %v408, %v417
      %v421 = vmul.f32 %v409, %v417
      %v422 = vmul.f32 %v410, %v417
      %v423 = vmul.f32 %v411, %v417
      %v424 = vmul.f32 %v412, %v417
      %v425 = vmul.f32 %v413, %v417
      %v426 = vmul.f32 %v414, %v417
      %v427 = vld [vmem:[%s4] sm:$0x1]
      %v429 = vperm.slane %v427, 0
      %v431 = vadd.f32 %v419, %v429
      %v432 = vadd.f32 %v420, %v429
      %v433 = vadd.f32 %v421, %v429
      %v434 = vadd.f32 %v422, %v429
      %v435 = vadd.f32 %v423, %v429
      %v436 = vadd.f32 %v424, %v429
      %v437 = vadd.f32 %v425, %v429
      %v438 = vadd.f32 %v426, %v429
      %439 = vst.msk [vmem:[%s224] sm:$0xff] %vm332, %v431
      %440 = vst.msk [vmem:[%s224 + $0x8] sm:$0xff] %vm332, %v432
      %441 = vst.msk [vmem:[%s224 + $0x10] sm:$0xff] %vm332, %v433
      %442 = vst.msk [vmem:[%s224 + $0x18] sm:$0xff] %vm332, %v434
      %443 = vst.msk [vmem:[%s224 + $0x20] sm:$0xff] %vm332, %v435
      %444 = vst.msk [vmem:[%s224 + $0x28] sm:$0xff] %vm332, %v436
      %445 = vst.msk [vmem:[%s224 + $0x30] sm:$0xff] %vm332, %v437
      %446 = vst.msk [vmem:[%s224 + $0x38] sm:$0xff] %vm332, %v438
      %p447 = scmp.lt.s32.totalorder %s16, 1
      %s448 = scalar_select %p447, %s16, 1
      %s449 = smul.addr %s448, 8
      %s450 = smul.addr %s449, 8
      %s451 = scalar_lea.vmem %s5, %s450
      // Predicated region
      $region41: #{testr_forward.2} parent=39 // pred_check
        %p452 = pneg %p144
      $region42: #{testr_forward.2} parent=39 // pred_check_branch
        %454 = sbr.rel (%p452) target = $region44
      $region43: #{testr_forward.2} parent=39 // pred_region
        _
      $region44: #{testr_forward.2} parent=39 // pred_fallthru
        _
    $region40: #{testr_forward.2} parent=5 // pred_fallthru
      _
    %p455 = scmp.le.s32.totalorder 2, %s11
    // Predicated region
    $region45: #{testr_forward.2} parent=5 // pred_check
      %p456 = pneg %p455
    $region46: #{testr_forward.2} parent=5 // pred_check_branch
      %458 = sbr.rel (%p456) target = $region48
    $region47: #{testr_forward.2} parent=5 // pred_region
      %s459 = ssub.s32 %s11, 2
      // Predicated region
      $region49: #{testr_forward.2} parent=47 // pred_check
        %p460 = pneg %p150
      $region50: #{testr_forward.2} parent=47 // pred_check_branch
        %462 = sbr.rel (%p460) target = $region52
      $region51: #{testr_forward.2} parent=47 // pred_region
        %p463 = scmp.lt.s32.totalorder %s17, 1
        %s464 = scalar_select %p463, %s17, 1
        %s465 = smul.addr %s464, 8
        %s466 = smul.addr %s465, 8
        %s467 = scalar_lea.vmem %s5, %s466
      $region52: #{testr_forward.2} parent=47 // pred_fallthru
        _
    $region48: #{testr_forward.2} parent=5 // pred_fallthru
      _
  $region6: #{testr_forward.2} parent=0 // loop_footer
    %s15 = sadd.s32 1, %s11
  $region7: #{testr_forward.2} parent=0 // loop_footer_branch
    %10 = sbr.rel target = $region3
  $region8: #{testr_forward.2} parent=0 // loop_exit
    _

</llo_original>
